<compile_context>
chip_gen: v7x
topology: tpu7x:2x2x1
jax: 0.10.0
libtpu: 0.0.40
codegen_flags: <defaults>
</compile_context>

<pallas_src>
import functools

import jax
import jax.numpy as jnp
from jax.experimental import pallas as pl
from jax.experimental.pallas import tpu as pltpu


def _round_up(n, m):
    return ((n + m - 1) // m) * m


def _choose_tb(batch, cap):
    """Batch tile: minimize padding waste; keep >=2 tiles (v7x megacore) when
    the batch is large enough."""
    cands = [c for c in (256, 128, 64, 32, 16, 8) if c <= cap]
    best_tb, best_key = None, None
    for c in cands:
        b_pad = _round_up(batch, c)
        n_tiles = b_pad // c
        if batch >= 16 and n_tiles < 2:
            continue  # don't starve the second TensorCore on v7x
        key = (b_pad - batch, -c)  # least waste first, then biggest tile
        if best_key is None or key < best_key:
            best_key, best_tb = key, c
    if best_tb is None:
        best_tb = min(cands)
    return best_tb


def _choose_thw(hw, tb, channels, itemsize, block_bytes):
    """Spatial (lane) tile: full extent if it fits the byte budget, otherwise a
    multiple of 128 near the budget, preferring one that divides HW."""
    budget = max(1, block_bytes // (tb * channels * itemsize))
    if hw <= max(budget, 128):
        return hw                               # single spatial tile (full dim)
    thw = max(128, (budget // 128) * 128)
    for cand in range(thw, max(thw // 2, 127), -128):
        if hw % cand == 0:
            return cand                         # divisor near the budget: no ragged tail
    return thw


def _pool_linear_kernel(x_ref, w_ref, b_ref, o_ref, acc_ref, *,
                        inv_hw, hw, thw, mask_tail):
    """Fused global-average-pool + linear.

    x_ref:   (tb, C, thw) block, spatial on the lane axis (input dtype).
    w_ref:   (C, Lp) resident, pre-transposed, lane-padded weight (f32).
    b_ref:   (1, Lp) resident bias (f32).
    o_ref:   (tb, Lp) output block, revisited across spatial steps.
    acc_ref: (tb, C) f32 running spatial sum.
    """
    s = pl.program_id(1)

    @pl.when(s == 0)
    def _init():
        acc_ref[...] = jnp.zeros_like(acc_ref)

    x = x_ref[...]
    if mask_tail:
        # Ragged spatial tail: mask out-of-range lanes instead of padding HBM.
        lane = jax.lax.broadcasted_iota(jnp.int32, (1, thw), 1)
        x = jnp.where(s * thw + lane < hw, x, 0)
    # Lane-axis reduction (XLU slot, idle in this memory-bound kernel);
    # accumulate in f32 regardless of the streamed dtype.
    acc_ref[...] += jnp.sum(x.astype(jnp.float32), axis=2)

    @pl.when(s == pl.num_programs(1) - 1)
    def _finalize():
        pooled = acc_ref[...] * inv_hw          # divide by the true H*W
        y = jnp.dot(pooled, w_ref[...], preferred_element_type=jnp.float32)
        o_ref[...] = (y + b_ref[...]).astype(o_ref.dtype)


def _linear_kernel(x_ref, w_ref, b_ref, o_ref):
    # x_ref: (tb, C)  w_ref: (C, Lp)  b_ref: (1, Lp)  o_ref: (tb, Lp)
    x = x_ref[...].astype(jnp.float32)
    y = jnp.dot(x, w_ref[...], preferred_element_type=jnp.float32)
    o_ref[...] = (y + b_ref[...]).astype(o_ref.dtype)


class LinearClassifierResNetPallas:
    """JAX/Pallas equivalent of LinearClassifierResNet (forward only)."""

    _CHANNELS = {1: 64, 2: 64, 3: 128, 4: 256, 5: 512, 6: 512}

    # ~6 MiB activation blocks: amortizes the ~0.35 us per-grid-step overhead
    # to a few percent even at v7x's ~3.2 TB/s, and two (double-buffered)
    # blocks + resident weights stay well inside the explicit VMEM limit below.
    _X_BLOCK_BYTES = 6 * 1024 * 1024
    # Explicit scoped-VMEM limit: above the 16 MiB (v5e) / 32 MiB (v6e/v7x)
    # defaults, comfortably below v7x's 64 MiB physical VMEM.
    _VMEM_LIMIT_BYTES = 40 * 1024 * 1024

    def __init__(self, layer=6, n_label=1000, key=None, x_block_bytes=None):
        if layer not in self._CHANNELS:
            raise NotImplementedError('layer not supported: {}'.format(layer))
        self.layer = layer
        self.n_label = n_label
        self.x_block_bytes = int(x_block_bytes) if x_block_bytes else self._X_BLOCK_BYTES
        n_ch = self._CHANNELS[layer]
        if key is None:
            key = jax.random.PRNGKey(0)
        # nn.Linear(nChannels, n_label); initilize(): weight ~ N(0, 0.01), bias = 0.
        self.weight = (jax.random.normal(key, (n_label, n_ch), dtype=jnp.float32)
                       * jnp.float32(0.01))
        self.bias = jnp.zeros((n_label,), dtype=jnp.float32)

        # Pre-transposed, lane-padded parameters (computed once, not per call).
        self.l_pad = _round_up(n_label, 128)
        w_t = self.weight.T                                           # (C, L)
        self.weight_t = jnp.pad(w_t, ((0, 0), (0, self.l_pad - n_label)))
        self.bias2 = jnp.pad(self.bias, (0, self.l_pad - n_label))[None, :]

    # ------------------------------------------------------------------ #

    def __call__(self, x):
        L, Lp = self.n_label, self.l_pad
        w_t, b2 = self.weight_t, self.bias2

        if self.layer < 6:
            B, C, H, W = x.shape
            HW = H * W
            itemsize = x.dtype.itemsize
            # Free reshape: NO transpose, NO HBM pad of the dominant tensor.
            x3 = x.reshape(B, C, HW)

            # Batch-tile cap so even a 128-lane spatial tile fits the budget.
            min_lane = min(HW, 128)
            tb_cap = max(8, (self.x_block_bytes // (C * min_lane * itemsize)) // 8 * 8)
            tb = _choose_tb(B, cap=min(128, tb_cap))
            b_pad = _round_up(B, tb)

            thw = _choose_thw(HW, tb, C, itemsize, self.x_block_bytes)
            n_s = pl.cdiv(HW, thw)
            mask_tail = (HW % thw) != 0

            kernel = functools.partial(
                _pool_linear_kernel,
                inv_hw=float(1.0 / HW),   # plain Python float -> jaxpr literal
                hw=HW, thw=thw, mask_tail=mask_tail)
            grid = (b_pad // tb, n_s)
            cost = pl.CostEstimate(
                flops=int(2 * b_pad * C * Lp + b_pad * C * HW),
                transcendentals=0,
                bytes_accessed=int(itemsize * b_pad * C * n_s * thw
                                   + 4 * (C * Lp + Lp + b_pad * Lp)))

            def run(single_buffer):
                const_kw = (dict(pipeline_mode=pl.Buffered(1))
                            if single_buffer else {})
                return pl.pallas_call(
                    kernel,
                    out_shape=jax.ShapeDtypeStruct((b_pad, Lp), jnp.float32),
                    grid=grid,
                    in_specs=[
                        pl.BlockSpec((tb, C, thw), lambda b, s: (b, 0, s)),
                        pl.BlockSpec((C, Lp), lambda b, s: (0, 0), **const_kw),
                        pl.BlockSpec((1, Lp), lambda b, s: (0, 0), **const_kw),
                    ],
                    out_specs=pl.BlockSpec((tb, Lp), lambda b, s: (b, 0)),
                    scratch_shapes=[pltpu.VMEM((tb, C), jnp.float32)],
                    compiler_params=pltpu.CompilerParams(
                        dimension_semantics=("parallel", "arbitrary"),
                        vmem_limit_bytes=self._VMEM_LIMIT_BYTES),
                    cost_estimate=cost,
                )(x3, w_t, b2)

            try:
                out = run(True)
            except Exception:
                # Fallback for Pallas versions without pipeline_mode/Buffered.
                out = run(False)

            out = out[:B, :L]
            if B == 1:
                # torch: avg_pool(x).squeeze() drops the batch dim when B == 1.
                out = out[0]
            return out

        # ---- layer == 6: classifier only, input (B, nChannels) ---- #
        B, C = x.shape
        tb = _choose_tb(B, cap=256)
        b_pad = _round_up(B, tb)
        grid = (b_pad // tb,)
        cost = pl.CostEstimate(
            flops=int(2 * b_pad * C * Lp),
            transcendentals=0,
            bytes_accessed=int(x.dtype.itemsize * b_pad * C
                               + 4 * (C * Lp + Lp + b_pad * Lp)))

        def run6(single_buffer):
            const_kw = (dict(pipeline_mode=pl.Buffered(1))
                        if single_buffer else {})
            return pl.pallas_call(
                _linear_kernel,
                out_shape=jax.ShapeDtypeStruct((b_pad, Lp), jnp.float32),
                grid=grid,
                in_specs=[
                    pl.BlockSpec((tb, C), lambda b: (b, 0)),
                    pl.BlockSpec((C, Lp), lambda b: (0, 0), **const_kw),
                    pl.BlockSpec((1, Lp), lambda b: (0, 0), **const_kw),
                ],
                out_specs=pl.BlockSpec((tb, Lp), lambda b: (b, 0)),
                compiler_params=pltpu.CompilerParams(
                    dimension_semantics=("parallel",),
                    vmem_limit_bytes=self._VMEM_LIMIT_BYTES),
                cost_estimate=cost,
            )(x, w_t, b2)

        try:
            out = run6(True)
        except Exception:
            out = run6(False)
        return out[:B, :L]


if __name__ == "__main__":
    key = jax.random.PRNGKey(0)
    k_w, k_x1, k_x2, k_x3, k_x4 = jax.random.split(key, 5)

    n_label = 100  # not a multiple of 128: exercises output lane padding

    # 1) layer=3: AvgPool over 16x16 then Linear(128 -> 100); single spatial tile.
    B, H, W = 2, 16, 16
    m3 = LinearClassifierResNetPallas(layer=3, n_label=n_label, key=k_w)
    C3 = LinearClassifierResNetPallas._CHANNELS[3]
    x3 = jax.random.normal(k_x1, (B, C3, H, W), dtype=jnp.float32)
    out3 = jax.block_until_ready(m3(x3))
    ref3 = jnp.mean(x3, axis=(2, 3)) @ m3.weight.T + m3.bias
    assert out3.shape == (B, n_label)
    assert jnp.allclose(out3, ref3, atol=1e-4, rtol=1e-3)

    # 2) layer=1, tiny block budget: multi-step spatial reduction with a ragged
    #    (masked) spatial tail and a ragged batch tile.
    m1 = LinearClassifierResNetPallas(layer=1, n_label=10, key=k_w,
                                      x_block_bytes=64 * 1024)
    C1 = LinearClassifierResNetPallas._CHANNELS[1]
    x1 = jax.random.normal(k_x2, (3, C1, 11, 13), dtype=jnp.float32)
    out1 = jax.block_until_ready(m1(x1))
    ref1 = jnp.mean(x1, axis=(2, 3)) @ m1.weight.T + m1.bias
    assert out1.shape == (3, 10)
    assert jnp.allclose(out1, ref1, atol=1e-4, rtol=1e-3)

    # 2b) B == 1 mirrors torch's .squeeze() (batch dim dropped).
    out1b = jax.block_until_ready(m1(x1[:1]))
    assert out1b.shape == (10,)
    assert jnp.allclose(out1b, ref1[0], atol=1e-4, rtol=1e-3)

    # 3) layer=5 with bf16 activations streamed from HBM, f32 accumulation.
    m5 = LinearClassifierResNetPallas(layer=5, n_label=n_label, key=k_w)
    C5 = LinearClassifierResNetPallas._CHANNELS[5]
    x5 = jax.random.normal(k_x3, (4, C5, 4, 4), dtype=jnp.float32).astype(jnp.bfloat16)
    out5 = jax.block_until_ready(m5(x5))
    ref5 = jnp.mean(x5.astype(jnp.float32), axis=(2, 3)) @ m5.weight.T + m5.bias
    assert out5.shape == (4, n_label)
    assert jnp.allclose(out5, ref5, atol=1e-3, rtol=1e-2)

    # 4) layer=6: classifier only, input (B, 512).
    m6 = LinearClassifierResNetPallas(layer=6, n_label=n_label, key=k_w)
    C6 = LinearClassifierResNetPallas._CHANNELS[6]
    x6 = jax.random.normal(k_x4, (2, C6), dtype=jnp.float32)
    out6 = jax.block_until_ready(m6(x6))
    ref6 = x6 @ m6.weight.T + m6.bias
    assert out6.shape == (2, n_label)
    assert jnp.allclose(out6, ref6, atol=1e-4, rtol=1e-3)

    print("KERNEL_OK")
</pallas_src>

<mosaic_0001>
module attributes {stable_mosaic.version = 11 : i64} {
  func.func @_pool_linear_kernel(%arg0: i32, %arg1: i32, %arg2: memref<8x128x256xf32, #tpu.memory_space<vmem>>, %arg3: memref<128x128xf32, #tpu.memory_space<vmem>>, %arg4: memref<1x128xf32, #tpu.memory_space<vmem>>, %arg5: memref<8x128xf32, #tpu.memory_space<vmem>>, %arg6: memref<8x128xf32, #tpu.memory_space<vmem>>) attributes {dimension_semantics = [#tpu.dimension_semantics<parallel>, #tpu.dimension_semantics<arbitrary>], iteration_bounds = array<i64: 1, 1>, scalar_prefetch = 0 : i64, scratch_operands = 1 : i64, tpu.core_type = #tpu.core_type<tc>, window_params = [{transform_indices = @transform_0, window_bounds = array<i64: 8, 128, 256>}, {pipeline_mode = #tpu.pipeline_mode<synchronous>, transform_indices = @transform_1, window_bounds = array<i64: 128, 128>}, {pipeline_mode = #tpu.pipeline_mode<synchronous>, transform_indices = @transform_2, window_bounds = array<i64: 1, 128>}, {transform_indices = @transform_3, window_bounds = array<i64: 8, 128>}]} {
    %c0_i32 = arith.constant 0 : i32
    %0 = arith.cmpi eq, %arg1, %c0_i32 : i32
    %1 = arith.extui %0 : i1 to i32
    %c0_i32_0 = arith.constant 0 : i32
    %2 = arith.cmpi ne, %1, %c0_i32_0 : i32
    scf.if %2 {
      %cst_9 = arith.constant 0.000000e+00 : f32
      %11 = vector.broadcast %cst_9 : f32 to vector<8x128xf32>
      %c0_10 = arith.constant 0 : index
      %c0_11 = arith.constant 0 : index
      %12 = vector.load %arg6[%c0_10, %c0_11] : memref<8x128xf32, #tpu.memory_space<vmem>>, vector<8x128xf32>
      tpu.vector_store %arg6[%c0_10, %c0_11], %11 {strides = array<i32>} : memref<8x128xf32, #tpu.memory_space<vmem>>, vector<8x128xf32>,
    } else {
    }
    %c0 = arith.constant 0 : index
    %c0_1 = arith.constant 0 : index
    %c0_2 = arith.constant 0 : index
    %3 = vector.load %arg2[%c0, %c0_1, %c0_2] : memref<8x128x256xf32, #tpu.memory_space<vmem>>, vector<8x128x256xf32>
    %c0_3 = arith.constant 0 : index
    %c0_4 = arith.constant 0 : index
    %4 = vector.load %arg6[%c0_3, %c0_4] : memref<8x128xf32, #tpu.memory_space<vmem>>, vector<8x128xf32>
    %cst = arith.constant dense<0.000000e+00> : vector<8x128xf32>
    %5 = vector.multi_reduction <add>, %3, %cst [2] : vector<8x128x256xf32> to vector<8x128xf32>
    %6 = arith.addf %4, %5 : vector<8x128xf32>
    %c0_5 = arith.constant 0 : index
    %c0_6 = arith.constant 0 : index
    %7 = vector.load %arg6[%c0_5, %c0_6] : memref<8x128xf32, #tpu.memory_space<vmem>>, vector<8x128xf32>
    tpu.vector_store %arg6[%c0_5, %c0_6], %6 {strides = array<i32>} : memref<8x128xf32, #tpu.memory_space<vmem>>, vector<8x128xf32>,
    %c0_i32_7 = arith.constant 0 : i32
    %8 = arith.cmpi eq, %arg1, %c0_i32_7 : i32
    %9 = arith.extui %8 : i1 to i32
    %c0_i32_8 = arith.constant 0 : i32
    %10 = arith.cmpi ne, %9, %c0_i32_8 : i32
    scf.if %10 {
      %c0_9 = arith.constant 0 : index
      %c0_10 = arith.constant 0 : index
      %11 = vector.load %arg6[%c0_9, %c0_10] : memref<8x128xf32, #tpu.memory_space<vmem>>, vector<8x128xf32>
      %cst_11 = arith.constant 3.906250e-03 : f32
      %12 = vector.broadcast %cst_11 : f32 to vector<8x128xf32>
      %13 = arith.mulf %11, %12 : vector<8x128xf32>
      %c0_12 = arith.constant 0 : index
      %c0_13 = arith.constant 0 : index
      %14 = vector.load %arg3[%c0_12, %c0_13] : memref<128x128xf32, #tpu.memory_space<vmem>>, vector<128x128xf32>
      %cst_14 = arith.constant dense<0.000000e+00> : vector<8x128xf32>
      %15 = tpu.matmul %13, %14, %cst_14 {dimension_numbers = #tpu.dot_dimension_numbers<[1], [0], [0], [1], [0, 0, 1, 1], [], []>} : vector<8x128xf32>, vector<128x128xf32>, vector<8x128xf32> -> vector<8x128xf32>
      %c0_15 = arith.constant 0 : index
      %c0_16 = arith.constant 0 : index
      %16 = vector.load %arg4[%c0_15, %c0_16] : memref<1x128xf32, #tpu.memory_space<vmem>>, vector<1x128xf32>
      %17 = vector.broadcast %16 : vector<1x128xf32> to vector<8x128xf32>
      %18 = arith.addf %15, %17 : vector<8x128xf32>
      %c0_17 = arith.constant 0 : index
      %c0_18 = arith.constant 0 : index
      %19 = vector.load %arg5[%c0_17, %c0_18] : memref<8x128xf32, #tpu.memory_space<vmem>>, vector<8x128xf32>
      tpu.vector_store %arg5[%c0_17, %c0_18], %18 {strides = array<i32>} : memref<8x128xf32, #tpu.memory_space<vmem>>, vector<8x128xf32>,
    } else {
    }
    return
  }
  func.func @transform_0(%arg0: i32, %arg1: i32) -> (i32, i32, i32) {
    %c0_i32 = arith.constant 0 : i32
    %c0_i32_0 = arith.constant 0 : i32
    return %arg0, %c0_i32, %arg1 : i32, i32, i32
  }
  func.func @transform_1(%arg0: i32, %arg1: i32) -> (i32, i32) {
    %c0_i32 = arith.constant 0 : i32
    %c0_i32_0 = arith.constant 0 : i32
    %c0_i32_1 = arith.constant 0 : i32
    return %c0_i32, %c0_i32_0 : i32, i32
  }
  func.func @transform_2(%arg0: i32, %arg1: i32) -> (i32, i32) {
    %c0_i32 = arith.constant 0 : i32
    %c0_i32_0 = arith.constant 0 : i32
    %c0_i32_1 = arith.constant 0 : i32
    return %c0_i32, %c0_i32_0 : i32, i32
  }
  func.func @transform_3(%arg0: i32, %arg1: i32) -> (i32, i32) {
    %c0_i32 = arith.constant 0 : i32
    %c0_i32_0 = arith.constant 0 : i32
    return %arg0, %c0_i32 : i32, i32
  }
}

module attributes {stable_mosaic.version = 11 : i64} {
  func.func @_pool_linear_kernel(%arg0: i32, %arg1: i32, %arg2: memref<8x128x256xf32, #tpu.memory_space<vmem>>, %arg3: memref<128x128xf32, #tpu.memory_space<vmem>>, %arg4: memref<1x128xf32, #tpu.memory_space<vmem>>, %arg5: memref<8x128xf32, #tpu.memory_space<vmem>>, %arg6: memref<8x128xf32, #tpu.memory_space<vmem>>) attributes {dimension_semantics = [#tpu.dimension_semantics<parallel>, #tpu.dimension_semantics<arbitrary>], iteration_bounds = array<i64: 1, 1>, scalar_prefetch = 0 : i64, scratch_operands = 1 : i64, tpu.core_type = #tpu.core_type<tc>, window_params = [{transform_indices = @transform_0, window_bounds = array<i64: 8, 128, 256>}, {pipeline_mode = #tpu.pipeline_mode<synchronous>, transform_indices = @transform_1, window_bounds = array<i64: 128, 128>}, {pipeline_mode = #tpu.pipeline_mode<synchronous>, transform_indices = @transform_2, window_bounds = array<i64: 1, 128>}, {transform_indices = @transform_3, window_bounds = array<i64: 8, 128>}]} {
    %c0_i32 = arith.constant 0 : i32
    %0 = arith.cmpi eq, %arg1, %c0_i32 : i32
    %1 = arith.extui %0 : i1 to i32
    %c0_i32_0 = arith.constant 0 : i32
    %2 = arith.cmpi ne, %1, %c0_i32_0 : i32
    scf.if %2 {
      %cst_9 = arith.constant 0.000000e+00 : f32
      %11 = vector.broadcast %cst_9 : f32 to vector<8x128xf32>
      %c0_10 = arith.constant 0 : index
      %c0_11 = arith.constant 0 : index
      %12 = vector.load %arg6[%c0_10, %c0_11] : memref<8x128xf32, #tpu.memory_space<vmem>>, vector<8x128xf32>
      tpu.vector_store %arg6[%c0_10, %c0_11], %11 {strides = array<i32>} : memref<8x128xf32, #tpu.memory_space<vmem>>, vector<8x128xf32>,
    } else {
    }
    %c0 = arith.constant 0 : index
    %c0_1 = arith.constant 0 : index
    %c0_2 = arith.constant 0 : index
    %3 = vector.load %arg2[%c0, %c0_1, %c0_2] : memref<8x128x256xf32, #tpu.memory_space<vmem>>, vector<8x128x256xf32>
    %c0_3 = arith.constant 0 : index
    %c0_4 = arith.constant 0 : index
    %4 = vector.load %arg6[%c0_3, %c0_4] : memref<8x128xf32, #tpu.memory_space<vmem>>, vector<8x128xf32>
    %cst = arith.constant dense<0.000000e+00> : vector<8x128xf32>
    %5 = vector.multi_reduction <add>, %3, %cst [2] : vector<8x128x256xf32> to vector<8x128xf32>
    %6 = arith.addf %4, %5 : vector<8x128xf32>
    %c0_5 = arith.constant 0 : index
    %c0_6 = arith.constant 0 : index
    %7 = vector.load %arg6[%c0_5, %c0_6] : memref<8x128xf32, #tpu.memory_space<vmem>>, vector<8x128xf32>
    tpu.vector_store %arg6[%c0_5, %c0_6], %6 {strides = array<i32>} : memref<8x128xf32, #tpu.memory_space<vmem>>, vector<8x128xf32>,
    %c0_i32_7 = arith.constant 0 : i32
    %8 = arith.cmpi eq, %arg1, %c0_i32_7 : i32
    %9 = arith.extui %8 : i1 to i32
    %c0_i32_8 = arith.constant 0 : i32
    %10 = arith.cmpi ne, %9, %c0_i32_8 : i32
    scf.if %10 {
      %c0_9 = arith.constant 0 : index
      %c0_10 = arith.constant 0 : index
      %11 = vector.load %arg6[%c0_9, %c0_10] : memref<8x128xf32, #tpu.memory_space<vmem>>, vector<8x128xf32>
      %cst_11 = arith.constant 3.906250e-03 : f32
      %12 = vector.broadcast %cst_11 : f32 to vector<8x128xf32>
      %13 = arith.mulf %11, %12 : vector<8x128xf32>
      %c0_12 = arith.constant 0 : index
      %c0_13 = arith.constant 0 : index
      %14 = vector.load %arg3[%c0_12, %c0_13] : memref<128x128xf32, #tpu.memory_space<vmem>>, vector<128x128xf32>
      %cst_14 = arith.constant dense<0.000000e+00> : vector<8x128xf32>
      %15 = tpu.matmul %13, %14, %cst_14 {dimension_numbers = #tpu.dot_dimension_numbers<[1], [0], [0], [1], [0, 0, 1, 1], [], []>} : vector<8x128xf32>, vector<128x128xf32>, vector<8x128xf32> -> vector<8x128xf32>
      %c0_15 = arith.constant 0 : index
      %c0_16 = arith.constant 0 : index
      %16 = vector.load %arg4[%c0_15, %c0_16] : memref<1x128xf32, #tpu.memory_space<vmem>>, vector<1x128xf32>
      %17 = vector.broadcast %16 : vector<1x128xf32> to vector<8x128xf32>
      %18 = arith.addf %15, %17 : vector<8x128xf32>
      %c0_17 = arith.constant 0 : index
      %c0_18 = arith.constant 0 : index
      %19 = vector.load %arg5[%c0_17, %c0_18] : memref<8x128xf32, #tpu.memory_space<vmem>>, vector<8x128xf32>
      tpu.vector_store %arg5[%c0_17, %c0_18], %18 {strides = array<i32>} : memref<8x128xf32, #tpu.memory_space<vmem>>, vector<8x128xf32>,
    } else {
    }
    return
  }
  func.func @transform_0(%arg0: i32, %arg1: i32) -> (i32, i32, i32) {
    %c0_i32 = arith.constant 0 : i32
    %c0_i32_0 = arith.constant 0 : i32
    return %arg0, %c0_i32, %arg1 : i32, i32, i32
  }
  func.func @transform_1(%arg0: i32, %arg1: i32) -> (i32, i32) {
    %c0_i32 = arith.constant 0 : i32
    %c0_i32_0 = arith.constant 0 : i32
    %c0_i32_1 = arith.constant 0 : i32
    return %c0_i32, %c0_i32_0 : i32, i32
  }
  func.func @transform_2(%arg0: i32, %arg1: i32) -> (i32, i32) {
    %c0_i32 = arith.constant 0 : i32
    %c0_i32_0 = arith.constant 0 : i32
    %c0_i32_1 = arith.constant 0 : i32
    return %c0_i32, %c0_i32_0 : i32, i32
  }
  func.func @transform_3(%arg0: i32, %arg1: i32) -> (i32, i32) {
    %c0_i32 = arith.constant 0 : i32
    %c0_i32_0 = arith.constant 0 : i32
    return %arg0, %c0_i32 : i32, i32
  }
}

</mosaic_0001>

<llo_original>
// kernel: tpu_custom_call.1
$region0: #{tpu_custom_call.1}
  #allocation0 [shape = 'u32[]', space=smem, size = 0x4, offset = 0x4, fixed_abs, tag = 'smem constant byte address 0x4 - core index']
  #allocation1 [shape = 'u32[144,128]{1,0:T(1,128)}', space=vmem, size = 0x12000, scoped, tag = 'internal scratch']
  #allocation2 [shape = 'f32[8,128]{1,0:T(8,128)}', space=vmem, size = 0x1000, scoped, tag = 'scratch operand']
  %s0 = inlined_call_operand.hbm [shape: f32[2,128,256], index: 0, kind: input, shape index: {}]
  %s1 = inlined_call_operand.hbm [shape: f32[128,128], index: 1, kind: input, shape index: {}]
  %s2 = inlined_call_operand.vmem [shape: f32[1,128], index: 2, kind: input, shape index: {}]
  %s3 = inlined_call_operand.hbm [shape: f32[8,128], index: 3, kind: output, shape index: {}]
  %s4 = sld [smem:[#allocation0]]
  $region38: #{tpu_custom_call.1} parent=0
    _
  %s6 = ssub.s32 1, %s4
  %s7 = scalar_select 0, %s6, %s4
  $region1: #{tpu_custom_call.1} parent=0
    #allocation3 [shape = 'u8[1048576]{0}', space=vmem, size = 0x100000, scoped, tag = 'input window, operand 0, single buffered']
    #allocation4 [shape = 's32[1]{0}', space=sflag, size = 0x4, scoped, tag = 'scoped memory for tpu_custom_call.1']
    #allocation5 [shape = 's32[1]{0}', space=sflag, size = 0x4, scoped, tag = 'scoped memory for tpu_custom_call.1']
    #allocation6 [shape = 'u8[65536]{0}', space=vmem, size = 0x10000, scoped, tag = 'input window, operand 1, single buffered']
    #allocation7 [shape = 's32[1]{0}', space=sflag, size = 0x4, scoped, tag = 'scoped memory for tpu_custom_call.1']
    #allocation8 [shape = 'u8[4096]{0}', space=vmem, size = 0x1000, scoped, tag = 'output window, operand 0, single buffered']
    %8 = vsyncpa [#allocation4], 0
    %9 = vsyncpa [#allocation7], 0
    %10 = vsyncpa [#allocation5], 0
    // Predicated region
    $region2: #{tpu_custom_call.1} parent=1 // pred_check
      _
    $region3: #{tpu_custom_call.1} parent=1 // pred_check_branch
      %12 = sbr.rel (0) target = $region5
    $region4: #{tpu_custom_call.1} parent=1 // pred_region
      %s14 = ssub.s32 32768, 8192
      %15 = vsyncadd [#allocation4], %s14
      %s16 = sshll.u32 [#allocation3], 4
      %s17 = int_to_ptr.vmem [resolvable:$true] %s16
      %22 = dma.hbm_to_vmem [thread:$0]  %s0, 8192, %s17, [#allocation4], 256, 256, 16
    $region5: #{tpu_custom_call.1} parent=1 // pred_fallthru
      _
    // Predicated region
    $region6: #{tpu_custom_call.1} parent=1 // pred_check
      _
    $region7: #{tpu_custom_call.1} parent=1 // pred_check_branch
      %24 = sbr.rel (0) target = $region9
    $region8: #{tpu_custom_call.1} parent=1 // pred_region
      %s26 = ssub.s32 2048, 2048
      %27 = vsyncadd [#allocation7], %s26
      %s28 = sshll.u32 [#allocation6], 4
      %s29 = int_to_ptr.vmem [resolvable:$true] %s28
      %34 = dma.hbm_to_vmem [thread:$0]  %s1, 2048, %s29, [#allocation7], 128, 128, 8
    $region9: #{tpu_custom_call.1} parent=1 // pred_fallthru
      _
    // Predicated region
    $region10: #{tpu_custom_call.1} parent=1 // pred_check
      _
    $region11: #{tpu_custom_call.1} parent=1 // pred_check_branch
      %36 = sbr.rel (0) target = $region13
    $region12: #{tpu_custom_call.1} parent=1 // pred_region
      _
    $region13: #{tpu_custom_call.1} parent=1 // pred_fallthru
      _
    // Predicated region
    $region14: #{tpu_custom_call.1} parent=1 // pred_check
      _
    $region15: #{tpu_custom_call.1} parent=1 // pred_check_branch
      %38 = sbr.rel (0) target = $region17
    $region16: #{tpu_custom_call.1} parent=1 // pred_region
      %39 = dma.done [#allocation4], 32768
    $region17: #{tpu_custom_call.1} parent=1 // pred_fallthru
      _
    // Predicated region
    $region18: #{tpu_custom_call.1} parent=1 // pred_check
      _
    $region19: #{tpu_custom_call.1} parent=1 // pred_check_branch
      %41 = sbr.rel (0) target = $region21
    $region20: #{tpu_custom_call.1} parent=1 // pred_region
      %42 = dma.done [#allocation7], 2048
    $region21: #{tpu_custom_call.1} parent=1 // pred_fallthru
      _
    %p43 = scmp.eq.s32.totalorder 0, 0
    // Predicated region
    $region22: #{tpu_custom_call.1} parent=1 // pred_check
      %p44 = pneg %p43
    $region23: #{tpu_custom_call.1} parent=1 // pred_check_branch
      %46 = sbr.rel (%p44) target = $region25
    $region24: #{tpu_custom_call.1} parent=1 // pred_region
      %47 = vst [vmem:[#allocation2] sm:$0xff] 0.0
    $region25: #{tpu_custom_call.1} parent=1 // pred_fallthru
      _
    %v48 = vld [vmem:[#allocation3] sm:$0xff]
    %v49 = vld [vmem:[#allocation3 + $0x8] sm:$0xff]
    %v50 = vld [vmem:[#allocation3 + $0x10] sm:$0xff]
    %v51 = vld [vmem:[#allocation3 + $0x18] sm:$0xff]
    %v52 = vld [vmem:[#allocation3 + $0x20] sm:$0xff]
    %v53 = vld [vmem:[#allocation3 + $0x28] sm:$0xff]
    %v54 = vld [vmem:[#allocation3 + $0x30] sm:$0xff]
    %v55 = vld [vmem:[#allocation3 + $0x38] sm:$0xff]
    %v56 = vld [vmem:[#allocation3 + $0x40] sm:$0xff]
    %v57 = vld [vmem:[#allocation3 + $0x48] sm:$0xff]
    %v58 = vld [vmem:[#allocation3 + $0x50] sm:$0xff]
    %v59 = vld [vmem:[#allocation3 + $0x58] sm:$0xff]
    %v60 = vld [vmem:[#allocation3 + $0x60] sm:$0xff]
    %v61 = vld [vmem:[#allocation3 + $0x68] sm:$0xff]
    %v62 = vld [vmem:[#allocation3 + $0x70] sm:$0xff]
    %v63 = vld [vmem:[#allocation3 + $0x78] sm:$0xff]
    %v64 = vld [vmem:[#allocation3 + $0x80] sm:$0xff]
    %v65 = vld [vmem:[#allocation3 + $0x88] sm:$0xff]
    %v66 = vld [vmem:[#allocation3 + $0x90] sm:$0xff]
    %v67 = vld [vmem:[#allocation3 + $0x98] sm:$0xff]
    %v68 = vld [vmem:[#allocation3 + $0xa0] sm:$0xff]
    %v69 = vld [vmem:[#allocation3 + $0xa8] sm:$0xff]
    %v70 = vld [vmem:[#allocation3 + $0xb0] sm:$0xff]
    %v71 = vld [vmem:[#allocation3 + $0xb8] sm:$0xff]
    %v72 = vld [vmem:[#allocation3 + $0xc0] sm:$0xff]
    %v73 = vld [vmem:[#allocation3 + $0xc8] sm:$0xff]
    %v74 = vld [vmem:[#allocation3 + $0xd0] sm:$0xff]
    %v75 = vld [vmem:[#allocation3 + $0xd8] sm:$0xff]
    %v76 = vld [vmem:[#allocation3 + $0xe0] sm:$0xff]
    %v77 = vld [vmem:[#allocation3 + $0xe8] sm:$0xff]
    %v78 = vld [vmem:[#allocation3 + $0xf0] sm:$0xff]
    %v79 = vld [vmem:[#allocation3 + $0xf8] sm:$0xff]
    %v80 = vld [vmem:[#allocation3 + $0x100] sm:$0xff]
    %v81 = vld [vmem:[#allocation3 + $0x108] sm:$0xff]
    %v82 = vld [vmem:[#allocation3 + $0x110] sm:$0xff]
    %v83 = vld [vmem:[#allocation3 + $0x118] sm:$0xff]
    %v84 = vld [vmem:[#allocation3 + $0x120] sm:$0xff]
    %v85 = vld [vmem:[#allocation3 + $0x128] sm:$0xff]
    %v86 = vld [vmem:[#allocation3 + $0x130] sm:$0xff]
    %v87 = vld [vmem:[#allocation3 + $0x138] sm:$0xff]
    %v88 = vld [vmem:[#allocation3 + $0x140] sm:$0xff]
    %v89 = vld [vmem:[#allocation3 + $0x148] sm:$0xff]
    %v90 = vld [vmem:[#allocation3 + $0x150] sm:$0xff]
    %v91 = vld [vmem:[#allocation3 + $0x158] sm:$0xff]
    %v92 = vld [vmem:[#allocation3 + $0x160] sm:$0xff]
    %v93 = vld [vmem:[#allocation3 + $0x168] sm:$0xff]
    %v94 = vld [vmem:[#allocation3 + $0x170] sm:$0xff]
    %v95 = vld [vmem:[#allocation3 + $0x178] sm:$0xff]
    %v96 = vld [vmem:[#allocation3 + $0x180] sm:$0xff]
    %v97 = vld [vmem:[#allocation3 + $0x188] sm:$0xff]
    %v98 = vld [vmem:[#allocation3 + $0x190] sm:$0xff]
    %v99 = vld [vmem:[#allocation3 + $0x198] sm:$0xff]
    %v100 = vld [vmem:[#allocation3 + $0x1a0] sm:$0xff]
    %v101 = vld [vmem:[#allocation3 + $0x1a8] sm:$0xff]
    %v102 = vld [vmem:[#allocation3 + $0x1b0] sm:$0xff]
    %v103 = vld [vmem:[#allocation3 + $0x1b8] sm:$0xff]
    %v104 = vld [vmem:[#allocation3 + $0x1c0] sm:$0xff]
    %v105 = vld [vmem:[#allocation3 + $0x1c8] sm:$0xff]
    %v106 = vld [vmem:[#allocation3 + $0x1d0] sm:$0xff]
    %v107 = vld [vmem:[#allocation3 + $0x1d8] sm:$0xff]
    %v108 = vld [vmem:[#allocation3 + $0x1e0] sm:$0xff]
    %v109 = vld [vmem:[#allocation3 + $0x1e8] sm:$0xff]
    %v110 = vld [vmem:[#allocation3 + $0x1f0] sm:$0xff]
    %v111 = vld [vmem:[#allocation3 + $0x1f8] sm:$0xff]
    %v112 = vld [vmem:[#allocation3 + $0x200] sm:$0xff]
    %v113 = vld [vmem:[#allocation3 + $0x208] sm:$0xff]
    %v114 = vld [vmem:[#allocation3 + $0x210] sm:$0xff]
    %v115 = vld [vmem:[#allocation3 + $0x218] sm:$0xff]
    %v116 = vld [vmem:[#allocation3 + $0x220] sm:$0xff]
    %v117 = vld [vmem:[#allocation3 + $0x228] sm:$0xff]
    %v118 = vld [vmem:[#allocation3 + $0x230] sm:$0xff]
    %v119 = vld [vmem:[#allocation3 + $0x238] sm:$0xff]
    %v120 = vld [vmem:[#allocation3 + $0x240] sm:$0xff]
    %v121 = vld [vmem:[#allocation3 + $0x248] sm:$0xff]
    %v122 = vld [vmem:[#allocation3 + $0x250] sm:$0xff]
    %v123 = vld [vmem:[#allocation3 + $0x258] sm:$0xff]
    %v124 = vld [vmem:[#allocation3 + $0x260] sm:$0xff]
    %v125 = vld [vmem:[#allocation3 + $0x268] sm:$0xff]
    %v126 = vld [vmem:[#allocation3 + $0x270] sm:$0xff]
    %v127 = vld [vmem:[#allocation3 + $0x278] sm:$0xff]
    %v128 = vld [vmem:[#allocation3 + $0x280] sm:$0xff]
    %v129 = vld [vmem:[#allocation3 + $0x288] sm:$0xff]
    %v130 = vld [vmem:[#allocation3 + $0x290] sm:$0xff]
    %v131 = vld [vmem:[#allocation3 + $0x298] sm:$0xff]
    %v132 = vld [vmem:[#allocation3 + $0x2a0] sm:$0xff]
    %v133 = vld [vmem:[#allocation3 + $0x2a8] sm:$0xff]
    %v134 = vld [vmem:[#allocation3 + $0x2b0] sm:$0xff]
    %v135 = vld [vmem:[#allocation3 + $0x2b8] sm:$0xff]
    %v136 = vld [vmem:[#allocation3 + $0x2c0] sm:$0xff]
    %v137 = vld [vmem:[#allocation3 + $0x2c8] sm:$0xff]
    %v138 = vld [vmem:[#allocation3 + $0x2d0] sm:$0xff]
    %v139 = vld [vmem:[#allocation3 + $0x2d8] sm:$0xff]
    %v140 = vld [vmem:[#allocation3 + $0x2e0] sm:$0xff]
    %v141 = vld [vmem:[#allocation3 + $0x2e8] sm:$0xff]
    %v142 = vld [vmem:[#allocation3 + $0x2f0] sm:$0xff]
    %v143 = vld [vmem:[#allocation3 + $0x2f8] sm:$0xff]
    %v144 = vld [vmem:[#allocation3 + $0x300] sm:$0xff]
    %v145 = vld [vmem:[#allocation3 + $0x308] sm:$0xff]
    %v146 = vld [vmem:[#allocation3 + $0x310] sm:$0xff]
    %v147 = vld [vmem:[#allocation3 + $0x318] sm:$0xff]
    %v148 = vld [vmem:[#allocation3 + $0x320] sm:$0xff]
    %v149 = vld [vmem:[#allocation3 + $0x328] sm:$0xff]
    %v150 = vld [vmem:[#allocation3 + $0x330] sm:$0xff]
    %v151 = vld [vmem:[#allocation3 + $0x338] sm:$0xff]
    %v152 = vld [vmem:[#allocation3 + $0x340] sm:$0xff]
    %v153 = vld [vmem:[#allocation3 + $0x348] sm:$0xff]
    %v154 = vld [vmem:[#allocation3 + $0x350] sm:$0xff]
    %v155 = vld [vmem:[#allocation3 + $0x358] sm:$0xff]
    %v156 = vld [vmem:[#allocation3 + $0x360] sm:$0xff]
    %v157 = vld [vmem:[#allocation3 + $0x368] sm:$0xff]
    %v158 = vld [vmem:[#allocation3 + $0x370] sm:$0xff]
    %v159 = vld [vmem:[#allocation3 + $0x378] sm:$0xff]
    %v160 = vld [vmem:[#allocation3 + $0x380] sm:$0xff]
    %v161 = vld [vmem:[#allocation3 + $0x388] sm:$0xff]
    %v162 = vld [vmem:[#allocation3 + $0x390] sm:$0xff]
    %v163 = vld [vmem:[#allocation3 + $0x398] sm:$0xff]
    %v164 = vld [vmem:[#allocation3 + $0x3a0] sm:$0xff]
    %v165 = vld [vmem:[#allocation3 + $0x3a8] sm:$0xff]
    %v166 = vld [vmem:[#allocation3 + $0x3b0] sm:$0xff]
    %v167 = vld [vmem:[#allocation3 + $0x3b8] sm:$0xff]
    %v168 = vld [vmem:[#allocation3 + $0x3c0] sm:$0xff]
    %v169 = vld [vmem:[#allocation3 + $0x3c8] sm:$0xff]
    %v170 = vld [vmem:[#allocation3 + $0x3d0] sm:$0xff]
    %v171 = vld [vmem:[#allocation3 + $0x3d8] sm:$0xff]
    %v172 = vld [vmem:[#allocation3 + $0x3e0] sm:$0xff]
    %v173 = vld [vmem:[#allocation3 + $0x3e8] sm:$0xff]
    %v174 = vld [vmem:[#allocation3 + $0x3f0] sm:$0xff]
    %v175 = vld [vmem:[#allocation3 + $0x3f8] sm:$0xff]
    %v176 = vld [vmem:[#allocation3 + $0x400] sm:$0xff]
    %v177 = vld [vmem:[#allocation3 + $0x408] sm:$0xff]
    %v178 = vld [vmem:[#allocation3 + $0x410] sm:$0xff]
    %v179 = vld [vmem:[#allocation3 + $0x418] sm:$0xff]
    %v180 = vld [vmem:[#allocation3 + $0x420] sm:$0xff]
    %v181 = vld [vmem:[#allocation3 + $0x428] sm:$0xff]
    %v182 = vld [vmem:[#allocation3 + $0x430] sm:$0xff]
    %v183 = vld [vmem:[#allocation3 + $0x438] sm:$0xff]
    %v184 = vld [vmem:[#allocation3 + $0x440] sm:$0xff]
    %v185 = vld [vmem:[#allocation3 + $0x448] sm:$0xff]
    %v186 = vld [vmem:[#allocation3 + $0x450] sm:$0xff]
    %v187 = vld [vmem:[#allocation3 + $0x458] sm:$0xff]
    %v188 = vld [vmem:[#allocation3 + $0x460] sm:$0xff]
    %v189 = vld [vmem:[#allocation3 + $0x468] sm:$0xff]
    %v190 = vld [vmem:[#allocation3 + $0x470] sm:$0xff]
    %v191 = vld [vmem:[#allocation3 + $0x478] sm:$0xff]
    %v192 = vld [vmem:[#allocation3 + $0x480] sm:$0xff]
    %v193 = vld [vmem:[#allocation3 + $0x488] sm:$0xff]
    %v194 = vld [vmem:[#allocation3 + $0x490] sm:$0xff]
    %v195 = vld [vmem:[#allocation3 + $0x498] sm:$0xff]
    %v196 = vld [vmem:[#allocation3 + $0x4a0] sm:$0xff]
    %v197 = vld [vmem:[#allocation3 + $0x4a8] sm:$0xff]
    %v198 = vld [vmem:[#allocation3 + $0x4b0] sm:$0xff]
    %v199 = vld [vmem:[#allocation3 + $0x4b8] sm:$0xff]
    %v200 = vld [vmem:[#allocation3 + $0x4c0] sm:$0xff]
    %v201 = vld [vmem:[#allocation3 + $0x4c8] sm:$0xff]
    %v202 = vld [vmem:[#allocation3 + $0x4d0] sm:$0xff]
    %v203 = vld [vmem:[#allocation3 + $0x4d8] sm:$0xff]
    %v204 = vld [vmem:[#allocation3 + $0x4e0] sm:$0xff]
    %v205 = vld [vmem:[#allocation3 + $0x4e8] sm:$0xff]
    %v206 = vld [vmem:[#allocation3 + $0x4f0] sm:$0xff]
    %v207 = vld [vmem:[#allocation3 + $0x4f8] sm:$0xff]
    %v208 = vld [vmem:[#allocation3 + $0x500] sm:$0xff]
    %v209 = vld [vmem:[#allocation3 + $0x508] sm:$0xff]
    %v210 = vld [vmem:[#allocation3 + $0x510] sm:$0xff]
    %v211 = vld [vmem:[#allocation3 + $0x518] sm:$0xff]
    %v212 = vld [vmem:[#allocation3 + $0x520] sm:$0xff]
    %v213 = vld [vmem:[#allocation3 + $0x528] sm:$0xff]
    %v214 = vld [vmem:[#allocation3 + $0x530] sm:$0xff]
    %v215 = vld [vmem:[#allocation3 + $0x538] sm:$0xff]
    %v216 = vld [vmem:[#allocation3 + $0x540] sm:$0xff]
    %v217 = vld [vmem:[#allocation3 + $0x548] sm:$0xff]
    %v218 = vld [vmem:[#allocation3 + $0x550] sm:$0xff]
    %v219 = vld [vmem:[#allocation3 + $0x558] sm:$0xff]
    %v220 = vld [vmem:[#allocation3 + $0x560] sm:$0xff]
    %v221 = vld [vmem:[#allocation3 + $0x568] sm:$0xff]
    %v222 = vld [vmem:[#allocation3 + $0x570] sm:$0xff]
    %v223 = vld [vmem:[#allocation3 + $0x578] sm:$0xff]
    %v224 = vld [vmem:[#allocation3 + $0x580] sm:$0xff]
    %v225 = vld [vmem:[#allocation3 + $0x588] sm:$0xff]
    %v226 = vld [vmem:[#allocation3 + $0x590] sm:$0xff]
    %v227 = vld [vmem:[#allocation3 + $0x598] sm:$0xff]
    %v228 = vld [vmem:[#allocation3 + $0x5a0] sm:$0xff]
    %v229 = vld [vmem:[#allocation3 + $0x5a8] sm:$0xff]
    %v230 = vld [vmem:[#allocation3 + $0x5b0] sm:$0xff]
    %v231 = vld [vmem:[#allocation3 + $0x5b8] sm:$0xff]
    %v232 = vld [vmem:[#allocation3 + $0x5c0] sm:$0xff]
    %v233 = vld [vmem:[#allocation3 + $0x5c8] sm:$0xff]
    %v234 = vld [vmem:[#allocation3 + $0x5d0] sm:$0xff]
    %v235 = vld [vmem:[#allocation3 + $0x5d8] sm:$0xff]
    %v236 = vld [vmem:[#allocation3 + $0x5e0] sm:$0xff]
    %v237 = vld [vmem:[#allocation3 + $0x5e8] sm:$0xff]
    %v238 = vld [vmem:[#allocation3 + $0x5f0] sm:$0xff]
    %v239 = vld [vmem:[#allocation3 + $0x5f8] sm:$0xff]
    %v240 = vld [vmem:[#allocation3 + $0x600] sm:$0xff]
    %v241 = vld [vmem:[#allocation3 + $0x608] sm:$0xff]
    %v242 = vld [vmem:[#allocation3 + $0x610] sm:$0xff]
    %v243 = vld [vmem:[#allocation3 + $0x618] sm:$0xff]
    %v244 = vld [vmem:[#allocation3 + $0x620] sm:$0xff]
    %v245 = vld [vmem:[#allocation3 + $0x628] sm:$0xff]
    %v246 = vld [vmem:[#allocation3 + $0x630] sm:$0xff]
    %v247 = vld [vmem:[#allocation3 + $0x638] sm:$0xff]
    %v248 = vld [vmem:[#allocation3 + $0x640] sm:$0xff]
    %v249 = vld [vmem:[#allocation3 + $0x648] sm:$0xff]
    %v250 = vld [vmem:[#allocation3 + $0x650] sm:$0xff]
    %v251 = vld [vmem:[#allocation3 + $0x658] sm:$0xff]
    %v252 = vld [vmem:[#allocation3 + $0x660] sm:$0xff]
    %v253 = vld [vmem:[#allocation3 + $0x668] sm:$0xff]
    %v254 = vld [vmem:[#allocation3 + $0x670] sm:$0xff]
    %v255 = vld [vmem:[#allocation3 + $0x678] sm:$0xff]
    %v256 = vld [vmem:[#allocation3 + $0x680] sm:$0xff]
    %v257 = vld [vmem:[#allocation3 + $0x688] sm:$0xff]
    %v258 = vld [vmem:[#allocation3 + $0x690] sm:$0xff]
    %v259 = vld [vmem:[#allocation3 + $0x698] sm:$0xff]
    %v260 = vld [vmem:[#allocation3 + $0x6a0] sm:$0xff]
    %v261 = vld [vmem:[#allocation3 + $0x6a8] sm:$0xff]
    %v262 = vld [vmem:[#allocation3 + $0x6b0] sm:$0xff]
    %v263 = vld [vmem:[#allocation3 + $0x6b8] sm:$0xff]
    %v264 = vld [vmem:[#allocation3 + $0x6c0] sm:$0xff]
    %v265 = vld [vmem:[#allocation3 + $0x6c8] sm:$0xff]
    %v266 = vld [vmem:[#allocation3 + $0x6d0] sm:$0xff]
    %v267 = vld [vmem:[#allocation3 + $0x6d8] sm:$0xff]
    %v268 = vld [vmem:[#allocation3 + $0x6e0] sm:$0xff]
    %v269 = vld [vmem:[#allocation3 + $0x6e8] sm:$0xff]
    %v270 = vld [vmem:[#allocation3 + $0x6f0] sm:$0xff]
    %v271 = vld [vmem:[#allocation3 + $0x6f8] sm:$0xff]
    %v272 = vld [vmem:[#allocation3 + $0x700] sm:$0xff]
    %v273 = vld [vmem:[#allocation3 + $0x708] sm:$0xff]
    %v274 = vld [vmem:[#allocation3 + $0x710] sm:$0xff]
    %v275 = vld [vmem:[#allocation3 + $0x718] sm:$0xff]
    %v276 = vld [vmem:[#allocation3 + $0x720] sm:$0xff]
    %v277 = vld [vmem:[#allocation3 + $0x728] sm:$0xff]
    %v278 = vld [vmem:[#allocation3 + $0x730] sm:$0xff]
    %v279 = vld [vmem:[#allocation3 + $0x738] sm:$0xff]
    %v280 = vld [vmem:[#allocation3 + $0x740] sm:$0xff]
    %v281 = vld [vmem:[#allocation3 + $0x748] sm:$0xff]
    %v282 = vld [vmem:[#allocation3 + $0x750] sm:$0xff]
    %v283 = vld [vmem:[#allocation3 + $0x758] sm:$0xff]
    %v284 = vld [vmem:[#allocation3 + $0x760] sm:$0xff]
    %v285 = vld [vmem:[#allocation3 + $0x768] sm:$0xff]
    %v286 = vld [vmem:[#allocation3 + $0x770] sm:$0xff]
    %v287 = vld [vmem:[#allocation3 + $0x778] sm:$0xff]
    %v288 = vld [vmem:[#allocation3 + $0x780] sm:$0xff]
    %v289 = vld [vmem:[#allocation3 + $0x788] sm:$0xff]
    %v290 = vld [vmem:[#allocation3 + $0x790] sm:$0xff]
    %v291 = vld [vmem:[#allocation3 + $0x798] sm:$0xff]
    %v292 = vld [vmem:[#allocation3 + $0x7a0] sm:$0xff]
    %v293 = vld [vmem:[#allocation3 + $0x7a8] sm:$0xff]
    %v294 = vld [vmem:[#allocation3 + $0x7b0] sm:$0xff]
    %v295 = vld [vmem:[#allocation3 + $0x7b8] sm:$0xff]
    %v296 = vld [vmem:[#allocation3 + $0x7c0] sm:$0xff]
    %v297 = vld [vmem:[#allocation3 + $0x7c8] sm:$0xff]
    %v298 = vld [vmem:[#allocation3 + $0x7d0] sm:$0xff]
    %v299 = vld [vmem:[#allocation3 + $0x7d8] sm:$0xff]
    %v300 = vld [vmem:[#allocation3 + $0x7e0] sm:$0xff]
    %v301 = vld [vmem:[#allocation3 + $0x7e8] sm:$0xff]
    %v302 = vld [vmem:[#allocation3 + $0x7f0] sm:$0xff]
    %v303 = vld [vmem:[#allocation3 + $0x7f8] sm:$0xff]
    %v304 = vld [vmem:[#allocation2] sm:$0xff]
    %v305 = vadd.f32 %v48, %v49
    %306 = vadd.xlane.f32.xlu0 %v305
    %v307 = vpop.xlane.xlu0 %306
    %v308 = vadd.f32 %v50, %v51
    %309 = vadd.xlane.f32.xlu0 %v308
    %v310 = vpop.xlane.xlu0 %309
    %v311 = vadd.f32 %v52, %v53
    %312 = vadd.xlane.f32.xlu0 %v311
    %v313 = vpop.xlane.xlu0 %312
    %v314 = vadd.f32 %v54, %v55
    %315 = vadd.xlane.f32.xlu0 %v314
    %v316 = vpop.xlane.xlu0 %315
    %v317 = vadd.f32 %v56, %v57
    %318 = vadd.xlane.f32.xlu0 %v317
    %v319 = vpop.xlane.xlu0 %318
    %v320 = vadd.f32 %v58, %v59
    %321 = vadd.xlane.f32.xlu0 %v320
    %v322 = vpop.xlane.xlu0 %321
    %v323 = vadd.f32 %v60, %v61
    %324 = vadd.xlane.f32.xlu0 %v323
    %v325 = vpop.xlane.xlu0 %324
    %v326 = vadd.f32 %v62, %v63
    %327 = vadd.xlane.f32.xlu0 %v326
    %v328 = vpop.xlane.xlu0 %327
    %v329 = vadd.f32 %v64, %v65
    %330 = vadd.xlane.f32.xlu0 %v329
    %v331 = vpop.xlane.xlu0 %330
    %v332 = vadd.f32 %v66, %v67
    %333 = vadd.xlane.f32.xlu0 %v332
    %v334 = vpop.xlane.xlu0 %333
    %v335 = vadd.f32 %v68, %v69
    %336 = vadd.xlane.f32.xlu0 %v335
    %v337 = vpop.xlane.xlu0 %336
    %v338 = vadd.f32 %v70, %v71
    %339 = vadd.xlane.f32.xlu0 %v338
    %v340 = vpop.xlane.xlu0 %339
    %v341 = vadd.f32 %v72, %v73
    %342 = vadd.xlane.f32.xlu0 %v341
    %v343 = vpop.xlane.xlu0 %342
    %v344 = vadd.f32 %v74, %v75
    %345 = vadd.xlane.f32.xlu0 %v344
    %v346 = vpop.xlane.xlu0 %345
    %v347 = vadd.f32 %v76, %v77
    %348 = vadd.xlane.f32.xlu0 %v347
    %v349 = vpop.xlane.xlu0 %348
    %v350 = vadd.f32 %v78, %v79
    %351 = vadd.xlane.f32.xlu0 %v350
    %v352 = vpop.xlane.xlu0 %351
    %v353 = vadd.f32 %v80, %v81
    %354 = vadd.xlane.f32.xlu0 %v353
    %v355 = vpop.xlane.xlu0 %354
    %v356 = vadd.f32 %v82, %v83
    %357 = vadd.xlane.f32.xlu0 %v356
    %v358 = vpop.xlane.xlu0 %357
    %v359 = vadd.f32 %v84, %v85
    %360 = vadd.xlane.f32.xlu0 %v359
    %v361 = vpop.xlane.xlu0 %360
    %v362 = vadd.f32 %v86, %v87
    %363 = vadd.xlane.f32.xlu0 %v362
    %v364 = vpop.xlane.xlu0 %363
    %v365 = vadd.f32 %v88, %v89
    %366 = vadd.xlane.f32.xlu0 %v365
    %v367 = vpop.xlane.xlu0 %366
    %v368 = vadd.f32 %v90, %v91
    %369 = vadd.xlane.f32.xlu0 %v368
    %v370 = vpop.xlane.xlu0 %369
    %v371 = vadd.f32 %v92, %v93
    %372 = vadd.xlane.f32.xlu0 %v371
    %v373 = vpop.xlane.xlu0 %372
    %v374 = vadd.f32 %v94, %v95
    %375 = vadd.xlane.f32.xlu0 %v374
    %v376 = vpop.xlane.xlu0 %375
    %v377 = vadd.f32 %v96, %v97
    %378 = vadd.xlane.f32.xlu0 %v377
    %v379 = vpop.xlane.xlu0 %378
    %v380 = vadd.f32 %v98, %v99
    %381 = vadd.xlane.f32.xlu0 %v380
    %v382 = vpop.xlane.xlu0 %381
    %v383 = vadd.f32 %v100, %v101
    %384 = vadd.xlane.f32.xlu0 %v383
    %v385 = vpop.xlane.xlu0 %384
    %v386 = vadd.f32 %v102, %v103
    %387 = vadd.xlane.f32.xlu0 %v386
    %v388 = vpop.xlane.xlu0 %387
    %v389 = vadd.f32 %v104, %v105
    %390 = vadd.xlane.f32.xlu0 %v389
    %v391 = vpop.xlane.xlu0 %390
    %v392 = vadd.f32 %v106, %v107
    %393 = vadd.xlane.f32.xlu0 %v392
    %v394 = vpop.xlane.xlu0 %393
    %v395 = vadd.f32 %v108, %v109
    %396 = vadd.xlane.f32.xlu0 %v395
    %v397 = vpop.xlane.xlu0 %396
    %v398 = vadd.f32 %v110, %v111
    %399 = vadd.xlane.f32.xlu0 %v398
    %v400 = vpop.xlane.xlu0 %399
    %v401 = vadd.f32 %v112, %v113
    %402 = vadd.xlane.f32.xlu0 %v401
    %v403 = vpop.xlane.xlu0 %402
    %v404 = vadd.f32 %v114, %v115
    %405 = vadd.xlane.f32.xlu0 %v404
    %v406 = vpop.xlane.xlu0 %405
    %v407 = vadd.f32 %v116, %v117
    %408 = vadd.xlane.f32.xlu0 %v407
    %v409 = vpop.xlane.xlu0 %408
    %v410 = vadd.f32 %v118, %v119
    %411 = vadd.xlane.f32.xlu0 %v410
    %v412 = vpop.xlane.xlu0 %411
    %v413 = vadd.f32 %v120, %v121
    %414 = vadd.xlane.f32.xlu0 %v413
    %v415 = vpop.xlane.xlu0 %414
    %v416 = vadd.f32 %v122, %v123
    %417 = vadd.xlane.f32.xlu0 %v416
    %v418 = vpop.xlane.xlu0 %417
    %v419 = vadd.f32 %v124, %v125
    %420 = vadd.xlane.f32.xlu0 %v419
    %v421 = vpop.xlane.xlu0 %420
    %v422 = vadd.f32 %v126, %v127
    %423 = vadd.xlane.f32.xlu0 %v422
    %v424 = vpop.xlane.xlu0 %423
    %v425 = vadd.f32 %v128, %v129
    %426 = vadd.xlane.f32.xlu0 %v425
    %v427 = vpop.xlane.xlu0 %426
    %v428 = vadd.f32 %v130, %v131
    %429 = vadd.xlane.f32.xlu0 %v428
    %v430 = vpop.xlane.xlu0 %429
    %v431 = vadd.f32 %v132, %v133
    %432 = vadd.xlane.f32.xlu0 %v431
    %v433 = vpop.xlane.xlu0 %432
    %v434 = vadd.f32 %v134, %v135
    %435 = vadd.xlane.f32.xlu0 %v434
    %v436 = vpop.xlane.xlu0 %435
    %v437 = vadd.f32 %v136, %v137
    %438 = vadd.xlane.f32.xlu0 %v437
    %v439 = vpop.xlane.xlu0 %438
    %v440 = vadd.f32 %v138, %v139
    %441 = vadd.xlane.f32.xlu0 %v440
    %v442 = vpop.xlane.xlu0 %441
    %v443 = vadd.f32 %v140, %v141
    %444 = vadd.xlane.f32.xlu0 %v443
    %v445 = vpop.xlane.xlu0 %444
    %v446 = vadd.f32 %v142, %v143
    %447 = vadd.xlane.f32.xlu0 %v446
    %v448 = vpop.xlane.xlu0 %447
    %v449 = vadd.f32 %v144, %v145
    %450 = vadd.xlane.f32.xlu0 %v449
    %v451 = vpop.xlane.xlu0 %450
    %v452 = vadd.f32 %v146, %v147
    %453 = vadd.xlane.f32.xlu0 %v452
    %v454 = vpop.xlane.xlu0 %453
    %v455 = vadd.f32 %v148, %v149
    %456 = vadd.xlane.f32.xlu0 %v455
    %v457 = vpop.xlane.xlu0 %456
    %v458 = vadd.f32 %v150, %v151
    %459 = vadd.xlane.f32.xlu0 %v458
    %v460 = vpop.xlane.xlu0 %459
    %v461 = vadd.f32 %v152, %v153
    %462 = vadd.xlane.f32.xlu0 %v461
    %v463 = vpop.xlane.xlu0 %462
    %v464 = vadd.f32 %v154, %v155
    %465 = vadd.xlane.f32.xlu0 %v464
    %v466 = vpop.xlane.xlu0 %465
    %v467 = vadd.f32 %v156, %v157
    %468 = vadd.xlane.f32.xlu0 %v467
    %v469 = vpop.xlane.xlu0 %468
    %v470 = vadd.f32 %v158, %v159
    %471 = vadd.xlane.f32.xlu0 %v470
    %v472 = vpop.xlane.xlu0 %471
    %v473 = vadd.f32 %v160, %v161
    %474 = vadd.xlane.f32.xlu0 %v473
    %v475 = vpop.xlane.xlu0 %474
    %v476 = vadd.f32 %v162, %v163
    %477 = vadd.xlane.f32.xlu0 %v476
    %v478 = vpop.xlane.xlu0 %477
    %v479 = vadd.f32 %v164, %v165
    %480 = vadd.xlane.f32.xlu0 %v479
    %v481 = vpop.xlane.xlu0 %480
    %v482 = vadd.f32 %v166, %v167
    %483 = vadd.xlane.f32.xlu0 %v482
    %v484 = vpop.xlane.xlu0 %483
    %v485 = vadd.f32 %v168, %v169
    %486 = vadd.xlane.f32.xlu0 %v485
    %v487 = vpop.xlane.xlu0 %486
    %v488 = vadd.f32 %v170, %v171
    %489 = vadd.xlane.f32.xlu0 %v488
    %v490 = vpop.xlane.xlu0 %489
    %v491 = vadd.f32 %v172, %v173
    %492 = vadd.xlane.f32.xlu0 %v491
    %v493 = vpop.xlane.xlu0 %492
    %v494 = vadd.f32 %v174, %v175
    %495 = vadd.xlane.f32.xlu0 %v494
    %v496 = vpop.xlane.xlu0 %495
    %v497 = vadd.f32 %v176, %v177
    %498 = vadd.xlane.f32.xlu0 %v497
    %v499 = vpop.xlane.xlu0 %498
    %v500 = vadd.f32 %v178, %v179
    %501 = vadd.xlane.f32.xlu0 %v500
    %v502 = vpop.xlane.xlu0 %501
    %v503 = vadd.f32 %v180, %v181
    %504 = vadd.xlane.f32.xlu0 %v503
    %v505 = vpop.xlane.xlu0 %504
    %v506 = vadd.f32 %v182, %v183
    %507 = vadd.xlane.f32.xlu0 %v506
    %v508 = vpop.xlane.xlu0 %507
    %v509 = vadd.f32 %v184, %v185
    %510 = vadd.xlane.f32.xlu0 %v509
    %v511 = vpop.xlane.xlu0 %510
    %v512 = vadd.f32 %v186, %v187
    %513 = vadd.xlane.f32.xlu0 %v512
    %v514 = vpop.xlane.xlu0 %513
    %v515 = vadd.f32 %v188, %v189
    %516 = vadd.xlane.f32.xlu0 %v515
    %v517 = vpop.xlane.xlu0 %516
    %v518 = vadd.f32 %v190, %v191
    %519 = vadd.xlane.f32.xlu0 %v518
    %v520 = vpop.xlane.xlu0 %519
    %v521 = vadd.f32 %v192, %v193
    %522 = vadd.xlane.f32.xlu0 %v521
    %v523 = vpop.xlane.xlu0 %522
    %v524 = vadd.f32 %v194, %v195
    %525 = vadd.xlane.f32.xlu0 %v524
    %v526 = vpop.xlane.xlu0 %525
    %v527 = vadd.f32 %v196, %v197
    %528 = vadd.xlane.f32.xlu0 %v527
    %v529 = vpop.xlane.xlu0 %528
    %v530 = vadd.f32 %v198, %v199
    %531 = vadd.xlane.f32.xlu0 %v530
    %v532 = vpop.xlane.xlu0 %531
    %v533 = vadd.f32 %v200, %v201
    %534 = vadd.xlane.f32.xlu0 %v533
    %v535 = vpop.xlane.xlu0 %534
    %v536 = vadd.f32 %v202, %v203
    %537 = vadd.xlane.f32.xlu0 %v536
    %v538 = vpop.xlane.xlu0 %537
    %v539 = vadd.f32 %v204, %v205
    %540 = vadd.xlane.f32.xlu0 %v539
    %v541 = vpop.xlane.xlu0 %540
    %v542 = vadd.f32 %v206, %v207
    %543 = vadd.xlane.f32.xlu0 %v542
    %v544 = vpop.xlane.xlu0 %543
    %v545 = vadd.f32 %v208, %v209
    %546 = vadd.xlane.f32.xlu0 %v545
    %v547 = vpop.xlane.xlu0 %546
    %v548 = vadd.f32 %v210, %v211
    %549 = vadd.xlane.f32.xlu0 %v548
    %v550 = vpop.xlane.xlu0 %549
    %v551 = vadd.f32 %v212, %v213
    %552 = vadd.xlane.f32.xlu0 %v551
    %v553 = vpop.xlane.xlu0 %552
    %v554 = vadd.f32 %v214, %v215
    %555 = vadd.xlane.f32.xlu0 %v554
    %v556 = vpop.xlane.xlu0 %555
    %v557 = vadd.f32 %v216, %v217
    %558 = vadd.xlane.f32.xlu0 %v557
    %v559 = vpop.xlane.xlu0 %558
    %v560 = vadd.f32 %v218, %v219
    %561 = vadd.xlane.f32.xlu0 %v560
    %v562 = vpop.xlane.xlu0 %561
    %v563 = vadd.f32 %v220, %v221
    %564 = vadd.xlane.f32.xlu0 %v563
    %v565 = vpop.xlane.xlu0 %564
    %v566 = vadd.f32 %v222, %v223
    %567 = vadd.xlane.f32.xlu0 %v566
    %v568 = vpop.xlane.xlu0 %567
    %v569 = vadd.f32 %v224, %v225
    %570 = vadd.xlane.f32.xlu0 %v569
    %v571 = vpop.xlane.xlu0 %570
    %v572 = vadd.f32 %v226, %v227
    %573 = vadd.xlane.f32.xlu0 %v572
    %v574 = vpop.xlane.xlu0 %573
    %v575 = vadd.f32 %v228, %v229
    %576 = vadd.xlane.f32.xlu0 %v575
    %v577 = vpop.xlane.xlu0 %576
    %v578 = vadd.f32 %v230, %v231
    %579 = vadd.xlane.f32.xlu0 %v578
    %v580 = vpop.xlane.xlu0 %579
    %v581 = vadd.f32 %v232, %v233
    %582 = vadd.xlane.f32.xlu0 %v581
    %v583 = vpop.xlane.xlu0 %582
    %v584 = vadd.f32 %v234, %v235
    %585 = vadd.xlane.f32.xlu0 %v584
    %v586 = vpop.xlane.xlu0 %585
    %v587 = vadd.f32 %v236, %v237
    %588 = vadd.xlane.f32.xlu0 %v587
    %v589 = vpop.xlane.xlu0 %588
    %v590 = vadd.f32 %v238, %v239
    %591 = vadd.xlane.f32.xlu0 %v590
    %v592 = vpop.xlane.xlu0 %591
    %v593 = vadd.f32 %v240, %v241
    %594 = vadd.xlane.f32.xlu0 %v593
    %v595 = vpop.xlane.xlu0 %594
    %v596 = vadd.f32 %v242, %v243
    %597 = vadd.xlane.f32.xlu0 %v596
    %v598 = vpop.xlane.xlu0 %597
    %v599 = vadd.f32 %v244, %v245
    %600 = vadd.xlane.f32.xlu0 %v599
    %v601 = vpop.xlane.xlu0 %600
    %v602 = vadd.f32 %v246, %v247
    %603 = vadd.xlane.f32.xlu0 %v602
    %v604 = vpop.xlane.xlu0 %603
    %v605 = vadd.f32 %v248, %v249
    %606 = vadd.xlane.f32.xlu0 %v605
    %v607 = vpop.xlane.xlu0 %606
    %v608 = vadd.f32 %v250, %v251
    %609 = vadd.xlane.f32.xlu0 %v608
    %v610 = vpop.xlane.xlu0 %609
    %v611 = vadd.f32 %v252, %v253
    %612 = vadd.xlane.f32.xlu0 %v611
    %v613 = vpop.xlane.xlu0 %612
    %v614 = vadd.f32 %v254, %v255
    %615 = vadd.xlane.f32.xlu0 %v614
    %v616 = vpop.xlane.xlu0 %615
    %v617 = vadd.f32 %v256, %v257
    %618 = vadd.xlane.f32.xlu0 %v617
    %v619 = vpop.xlane.xlu0 %618
    %v620 = vadd.f32 %v258, %v259
    %621 = vadd.xlane.f32.xlu0 %v620
    %v622 = vpop.xlane.xlu0 %621
    %v623 = vadd.f32 %v260, %v261
    %624 = vadd.xlane.f32.xlu0 %v623
    %v625 = vpop.xlane.xlu0 %624
    %v626 = vadd.f32 %v262, %v263
    %627 = vadd.xlane.f32.xlu0 %v626
    %v628 = vpop.xlane.xlu0 %627
    %v629 = vadd.f32 %v264, %v265
    %630 = vadd.xlane.f32.xlu0 %v629
    %v631 = vpop.xlane.xlu0 %630
    %v632 = vadd.f32 %v266, %v267
    %633 = vadd.xlane.f32.xlu0 %v632
    %v634 = vpop.xlane.xlu0 %633
    %v635 = vadd.f32 %v268, %v269
    %636 = vadd.xlane.f32.xlu0 %v635
    %v637 = vpop.xlane.xlu0 %636
    %v638 = vadd.f32 %v270, %v271
    %639 = vadd.xlane.f32.xlu0 %v638
    %v640 = vpop.xlane.xlu0 %639
    %v641 = vadd.f32 %v272, %v273
    %642 = vadd.xlane.f32.xlu0 %v641
    %v643 = vpop.xlane.xlu0 %642
    %v644 = vadd.f32 %v274, %v275
    %645 = vadd.xlane.f32.xlu0 %v644
    %v646 = vpop.xlane.xlu0 %645
    %v647 = vadd.f32 %v276, %v277
    %648 = vadd.xlane.f32.xlu0 %v647
    %v649 = vpop.xlane.xlu0 %648
    %v650 = vadd.f32 %v278, %v279
    %651 = vadd.xlane.f32.xlu0 %v650
    %v652 = vpop.xlane.xlu0 %651
    %v653 = vadd.f32 %v280, %v281
    %654 = vadd.xlane.f32.xlu0 %v653
    %v655 = vpop.xlane.xlu0 %654
    %v656 = vadd.f32 %v282, %v283
    %657 = vadd.xlane.f32.xlu0 %v656
    %v658 = vpop.xlane.xlu0 %657
    %v659 = vadd.f32 %v284, %v285
    %660 = vadd.xlane.f32.xlu0 %v659
    %v661 = vpop.xlane.xlu0 %660
    %v662 = vadd.f32 %v286, %v287
    %663 = vadd.xlane.f32.xlu0 %v662
    %v664 = vpop.xlane.xlu0 %663
    %v665 = vadd.f32 %v288, %v289
    %666 = vadd.xlane.f32.xlu0 %v665
    %v667 = vpop.xlane.xlu0 %666
    %v668 = vadd.f32 %v290, %v291
    %669 = vadd.xlane.f32.xlu0 %v668
    %v670 = vpop.xlane.xlu0 %669
    %v671 = vadd.f32 %v292, %v293
    %672 = vadd.xlane.f32.xlu0 %v671
    %v673 = vpop.xlane.xlu0 %672
    %v674 = vadd.f32 %v294, %v295
    %675 = vadd.xlane.f32.xlu0 %v674
    %v676 = vpop.xlane.xlu0 %675
    %v677 = vadd.f32 %v296, %v297
    %678 = vadd.xlane.f32.xlu0 %v677
    %v679 = vpop.xlane.xlu0 %678
    %v680 = vadd.f32 %v298, %v299
    %681 = vadd.xlane.f32.xlu0 %v680
    %v682 = vpop.xlane.xlu0 %681
    %v683 = vadd.f32 %v300, %v301
    %684 = vadd.xlane.f32.xlu0 %v683
    %v685 = vpop.xlane.xlu0 %684
    %v686 = vadd.f32 %v302, %v303
    %687 = vadd.xlane.f32.xlu0 %v686
    %v688 = vpop.xlane.xlu0 %687
    %v817 = vlaneseq
    %v818 = vand.u32 %v817, 127
    %v819 = vlaneseq
    %v820 = vshrl.u32 %v819, 7
    %v821 = vsub.s32 %v818, %v820
    %v822 = vrot.slane %v307, %v821
    %v823 = vadd.s32 %v818, 4294967288
    %v824 = vlaneseq
    %v825 = vshrl.u32 %v824, 7
    %v826 = vsub.s32 %v823, %v825
    %v827 = vrot.slane %v310, %v826
    %vm828 = vcmask 130112
    %v829 = vsel %vm828, %v827, %v822
    %v830 = vadd.s32 %v818, 4294967280
    %v831 = vlaneseq
    %v832 = vshrl.u32 %v831, 7
    %v833 = vsub.s32 %v830, %v832
    %v834 = vrot.slane %v313, %v833
    %vm835 = vcmask 195712
    %v836 = vsel %vm835, %v834, %v829
    %v837 = vadd.s32 %v818, 4294967272
    %v838 = vlaneseq
    %v839 = vshrl.u32 %v838, 7
    %v840 = vsub.s32 %v837, %v839
    %v841 = vrot.slane %v316, %v840
    %vm842 = vcmask 261312
    %v843 = vsel %vm842, %v841, %v836
    %v844 = vadd.s32 %v818, 4294967264
    %v845 = vlaneseq
    %v846 = vshrl.u32 %v845, 7
    %v847 = vsub.s32 %v844, %v846
    %v848 = vrot.slane %v319, %v847
    %vm849 = vcmask 326912
    %v850 = vsel %vm849, %v848, %v843
    %v851 = vadd.s32 %v818, 4294967256
    %v852 = vlaneseq
    %v853 = vshrl.u32 %v852, 7
    %v854 = vsub.s32 %v851, %v853
    %v855 = vrot.slane %v322, %v854
    %vm856 = vcmask 392512
    %v857 = vsel %vm856, %v855, %v850
    %v858 = vadd.s32 %v818, 4294967248
    %v859 = vlaneseq
    %v860 = vshrl.u32 %v859, 7
    %v861 = vsub.s32 %v858, %v860
    %v862 = vrot.slane %v325, %v861
    %vm863 = vcmask 458112
    %v864 = vsel %vm863, %v862, %v857
    %v865 = vadd.s32 %v818, 4294967240
    %v866 = vlaneseq
    %v867 = vshrl.u32 %v866, 7
    %v868 = vsub.s32 %v865, %v867
    %v869 = vrot.slane %v328, %v868
    %vm870 = vcmask 523712
    %v871 = vsel %vm870, %v869, %v864
    %v872 = vadd.s32 %v818, 4294967232
    %v873 = vlaneseq
    %v874 = vshrl.u32 %v873, 7
    %v875 = vsub.s32 %v872, %v874
    %v876 = vrot.slane %v331, %v875
    %vm877 = vcmask 589312
    %v878 = vsel %vm877, %v876, %v871
    %v879 = vadd.s32 %v818, 4294967224
    %v880 = vlaneseq
    %v881 = vshrl.u32 %v880, 7
    %v882 = vsub.s32 %v879, %v881
    %v883 = vrot.slane %v334, %v882
    %vm884 = vcmask 654912
    %v885 = vsel %vm884, %v883, %v878
    %v886 = vadd.s32 %v818, 4294967216
    %v887 = vlaneseq
    %v888 = vshrl.u32 %v887, 7
    %v889 = vsub.s32 %v886, %v888
    %v890 = vrot.slane %v337, %v889
    %vm891 = vcmask 720512
    %v892 = vsel %vm891, %v890, %v885
    %v893 = vadd.s32 %v818, 4294967208
    %v894 = vlaneseq
    %v895 = vshrl.u32 %v894, 7
    %v896 = vsub.s32 %v893, %v895
    %v897 = vrot.slane %v340, %v896
    %vm898 = vcmask 786112
    %v899 = vsel %vm898, %v897, %v892
    %v900 = vadd.s32 %v818, 4294967200
    %v901 = vlaneseq
    %v902 = vshrl.u32 %v901, 7
    %v903 = vsub.s32 %v900, %v902
    %v904 = vrot.slane %v343, %v903
    %vm905 = vcmask 851712
    %v906 = vsel %vm905, %v904, %v899
    %v907 = vadd.s32 %v818, 4294967192
    %v908 = vlaneseq
    %v909 = vshrl.u32 %v908, 7
    %v910 = vsub.s32 %v907, %v909
    %v911 = vrot.slane %v346, %v910
    %vm912 = vcmask 917312
    %v913 = vsel %vm912, %v911, %v906
    %v914 = vadd.s32 %v818, 4294967184
    %v915 = vlaneseq
    %v916 = vshrl.u32 %v915, 7
    %v917 = vsub.s32 %v914, %v916
    %v918 = vrot.slane %v349, %v917
    %vm919 = vcmask 982912
    %v920 = vsel %vm919, %v918, %v913
    %v921 = vadd.s32 %v818, 4294967176
    %v922 = vlaneseq
    %v923 = vshrl.u32 %v922, 7
    %v924 = vsub.s32 %v921, %v923
    %v925 = vrot.slane %v352, %v924
    %vm926 = vcmask 1048512
    %v927 = vsel %vm926, %v925, %v920
    %v928 = vlaneseq
    %v929 = vshrl.u32 %v928, 7
    %v930 = vsub.s32 %v818, %v929
    %v931 = vrot.slane %v355, %v930
    %v932 = vlaneseq
    %v933 = vshrl.u32 %v932, 7
    %v934 = vsub.s32 %v823, %v933
    %v935 = vrot.slane %v358, %v934
    %v936 = vsel %vm828, %v935, %v931
    %v937 = vlaneseq
    %v938 = vshrl.u32 %v937, 7
    %v939 = vsub.s32 %v830, %v938
    %v940 = vrot.slane %v361, %v939
    %v941 = vsel %vm835, %v940, %v936
    %v942 = vlaneseq
    %v943 = vshrl.u32 %v942, 7
    %v944 = vsub.s32 %v837, %v943
    %v945 = vrot.slane %v364, %v944
    %v946 = vsel %vm842, %v945, %v941
    %v947 = vlaneseq
    %v948 = vshrl.u32 %v947, 7
    %v949 = vsub.s32 %v844, %v948
    %v950 = vrot.slane %v367, %v949
    %v951 = vsel %vm849, %v950, %v946
    %v952 = vlaneseq
    %v953 = vshrl.u32 %v952, 7
    %v954 = vsub.s32 %v851, %v953
    %v955 = vrot.slane %v370, %v954
    %v956 = vsel %vm856, %v955, %v951
    %v957 = vlaneseq
    %v958 = vshrl.u32 %v957, 7
    %v959 = vsub.s32 %v858, %v958
    %v960 = vrot.slane %v373, %v959
    %v961 = vsel %vm863, %v960, %v956
    %v962 = vlaneseq
    %v963 = vshrl.u32 %v962, 7
    %v964 = vsub.s32 %v865, %v963
    %v965 = vrot.slane %v376, %v964
    %v966 = vsel %vm870, %v965, %v961
    %v967 = vlaneseq
    %v968 = vshrl.u32 %v967, 7
    %v969 = vsub.s32 %v872, %v968
    %v970 = vrot.slane %v379, %v969
    %v971 = vsel %vm877, %v970, %v966
    %v972 = vlaneseq
    %v973 = vshrl.u32 %v972, 7
    %v974 = vsub.s32 %v879, %v973
    %v975 = vrot.slane %v382, %v974
    %v976 = vsel %vm884, %v975, %v971
    %v977 = vlaneseq
    %v978 = vshrl.u32 %v977, 7
    %v979 = vsub.s32 %v886, %v978
    %v980 = vrot.slane %v385, %v979
    %v981 = vsel %vm891, %v980, %v976
    %v982 = vlaneseq
    %v983 = vshrl.u32 %v982, 7
    %v984 = vsub.s32 %v893, %v983
    %v985 = vrot.slane %v388, %v984
    %v986 = vsel %vm898, %v985, %v981
    %v987 = vlaneseq
    %v988 = vshrl.u32 %v987, 7
    %v989 = vsub.s32 %v900, %v988
    %v990 = vrot.slane %v391, %v989
    %v991 = vsel %vm905, %v990, %v986
    %v992 = vlaneseq
    %v993 = vshrl.u32 %v992, 7
    %v994 = vsub.s32 %v907, %v993
    %v995 = vrot.slane %v394, %v994
    %v996 = vsel %vm912, %v995, %v991
    %v997 = vlaneseq
    %v998 = vshrl.u32 %v997, 7
    %v999 = vsub.s32 %v914, %v998
    %v1000 = vrot.slane %v397, %v999
    %v1001 = vsel %vm919, %v1000, %v996
    %v1002 = vlaneseq
    %v1003 = vshrl.u32 %v1002, 7
    %v1004 = vsub.s32 %v921, %v1003
    %v1005 = vrot.slane %v400, %v1004
    %v1006 = vsel %vm926, %v1005, %v1001
    %v1007 = vlaneseq
    %v1008 = vshrl.u32 %v1007, 7
    %v1009 = vsub.s32 %v818, %v1008
    %v1010 = vrot.slane %v403, %v1009
    %v1011 = vlaneseq
    %v1012 = vshrl.u32 %v1011, 7
    %v1013 = vsub.s32 %v823, %v1012
    %v1014 = vrot.slane %v406, %v1013
    %v1015 = vsel %vm828, %v1014, %v1010
    %v1016 = vlaneseq
    %v1017 = vshrl.u32 %v1016, 7
    %v1018 = vsub.s32 %v830, %v1017
    %v1019 = vrot.slane %v409, %v1018
    %v1020 = vsel %vm835, %v1019, %v1015
    %v1021 = vlaneseq
    %v1022 = vshrl.u32 %v1021, 7
    %v1023 = vsub.s32 %v837, %v1022
    %v1024 = vrot.slane %v412, %v1023
    %v1025 = vsel %vm842, %v1024, %v1020
    %v1026 = vlaneseq
    %v1027 = vshrl.u32 %v1026, 7
    %v1028 = vsub.s32 %v844, %v1027
    %v1029 = vrot.slane %v415, %v1028
    %v1030 = vsel %vm849, %v1029, %v1025
    %v1031 = vlaneseq
    %v1032 = vshrl.u32 %v1031, 7
    %v1033 = vsub.s32 %v851, %v1032
    %v1034 = vrot.slane %v418, %v1033
    %v1035 = vsel %vm856, %v1034, %v1030
    %v1036 = vlaneseq
    %v1037 = vshrl.u32 %v1036, 7
    %v1038 = vsub.s32 %v858, %v1037
    %v1039 = vrot.slane %v421, %v1038
    %v1040 = vsel %vm863, %v1039, %v1035
    %v1041 = vlaneseq
    %v1042 = vshrl.u32 %v1041, 7
    %v1043 = vsub.s32 %v865, %v1042
    %v1044 = vrot.slane %v424, %v1043
    %v1045 = vsel %vm870, %v1044, %v1040
    %v1046 = vlaneseq
    %v1047 = vshrl.u32 %v1046, 7
    %v1048 = vsub.s32 %v872, %v1047
    %v1049 = vrot.slane %v427, %v1048
    %v1050 = vsel %vm877, %v1049, %v1045
    %v1051 = vlaneseq
    %v1052 = vshrl.u32 %v1051, 7
    %v1053 = vsub.s32 %v879, %v1052
    %v1054 = vrot.slane %v430, %v1053
    %v1055 = vsel %vm884, %v1054, %v1050
    %v1056 = vlaneseq
    %v1057 = vshrl.u32 %v1056, 7
    %v1058 = vsub.s32 %v886, %v1057
    %v1059 = vrot.slane %v433, %v1058
    %v1060 = vsel %vm891, %v1059, %v1055
    %v1061 = vlaneseq
    %v1062 = vshrl.u32 %v1061, 7
    %v1063 = vsub.s32 %v893, %v1062
    %v1064 = vrot.slane %v436, %v1063
    %v1065 = vsel %vm898, %v1064, %v1060
    %v1066 = vlaneseq
    %v1067 = vshrl.u32 %v1066, 7
    %v1068 = vsub.s32 %v900, %v1067
    %v1069 = vrot.slane %v439, %v1068
    %v1070 = vsel %vm905, %v1069, %v1065
    %v1071 = vlaneseq
    %v1072 = vshrl.u32 %v1071, 7
    %v1073 = vsub.s32 %v907, %v1072
    %v1074 = vrot.slane %v442, %v1073
    %v1075 = vsel %vm912, %v1074, %v1070
    %v1076 = vlaneseq
    %v1077 = vshrl.u32 %v1076, 7
    %v1078 = vsub.s32 %v914, %v1077
    %v1079 = vrot.slane %v445, %v1078
    %v1080 = vsel %vm919, %v1079, %v1075
    %v1081 = vlaneseq
    %v1082 = vshrl.u32 %v1081, 7
    %v1083 = vsub.s32 %v921, %v1082
    %v1084 = vrot.slane %v448, %v1083
    %v1085 = vsel %vm926, %v1084, %v1080
    %v1086 = vlaneseq
    %v1087 = vshrl.u32 %v1086, 7
    %v1088 = vsub.s32 %v818, %v1087
    %v1089 = vrot.slane %v451, %v1088
    %v1090 = vlaneseq
    %v1091 = vshrl.u32 %v1090, 7
    %v1092 = vsub.s32 %v823, %v1091
    %v1093 = vrot.slane %v454, %v1092
    %v1094 = vsel %vm828, %v1093, %v1089
    %v1095 = vlaneseq
    %v1096 = vshrl.u32 %v1095, 7
    %v1097 = vsub.s32 %v830, %v1096
    %v1098 = vrot.slane %v457, %v1097
    %v1099 = vsel %vm835, %v1098, %v1094
    %v1100 = vlaneseq
    %v1101 = vshrl.u32 %v1100, 7
    %v1102 = vsub.s32 %v837, %v1101
    %v1103 = vrot.slane %v460, %v1102
    %v1104 = vsel %vm842, %v1103, %v1099
    %v1105 = vlaneseq
    %v1106 = vshrl.u32 %v1105, 7
    %v1107 = vsub.s32 %v844, %v1106
    %v1108 = vrot.slane %v463, %v1107
    %v1109 = vsel %vm849, %v1108, %v1104
    %v1110 = vlaneseq
    %v1111 = vshrl.u32 %v1110, 7
    %v1112 = vsub.s32 %v851, %v1111
    %v1113 = vrot.slane %v466, %v1112
    %v1114 = vsel %vm856, %v1113, %v1109
    %v1115 = vlaneseq
    %v1116 = vshrl.u32 %v1115, 7
    %v1117 = vsub.s32 %v858, %v1116
    %v1118 = vrot.slane %v469, %v1117
    %v1119 = vsel %vm863, %v1118, %v1114
    %v1120 = vlaneseq
    %v1121 = vshrl.u32 %v1120, 7
    %v1122 = vsub.s32 %v865, %v1121
    %v1123 = vrot.slane %v472, %v1122
    %v1124 = vsel %vm870, %v1123, %v1119
    %v1125 = vlaneseq
    %v1126 = vshrl.u32 %v1125, 7
    %v1127 = vsub.s32 %v872, %v1126
    %v1128 = vrot.slane %v475, %v1127
    %v1129 = vsel %vm877, %v1128, %v1124
    %v1130 = vlaneseq
    %v1131 = vshrl.u32 %v1130, 7
    %v1132 = vsub.s32 %v879, %v1131
    %v1133 = vrot.slane %v478, %v1132
    %v1134 = vsel %vm884, %v1133, %v1129
    %v1135 = vlaneseq
    %v1136 = vshrl.u32 %v1135, 7
    %v1137 = vsub.s32 %v886, %v1136
    %v1138 = vrot.slane %v481, %v1137
    %v1139 = vsel %vm891, %v1138, %v1134
    %v1140 = vlaneseq
    %v1141 = vshrl.u32 %v1140, 7
    %v1142 = vsub.s32 %v893, %v1141
    %v1143 = vrot.slane %v484, %v1142
    %v1144 = vsel %vm898, %v1143, %v1139
    %v1145 = vlaneseq
    %v1146 = vshrl.u32 %v1145, 7
    %v1147 = vsub.s32 %v900, %v1146
    %v1148 = vrot.slane %v487, %v1147
    %v1149 = vsel %vm905, %v1148, %v1144
    %v1150 = vlaneseq
    %v1151 = vshrl.u32 %v1150, 7
    %v1152 = vsub.s32 %v907, %v1151
    %v1153 = vrot.slane %v490, %v1152
    %v1154 = vsel %vm912, %v1153, %v1149
    %v1155 = vlaneseq
    %v1156 = vshrl.u32 %v1155, 7
    %v1157 = vsub.s32 %v914, %v1156
    %v1158 = vrot.slane %v493, %v1157
    %v1159 = vsel %vm919, %v1158, %v1154
    %v1160 = vlaneseq
    %v1161 = vshrl.u32 %v1160, 7
    %v1162 = vsub.s32 %v921, %v1161
    %v1163 = vrot.slane %v496, %v1162
    %v1164 = vsel %vm926, %v1163, %v1159
    %v1165 = vlaneseq
    %v1166 = vshrl.u32 %v1165, 7
    %v1167 = vsub.s32 %v818, %v1166
    %v1168 = vrot.slane %v499, %v1167
    %v1169 = vlaneseq
    %v1170 = vshrl.u32 %v1169, 7
    %v1171 = vsub.s32 %v823, %v1170
    %v1172 = vrot.slane %v502, %v1171
    %v1173 = vsel %vm828, %v1172, %v1168
    %v1174 = vlaneseq
    %v1175 = vshrl.u32 %v1174, 7
    %v1176 = vsub.s32 %v830, %v1175
    %v1177 = vrot.slane %v505, %v1176
    %v1178 = vsel %vm835, %v1177, %v1173
    %v1179 = vlaneseq
    %v1180 = vshrl.u32 %v1179, 7
    %v1181 = vsub.s32 %v837, %v1180
    %v1182 = vrot.slane %v508, %v1181
    %v1183 = vsel %vm842, %v1182, %v1178
    %v1184 = vlaneseq
    %v1185 = vshrl.u32 %v1184, 7
    %v1186 = vsub.s32 %v844, %v1185
    %v1187 = vrot.slane %v511, %v1186
    %v1188 = vsel %vm849, %v1187, %v1183
    %v1189 = vlaneseq
    %v1190 = vshrl.u32 %v1189, 7
    %v1191 = vsub.s32 %v851, %v1190
    %v1192 = vrot.slane %v514, %v1191
    %v1193 = vsel %vm856, %v1192, %v1188
    %v1194 = vlaneseq
    %v1195 = vshrl.u32 %v1194, 7
    %v1196 = vsub.s32 %v858, %v1195
    %v1197 = vrot.slane %v517, %v1196
    %v1198 = vsel %vm863, %v1197, %v1193
    %v1199 = vlaneseq
    %v1200 = vshrl.u32 %v1199, 7
    %v1201 = vsub.s32 %v865, %v1200
    %v1202 = vrot.slane %v520, %v1201
    %v1203 = vsel %vm870, %v1202, %v1198
    %v1204 = vlaneseq
    %v1205 = vshrl.u32 %v1204, 7
    %v1206 = vsub.s32 %v872, %v1205
    %v1207 = vrot.slane %v523, %v1206
    %v1208 = vsel %vm877, %v1207, %v1203
    %v1209 = vlaneseq
    %v1210 = vshrl.u32 %v1209, 7
    %v1211 = vsub.s32 %v879, %v1210
    %v1212 = vrot.slane %v526, %v1211
    %v1213 = vsel %vm884, %v1212, %v1208
    %v1214 = vlaneseq
    %v1215 = vshrl.u32 %v1214, 7
    %v1216 = vsub.s32 %v886, %v1215
    %v1217 = vrot.slane %v529, %v1216
    %v1218 = vsel %vm891, %v1217, %v1213
    %v1219 = vlaneseq
    %v1220 = vshrl.u32 %v1219, 7
    %v1221 = vsub.s32 %v893, %v1220
    %v1222 = vrot.slane %v532, %v1221
    %v1223 = vsel %vm898, %v1222, %v1218
    %v1224 = vlaneseq
    %v1225 = vshrl.u32 %v1224, 7
    %v1226 = vsub.s32 %v900, %v1225
    %v1227 = vrot.slane %v535, %v1226
    %v1228 = vsel %vm905, %v1227, %v1223
    %v1229 = vlaneseq
    %v1230 = vshrl.u32 %v1229, 7
    %v1231 = vsub.s32 %v907, %v1230
    %v1232 = vrot.slane %v538, %v1231
    %v1233 = vsel %vm912, %v1232, %v1228
    %v1234 = vlaneseq
    %v1235 = vshrl.u32 %v1234, 7
    %v1236 = vsub.s32 %v914, %v1235
    %v1237 = vrot.slane %v541, %v1236
    %v1238 = vsel %vm919, %v1237, %v1233
    %v1239 = vlaneseq
    %v1240 = vshrl.u32 %v1239, 7
    %v1241 = vsub.s32 %v921, %v1240
    %v1242 = vrot.slane %v544, %v1241
    %v1243 = vsel %vm926, %v1242, %v1238
    %v1244 = vlaneseq
    %v1245 = vshrl.u32 %v1244, 7
    %v1246 = vsub.s32 %v818, %v1245
    %v1247 = vrot.slane %v547, %v1246
    %v1248 = vlaneseq
    %v1249 = vshrl.u32 %v1248, 7
    %v1250 = vsub.s32 %v823, %v1249
    %v1251 = vrot.slane %v550, %v1250
    %v1252 = vsel %vm828, %v1251, %v1247
    %v1253 = vlaneseq
    %v1254 = vshrl.u32 %v1253, 7
    %v1255 = vsub.s32 %v830, %v1254
    %v1256 = vrot.slane %v553, %v1255
    %v1257 = vsel %vm835, %v1256, %v1252
    %v1258 = vlaneseq
    %v1259 = vshrl.u32 %v1258, 7
    %v1260 = vsub.s32 %v837, %v1259
    %v1261 = vrot.slane %v556, %v1260
    %v1262 = vsel %vm842, %v1261, %v1257
    %v1263 = vlaneseq
    %v1264 = vshrl.u32 %v1263, 7
    %v1265 = vsub.s32 %v844, %v1264
    %v1266 = vrot.slane %v559, %v1265
    %v1267 = vsel %vm849, %v1266, %v1262
    %v1268 = vlaneseq
    %v1269 = vshrl.u32 %v1268, 7
    %v1270 = vsub.s32 %v851, %v1269
    %v1271 = vrot.slane %v562, %v1270
    %v1272 = vsel %vm856, %v1271, %v1267
    %v1273 = vlaneseq
    %v1274 = vshrl.u32 %v1273, 7
    %v1275 = vsub.s32 %v858, %v1274
    %v1276 = vrot.slane %v565, %v1275
    %v1277 = vsel %vm863, %v1276, %v1272
    %v1278 = vlaneseq
    %v1279 = vshrl.u32 %v1278, 7
    %v1280 = vsub.s32 %v865, %v1279
    %v1281 = vrot.slane %v568, %v1280
    %v1282 = vsel %vm870, %v1281, %v1277
    %v1283 = vlaneseq
    %v1284 = vshrl.u32 %v1283, 7
    %v1285 = vsub.s32 %v872, %v1284
    %v1286 = vrot.slane %v571, %v1285
    %v1287 = vsel %vm877, %v1286, %v1282
    %v1288 = vlaneseq
    %v1289 = vshrl.u32 %v1288, 7
    %v1290 = vsub.s32 %v879, %v1289
    %v1291 = vrot.slane %v574, %v1290
    %v1292 = vsel %vm884, %v1291, %v1287
    %v1293 = vlaneseq
    %v1294 = vshrl.u32 %v1293, 7
    %v1295 = vsub.s32 %v886, %v1294
    %v1296 = vrot.slane %v577, %v1295
    %v1297 = vsel %vm891, %v1296, %v1292
    %v1298 = vlaneseq
    %v1299 = vshrl.u32 %v1298, 7
    %v1300 = vsub.s32 %v893, %v1299
    %v1301 = vrot.slane %v580, %v1300
    %v1302 = vsel %vm898, %v1301, %v1297
    %v1303 = vlaneseq
    %v1304 = vshrl.u32 %v1303, 7
    %v1305 = vsub.s32 %v900, %v1304
    %v1306 = vrot.slane %v583, %v1305
    %v1307 = vsel %vm905, %v1306, %v1302
    %v1308 = vlaneseq
    %v1309 = vshrl.u32 %v1308, 7
    %v1310 = vsub.s32 %v907, %v1309
    %v1311 = vrot.slane %v586, %v1310
    %v1312 = vsel %vm912, %v1311, %v1307
    %v1313 = vlaneseq
    %v1314 = vshrl.u32 %v1313, 7
    %v1315 = vsub.s32 %v914, %v1314
    %v1316 = vrot.slane %v589, %v1315
    %v1317 = vsel %vm919, %v1316, %v1312
    %v1318 = vlaneseq
    %v1319 = vshrl.u32 %v1318, 7
    %v1320 = vsub.s32 %v921, %v1319
    %v1321 = vrot.slane %v592, %v1320
    %v1322 = vsel %vm926, %v1321, %v1317
    %v1323 = vlaneseq
    %v1324 = vshrl.u32 %v1323, 7
    %v1325 = vsub.s32 %v818, %v1324
    %v1326 = vrot.slane %v595, %v1325
    %v1327 = vlaneseq
    %v1328 = vshrl.u32 %v1327, 7
    %v1329 = vsub.s32 %v823, %v1328
    %v1330 = vrot.slane %v598, %v1329
    %v1331 = vsel %vm828, %v1330, %v1326
    %v1332 = vlaneseq
    %v1333 = vshrl.u32 %v1332, 7
    %v1334 = vsub.s32 %v830, %v1333
    %v1335 = vrot.slane %v601, %v1334
    %v1336 = vsel %vm835, %v1335, %v1331
    %v1337 = vlaneseq
    %v1338 = vshrl.u32 %v1337, 7
    %v1339 = vsub.s32 %v837, %v1338
    %v1340 = vrot.slane %v604, %v1339
    %v1341 = vsel %vm842, %v1340, %v1336
    %v1342 = vlaneseq
    %v1343 = vshrl.u32 %v1342, 7
    %v1344 = vsub.s32 %v844, %v1343
    %v1345 = vrot.slane %v607, %v1344
    %v1346 = vsel %vm849, %v1345, %v1341
    %v1347 = vlaneseq
    %v1348 = vshrl.u32 %v1347, 7
    %v1349 = vsub.s32 %v851, %v1348
    %v1350 = vrot.slane %v610, %v1349
    %v1351 = vsel %vm856, %v1350, %v1346
    %v1352 = vlaneseq
    %v1353 = vshrl.u32 %v1352, 7
    %v1354 = vsub.s32 %v858, %v1353
    %v1355 = vrot.slane %v613, %v1354
    %v1356 = vsel %vm863, %v1355, %v1351
    %v1357 = vlaneseq
    %v1358 = vshrl.u32 %v1357, 7
    %v1359 = vsub.s32 %v865, %v1358
    %v1360 = vrot.slane %v616, %v1359
    %v1361 = vsel %vm870, %v1360, %v1356
    %v1362 = vlaneseq
    %v1363 = vshrl.u32 %v1362, 7
    %v1364 = vsub.s32 %v872, %v1363
    %v1365 = vrot.slane %v619, %v1364
    %v1366 = vsel %vm877, %v1365, %v1361
    %v1367 = vlaneseq
    %v1368 = vshrl.u32 %v1367, 7
    %v1369 = vsub.s32 %v879, %v1368
    %v1370 = vrot.slane %v622, %v1369
    %v1371 = vsel %vm884, %v1370, %v1366
    %v1372 = vlaneseq
    %v1373 = vshrl.u32 %v1372, 7
    %v1374 = vsub.s32 %v886, %v1373
    %v1375 = vrot.slane %v625, %v1374
    %v1376 = vsel %vm891, %v1375, %v1371
    %v1377 = vlaneseq
    %v1378 = vshrl.u32 %v1377, 7
    %v1379 = vsub.s32 %v893, %v1378
    %v1380 = vrot.slane %v628, %v1379
    %v1381 = vsel %vm898, %v1380, %v1376
    %v1382 = vlaneseq
    %v1383 = vshrl.u32 %v1382, 7
    %v1384 = vsub.s32 %v900, %v1383
    %v1385 = vrot.slane %v631, %v1384
    %v1386 = vsel %vm905, %v1385, %v1381
    %v1387 = vlaneseq
    %v1388 = vshrl.u32 %v1387, 7
    %v1389 = vsub.s32 %v907, %v1388
    %v1390 = vrot.slane %v634, %v1389
    %v1391 = vsel %vm912, %v1390, %v1386
    %v1392 = vlaneseq
    %v1393 = vshrl.u32 %v1392, 7
    %v1394 = vsub.s32 %v914, %v1393
    %v1395 = vrot.slane %v637, %v1394
    %v1396 = vsel %vm919, %v1395, %v1391
    %v1397 = vlaneseq
    %v1398 = vshrl.u32 %v1397, 7
    %v1399 = vsub.s32 %v921, %v1398
    %v1400 = vrot.slane %v640, %v1399
    %v1401 = vsel %vm926, %v1400, %v1396
    %v1402 = vlaneseq
    %v1403 = vshrl.u32 %v1402, 7
    %v1404 = vsub.s32 %v818, %v1403
    %v1405 = vrot.slane %v643, %v1404
    %v1406 = vlaneseq
    %v1407 = vshrl.u32 %v1406, 7
    %v1408 = vsub.s32 %v823, %v1407
    %v1409 = vrot.slane %v646, %v1408
    %v1410 = vsel %vm828, %v1409, %v1405
    %v1411 = vlaneseq
    %v1412 = vshrl.u32 %v1411, 7
    %v1413 = vsub.s32 %v830, %v1412
    %v1414 = vrot.slane %v649, %v1413
    %v1415 = vsel %vm835, %v1414, %v1410
    %v1416 = vlaneseq
    %v1417 = vshrl.u32 %v1416, 7
    %v1418 = vsub.s32 %v837, %v1417
    %v1419 = vrot.slane %v652, %v1418
    %v1420 = vsel %vm842, %v1419, %v1415
    %v1421 = vlaneseq
    %v1422 = vshrl.u32 %v1421, 7
    %v1423 = vsub.s32 %v844, %v1422
    %v1424 = vrot.slane %v655, %v1423
    %v1425 = vsel %vm849, %v1424, %v1420
    %v1426 = vlaneseq
    %v1427 = vshrl.u32 %v1426, 7
    %v1428 = vsub.s32 %v851, %v1427
    %v1429 = vrot.slane %v658, %v1428
    %v1430 = vsel %vm856, %v1429, %v1425
    %v1431 = vlaneseq
    %v1432 = vshrl.u32 %v1431, 7
    %v1433 = vsub.s32 %v858, %v1432
    %v1434 = vrot.slane %v661, %v1433
    %v1435 = vsel %vm863, %v1434, %v1430
    %v1436 = vlaneseq
    %v1437 = vshrl.u32 %v1436, 7
    %v1438 = vsub.s32 %v865, %v1437
    %v1439 = vrot.slane %v664, %v1438
    %v1440 = vsel %vm870, %v1439, %v1435
    %v1441 = vlaneseq
    %v1442 = vshrl.u32 %v1441, 7
    %v1443 = vsub.s32 %v872, %v1442
    %v1444 = vrot.slane %v667, %v1443
    %v1445 = vsel %vm877, %v1444, %v1440
    %v1446 = vlaneseq
    %v1447 = vshrl.u32 %v1446, 7
    %v1448 = vsub.s32 %v879, %v1447
    %v1449 = vrot.slane %v670, %v1448
    %v1450 = vsel %vm884, %v1449, %v1445
    %v1451 = vlaneseq
    %v1452 = vshrl.u32 %v1451, 7
    %v1453 = vsub.s32 %v886, %v1452
    %v1454 = vrot.slane %v673, %v1453
    %v1455 = vsel %vm891, %v1454, %v1450
    %v1456 = vlaneseq
    %v1457 = vshrl.u32 %v1456, 7
    %v1458 = vsub.s32 %v893, %v1457
    %v1459 = vrot.slane %v676, %v1458
    %v1460 = vsel %vm898, %v1459, %v1455
    %v1461 = vlaneseq
    %v1462 = vshrl.u32 %v1461, 7
    %v1463 = vsub.s32 %v900, %v1462
    %v1464 = vrot.slane %v679, %v1463
    %v1465 = vsel %vm905, %v1464, %v1460
    %v1466 = vlaneseq
    %v1467 = vshrl.u32 %v1466, 7
    %v1468 = vsub.s32 %v907, %v1467
    %v1469 = vrot.slane %v682, %v1468
    %v1470 = vsel %vm912, %v1469, %v1465
    %v1471 = vlaneseq
    %v1472 = vshrl.u32 %v1471, 7
    %v1473 = vsub.s32 %v914, %v1472
    %v1474 = vrot.slane %v685, %v1473
    %v1475 = vsel %vm919, %v1474, %v1470
    %v1476 = vlaneseq
    %v1477 = vshrl.u32 %v1476, 7
    %v1478 = vsub.s32 %v921, %v1477
    %v1479 = vrot.slane %v688, %v1478
    %v1480 = vsel %vm926, %v1479, %v1475
    %vm1481 = vcmask 1041409
    %v1482 = vsel %vm1481, %v1006, %v927
    %vm1483 = vcmask 1042434
    %v1484 = vsel %vm1483, %v1085, %v1482
    %vm1485 = vcmask 1043459
    %v1486 = vsel %vm1485, %v1164, %v1484
    %vm1487 = vcmask 1044484
    %v1488 = vsel %vm1487, %v1243, %v1486
    %vm1489 = vcmask 1045509
    %v1490 = vsel %vm1489, %v1322, %v1488
    %vm1491 = vcmask 1046534
    %v1492 = vsel %vm1491, %v1401, %v1490
    %vm1493 = vcmask 1047559
    %v1494 = vsel %vm1493, %v1480, %v1492
    %v1496 = vadd.f32 %v304, %v1494
    %1497 = vst [vmem:[#allocation2] sm:$0xff] %v1496
    // Predicated region
    $region26: #{tpu_custom_call.1} parent=1 // pred_check
      %p1498 = pneg %p43
    $region27: #{tpu_custom_call.1} parent=1 // pred_check_branch
      %1500 = sbr.rel (%p1498) target = $region29
    $region28: #{tpu_custom_call.1} parent=1 // pred_region
      %v1501 = vld [vmem:[#allocation2] sm:$0xff]
      %v1502 = vmul.f32 %v1501, 0.00390625
      %v1503 = vld [vmem:[#allocation6] sm:$0xff]
      %v1504 = vld [vmem:[#allocation6 + $0x8] sm:$0xff]
      %v1505 = vld [vmem:[#allocation6 + $0x10] sm:$0xff]
      %v1506 = vld [vmem:[#allocation6 + $0x18] sm:$0xff]
      %v1507 = vld [vmem:[#allocation6 + $0x20] sm:$0xff]
      %v1508 = vld [vmem:[#allocation6 + $0x28] sm:$0xff]
      %v1509 = vld [vmem:[#allocation6 + $0x30] sm:$0xff]
      %v1510 = vld [vmem:[#allocation6 + $0x38] sm:$0xff]
      %v1511 = vld [vmem:[#allocation6 + $0x40] sm:$0xff]
      %v1512 = vld [vmem:[#allocation6 + $0x48] sm:$0xff]
      %v1513 = vld [vmem:[#allocation6 + $0x50] sm:$0xff]
      %v1514 = vld [vmem:[#allocation6 + $0x58] sm:$0xff]
      %v1515 = vld [vmem:[#allocation6 + $0x60] sm:$0xff]
      %v1516 = vld [vmem:[#allocation6 + $0x68] sm:$0xff]
      %v1517 = vld [vmem:[#allocation6 + $0x70] sm:$0xff]
      %v1518 = vld [vmem:[#allocation6 + $0x78] sm:$0xff]
      %v1519 = vld [vmem:[%s2] sm:$0x1]
      %v1521 = vlaneseq
      %v1522 = vshrl.u32 %v1521, 7
      %v1523 = vsub.s32 0, %v1522
      %v1524 = vrot.slane %v1519, %v1523
      %1526 = vmatprep.subr.mxu0 0.0
      %1527 = vmatpush1.msra.mxu0 %v1503
      %1528 = vmatprep.subr.mxu0 0.0
      %1529 = vmatpush1.msra.mxu0 %v1504
      %1530 = vmatprep.subr.mxu0 0.0
      %1531 = vmatpush1.msra.mxu0 %v1505
      %1532 = vmatprep.subr.mxu0 0.0
      %1533 = vmatpush1.msra.mxu0 %v1506
      %1534 = vmatprep.subr.mxu0 0.0
      %1535 = vmatpush1.msra.mxu0 %v1507
      %1536 = vmatprep.subr.mxu0 0.0
      %1537 = vmatpush1.msra.mxu0 %v1508
      %1538 = vmatprep.subr.mxu0 0.0
      %1539 = vmatpush1.msra.mxu0 %v1509
      %1540 = vmatprep.subr.mxu0 0.0
      %1541 = vmatpush1.msra.mxu0 %v1510
      %1542 = vmatprep.subr.mxu0 0.0
      %1543 = vmatpush1.msra.mxu0 %v1511
      %1544 = vmatprep.subr.mxu0 0.0
      %1545 = vmatpush1.msra.mxu0 %v1512
      %1546 = vmatprep.subr.mxu0 0.0
      %1547 = vmatpush1.msra.mxu0 %v1513
      %1548 = vmatprep.subr.mxu0 0.0
      %1549 = vmatpush1.msra.mxu0 %v1514
      %1550 = vmatprep.subr.mxu0 0.0
      %1551 = vmatpush1.msra.mxu0 %v1515
      %1552 = vmatprep.subr.mxu0 0.0
      %1553 = vmatpush1.msra.mxu0 %v1516
      %1554 = vmatprep.subr.mxu0 0.0
      %1555 = vmatpush1.msra.mxu0 %v1517
      %1556 = vmatprep.subr.mxu0 0.0
      %1557 = vmatpush1.msra.mxu0 %v1518
      %1558 = vmatprep.subr.mxu0 0.0
      %1559 = vmatpush1.msra.mxu0 0.0
      %1560 = vmatprep.subr.mxu0 0.0
      %1561 = vmatpush1.msra.mxu0 0.0
      %1562 = vmatprep.subr.mxu0 0.0
      %1563 = vmatpush1.msra.mxu0 0.0
      %1564 = vmatprep.subr.mxu0 0.0
      %1565 = vmatpush1.msra.mxu0 0.0
      %1566 = vmatprep.subr.mxu0 0.0
      %1567 = vmatpush1.msra.mxu0 0.0
      %1568 = vmatprep.subr.mxu0 0.0
      %1569 = vmatpush1.msra.mxu0 0.0
      %1570 = vmatprep.subr.mxu0 0.0
      %1571 = vmatpush1.msra.mxu0 0.0
      %1572 = vmatprep.subr.mxu0 0.0
      %1573 = vmatpush1.msra.mxu0 0.0
      %1574 = vmatprep.subr.mxu0 0.0
      %1575 = vmatpush1.msra.mxu0 0.0
      %1576 = vmatprep.subr.mxu0 0.0
      %1577 = vmatpush1.msra.mxu0 0.0
      %1578 = vmatprep.subr.mxu0 0.0
      %1579 = vmatpush1.msra.mxu0 0.0
      %1580 = vmatprep.subr.mxu0 0.0
      %1581 = vmatpush1.msra.mxu0 0.0
      %1582 = vmatprep.subr.mxu0 0.0
      %1583 = vmatpush1.msra.mxu0 0.0
      %1584 = vmatprep.subr.mxu0 0.0
      %1585 = vmatpush1.msra.mxu0 0.0
      %1586 = vmatprep.subr.mxu0 0.0
      %1587 = vmatpush1.msra.mxu0 0.0
      %1588 = vmatprep.subr.mxu0 0.0
      %1589 = vmatpush1.msra.mxu0 0.0
      %1590 = vmatprep.mubr.f32.mxu0 0.0
      %1591 = vmatmul.mubr.f32.gmra.mrb[0].mxu0 %v1502
      %v1592 = vpop.f32.mrb[0].mxu0
      %v1593 = vadd.f32 %v1524, %v1592
      %v1594 = vpop.f32.mrb[0].mxu0
      %1595 = vdwg.mxu0
      %1596 = vst [vmem:[#allocation8] sm:$0xff] %v1593
    $region29: #{tpu_custom_call.1} parent=1 // pred_fallthru
      _
    // Predicated region
    $region30: #{tpu_custom_call.1} parent=1 // pred_check
      _
    $region31: #{tpu_custom_call.1} parent=1 // pred_check_branch
      %1598 = sbr.rel (0) target = $region33
    $region32: #{tpu_custom_call.1} parent=1 // pred_region
      %s1600 = ssub.s32 128, 128
      %1601 = vsyncadd [#allocation5], %s1600
      %s1603 = sshll.u32 [#allocation8], 4
      %s1604 = int_to_ptr.vmem [resolvable:$true] %s1603
      %1606 = dma.vmem_to_hbm [thread:$0]  %s1604, 128, %s3, [#allocation5]
    $region33: #{tpu_custom_call.1} parent=1 // pred_fallthru
      _
    // Predicated region
    $region34: #{tpu_custom_call.1} parent=1 // pred_check
      _
    $region35: #{tpu_custom_call.1} parent=1 // pred_check_branch
      %1608 = sbr.rel (0) target = $region37
    $region36: #{tpu_custom_call.1} parent=1 // pred_region
      %1609 = dma.done [#allocation5], 128
    $region37: #{tpu_custom_call.1} parent=1 // pred_fallthru
      _
    %1610 = vsyncpa [#allocation4], 1
    %1611 = vsyncpa [#allocation7], 1
    %1612 = vsyncpa [#allocation5], 1

// kernel: tpu_custom_call.1
$region0: #{tpu_custom_call.1}
  #allocation0 [shape = 'u32[]', space=smem, size = 0x4, offset = 0x4, fixed_abs, tag = 'smem constant byte address 0x4 - core index']
  #allocation1 [shape = 'u32[144,128]{1,0:T(1,128)}', space=vmem, size = 0x12000, scoped, tag = 'internal scratch']
  #allocation2 [shape = 'f32[8,128]{1,0:T(8,128)}', space=vmem, size = 0x1000, scoped, tag = 'scratch operand']
  %s0 = inlined_call_operand.hbm [shape: f32[2,128,256], index: 0, kind: input, shape index: {}]
  %s1 = inlined_call_operand.hbm [shape: f32[128,128], index: 1, kind: input, shape index: {}]
  %s2 = inlined_call_operand.vmem [shape: f32[1,128], index: 2, kind: input, shape index: {}]
  %s3 = inlined_call_operand.hbm [shape: f32[8,128], index: 3, kind: output, shape index: {}]
  %s4 = sld [smem:[#allocation0]]
  $region38: #{tpu_custom_call.1} parent=0
    _
  %s6 = ssub.s32 1, %s4
  %s7 = scalar_select 0, %s6, %s4
  $region1: #{tpu_custom_call.1} parent=0
    #allocation3 [shape = 'u8[1048576]{0}', space=vmem, size = 0x100000, scoped, tag = 'input window, operand 0, single buffered']
    #allocation4 [shape = 's32[1]{0}', space=sflag, size = 0x4, scoped, tag = 'scoped memory for tpu_custom_call.1']
    #allocation5 [shape = 's32[1]{0}', space=sflag, size = 0x4, scoped, tag = 'scoped memory for tpu_custom_call.1']
    #allocation6 [shape = 'u8[65536]{0}', space=vmem, size = 0x10000, scoped, tag = 'input window, operand 1, single buffered']
    #allocation7 [shape = 's32[1]{0}', space=sflag, size = 0x4, scoped, tag = 'scoped memory for tpu_custom_call.1']
    #allocation8 [shape = 'u8[4096]{0}', space=vmem, size = 0x1000, scoped, tag = 'output window, operand 0, single buffered']
    %8 = vsyncpa [#allocation4], 0
    %9 = vsyncpa [#allocation7], 0
    %10 = vsyncpa [#allocation5], 0
    // Predicated region
    $region2: #{tpu_custom_call.1} parent=1 // pred_check
      _
    $region3: #{tpu_custom_call.1} parent=1 // pred_check_branch
      %12 = sbr.rel (0) target = $region5
    $region4: #{tpu_custom_call.1} parent=1 // pred_region
      %s14 = ssub.s32 32768, 8192
      %15 = vsyncadd [#allocation4], %s14
      %s16 = sshll.u32 [#allocation3], 4
      %s17 = int_to_ptr.vmem [resolvable:$true] %s16
      %22 = dma.hbm_to_vmem [thread:$0]  %s0, 8192, %s17, [#allocation4], 256, 256, 16
    $region5: #{tpu_custom_call.1} parent=1 // pred_fallthru
      _
    // Predicated region
    $region6: #{tpu_custom_call.1} parent=1 // pred_check
      _
    $region7: #{tpu_custom_call.1} parent=1 // pred_check_branch
      %24 = sbr.rel (0) target = $region9
    $region8: #{tpu_custom_call.1} parent=1 // pred_region
      %s26 = ssub.s32 2048, 2048
      %27 = vsyncadd [#allocation7], %s26
      %s28 = sshll.u32 [#allocation6], 4
      %s29 = int_to_ptr.vmem [resolvable:$true] %s28
      %34 = dma.hbm_to_vmem [thread:$0]  %s1, 2048, %s29, [#allocation7], 128, 128, 8
    $region9: #{tpu_custom_call.1} parent=1 // pred_fallthru
      _
    // Predicated region
    $region10: #{tpu_custom_call.1} parent=1 // pred_check
      _
    $region11: #{tpu_custom_call.1} parent=1 // pred_check_branch
      %36 = sbr.rel (0) target = $region13
    $region12: #{tpu_custom_call.1} parent=1 // pred_region
      _
    $region13: #{tpu_custom_call.1} parent=1 // pred_fallthru
      _
    // Predicated region
    $region14: #{tpu_custom_call.1} parent=1 // pred_check
      _
    $region15: #{tpu_custom_call.1} parent=1 // pred_check_branch
      %38 = sbr.rel (0) target = $region17
    $region16: #{tpu_custom_call.1} parent=1 // pred_region
      %39 = dma.done [#allocation4], 32768
    $region17: #{tpu_custom_call.1} parent=1 // pred_fallthru
      _
    // Predicated region
    $region18: #{tpu_custom_call.1} parent=1 // pred_check
      _
    $region19: #{tpu_custom_call.1} parent=1 // pred_check_branch
      %41 = sbr.rel (0) target = $region21
    $region20: #{tpu_custom_call.1} parent=1 // pred_region
      %42 = dma.done [#allocation7], 2048
    $region21: #{tpu_custom_call.1} parent=1 // pred_fallthru
      _
    %p43 = scmp.eq.s32.totalorder 0, 0
    // Predicated region
    $region22: #{tpu_custom_call.1} parent=1 // pred_check
      %p44 = pneg %p43
    $region23: #{tpu_custom_call.1} parent=1 // pred_check_branch
      %46 = sbr.rel (%p44) target = $region25
    $region24: #{tpu_custom_call.1} parent=1 // pred_region
      %47 = vst [vmem:[#allocation2] sm:$0xff] 0.0
    $region25: #{tpu_custom_call.1} parent=1 // pred_fallthru
      _
    %v48 = vld [vmem:[#allocation3] sm:$0xff]
    %v49 = vld [vmem:[#allocation3 + $0x8] sm:$0xff]
    %v50 = vld [vmem:[#allocation3 + $0x10] sm:$0xff]
    %v51 = vld [vmem:[#allocation3 + $0x18] sm:$0xff]
    %v52 = vld [vmem:[#allocation3 + $0x20] sm:$0xff]
    %v53 = vld [vmem:[#allocation3 + $0x28] sm:$0xff]
    %v54 = vld [vmem:[#allocation3 + $0x30] sm:$0xff]
    %v55 = vld [vmem:[#allocation3 + $0x38] sm:$0xff]
    %v56 = vld [vmem:[#allocation3 + $0x40] sm:$0xff]
    %v57 = vld [vmem:[#allocation3 + $0x48] sm:$0xff]
    %v58 = vld [vmem:[#allocation3 + $0x50] sm:$0xff]
    %v59 = vld [vmem:[#allocation3 + $0x58] sm:$0xff]
    %v60 = vld [vmem:[#allocation3 + $0x60] sm:$0xff]
    %v61 = vld [vmem:[#allocation3 + $0x68] sm:$0xff]
    %v62 = vld [vmem:[#allocation3 + $0x70] sm:$0xff]
    %v63 = vld [vmem:[#allocation3 + $0x78] sm:$0xff]
    %v64 = vld [vmem:[#allocation3 + $0x80] sm:$0xff]
    %v65 = vld [vmem:[#allocation3 + $0x88] sm:$0xff]
    %v66 = vld [vmem:[#allocation3 + $0x90] sm:$0xff]
    %v67 = vld [vmem:[#allocation3 + $0x98] sm:$0xff]
    %v68 = vld [vmem:[#allocation3 + $0xa0] sm:$0xff]
    %v69 = vld [vmem:[#allocation3 + $0xa8] sm:$0xff]
    %v70 = vld [vmem:[#allocation3 + $0xb0] sm:$0xff]
    %v71 = vld [vmem:[#allocation3 + $0xb8] sm:$0xff]
    %v72 = vld [vmem:[#allocation3 + $0xc0] sm:$0xff]
    %v73 = vld [vmem:[#allocation3 + $0xc8] sm:$0xff]
    %v74 = vld [vmem:[#allocation3 + $0xd0] sm:$0xff]
    %v75 = vld [vmem:[#allocation3 + $0xd8] sm:$0xff]
    %v76 = vld [vmem:[#allocation3 + $0xe0] sm:$0xff]
    %v77 = vld [vmem:[#allocation3 + $0xe8] sm:$0xff]
    %v78 = vld [vmem:[#allocation3 + $0xf0] sm:$0xff]
    %v79 = vld [vmem:[#allocation3 + $0xf8] sm:$0xff]
    %v80 = vld [vmem:[#allocation3 + $0x100] sm:$0xff]
    %v81 = vld [vmem:[#allocation3 + $0x108] sm:$0xff]
    %v82 = vld [vmem:[#allocation3 + $0x110] sm:$0xff]
    %v83 = vld [vmem:[#allocation3 + $0x118] sm:$0xff]
    %v84 = vld [vmem:[#allocation3 + $0x120] sm:$0xff]
    %v85 = vld [vmem:[#allocation3 + $0x128] sm:$0xff]
    %v86 = vld [vmem:[#allocation3 + $0x130] sm:$0xff]
    %v87 = vld [vmem:[#allocation3 + $0x138] sm:$0xff]
    %v88 = vld [vmem:[#allocation3 + $0x140] sm:$0xff]
    %v89 = vld [vmem:[#allocation3 + $0x148] sm:$0xff]
    %v90 = vld [vmem:[#allocation3 + $0x150] sm:$0xff]
    %v91 = vld [vmem:[#allocation3 + $0x158] sm:$0xff]
    %v92 = vld [vmem:[#allocation3 + $0x160] sm:$0xff]
    %v93 = vld [vmem:[#allocation3 + $0x168] sm:$0xff]
    %v94 = vld [vmem:[#allocation3 + $0x170] sm:$0xff]
    %v95 = vld [vmem:[#allocation3 + $0x178] sm:$0xff]
    %v96 = vld [vmem:[#allocation3 + $0x180] sm:$0xff]
    %v97 = vld [vmem:[#allocation3 + $0x188] sm:$0xff]
    %v98 = vld [vmem:[#allocation3 + $0x190] sm:$0xff]
    %v99 = vld [vmem:[#allocation3 + $0x198] sm:$0xff]
    %v100 = vld [vmem:[#allocation3 + $0x1a0] sm:$0xff]
    %v101 = vld [vmem:[#allocation3 + $0x1a8] sm:$0xff]
    %v102 = vld [vmem:[#allocation3 + $0x1b0] sm:$0xff]
    %v103 = vld [vmem:[#allocation3 + $0x1b8] sm:$0xff]
    %v104 = vld [vmem:[#allocation3 + $0x1c0] sm:$0xff]
    %v105 = vld [vmem:[#allocation3 + $0x1c8] sm:$0xff]
    %v106 = vld [vmem:[#allocation3 + $0x1d0] sm:$0xff]
    %v107 = vld [vmem:[#allocation3 + $0x1d8] sm:$0xff]
    %v108 = vld [vmem:[#allocation3 + $0x1e0] sm:$0xff]
    %v109 = vld [vmem:[#allocation3 + $0x1e8] sm:$0xff]
    %v110 = vld [vmem:[#allocation3 + $0x1f0] sm:$0xff]
    %v111 = vld [vmem:[#allocation3 + $0x1f8] sm:$0xff]
    %v112 = vld [vmem:[#allocation3 + $0x200] sm:$0xff]
    %v113 = vld [vmem:[#allocation3 + $0x208] sm:$0xff]
    %v114 = vld [vmem:[#allocation3 + $0x210] sm:$0xff]
    %v115 = vld [vmem:[#allocation3 + $0x218] sm:$0xff]
    %v116 = vld [vmem:[#allocation3 + $0x220] sm:$0xff]
    %v117 = vld [vmem:[#allocation3 + $0x228] sm:$0xff]
    %v118 = vld [vmem:[#allocation3 + $0x230] sm:$0xff]
    %v119 = vld [vmem:[#allocation3 + $0x238] sm:$0xff]
    %v120 = vld [vmem:[#allocation3 + $0x240] sm:$0xff]
    %v121 = vld [vmem:[#allocation3 + $0x248] sm:$0xff]
    %v122 = vld [vmem:[#allocation3 + $0x250] sm:$0xff]
    %v123 = vld [vmem:[#allocation3 + $0x258] sm:$0xff]
    %v124 = vld [vmem:[#allocation3 + $0x260] sm:$0xff]
    %v125 = vld [vmem:[#allocation3 + $0x268] sm:$0xff]
    %v126 = vld [vmem:[#allocation3 + $0x270] sm:$0xff]
    %v127 = vld [vmem:[#allocation3 + $0x278] sm:$0xff]
    %v128 = vld [vmem:[#allocation3 + $0x280] sm:$0xff]
    %v129 = vld [vmem:[#allocation3 + $0x288] sm:$0xff]
    %v130 = vld [vmem:[#allocation3 + $0x290] sm:$0xff]
    %v131 = vld [vmem:[#allocation3 + $0x298] sm:$0xff]
    %v132 = vld [vmem:[#allocation3 + $0x2a0] sm:$0xff]
    %v133 = vld [vmem:[#allocation3 + $0x2a8] sm:$0xff]
    %v134 = vld [vmem:[#allocation3 + $0x2b0] sm:$0xff]
    %v135 = vld [vmem:[#allocation3 + $0x2b8] sm:$0xff]
    %v136 = vld [vmem:[#allocation3 + $0x2c0] sm:$0xff]
    %v137 = vld [vmem:[#allocation3 + $0x2c8] sm:$0xff]
    %v138 = vld [vmem:[#allocation3 + $0x2d0] sm:$0xff]
    %v139 = vld [vmem:[#allocation3 + $0x2d8] sm:$0xff]
    %v140 = vld [vmem:[#allocation3 + $0x2e0] sm:$0xff]
    %v141 = vld [vmem:[#allocation3 + $0x2e8] sm:$0xff]
    %v142 = vld [vmem:[#allocation3 + $0x2f0] sm:$0xff]
    %v143 = vld [vmem:[#allocation3 + $0x2f8] sm:$0xff]
    %v144 = vld [vmem:[#allocation3 + $0x300] sm:$0xff]
    %v145 = vld [vmem:[#allocation3 + $0x308] sm:$0xff]
    %v146 = vld [vmem:[#allocation3 + $0x310] sm:$0xff]
    %v147 = vld [vmem:[#allocation3 + $0x318] sm:$0xff]
    %v148 = vld [vmem:[#allocation3 + $0x320] sm:$0xff]
    %v149 = vld [vmem:[#allocation3 + $0x328] sm:$0xff]
    %v150 = vld [vmem:[#allocation3 + $0x330] sm:$0xff]
    %v151 = vld [vmem:[#allocation3 + $0x338] sm:$0xff]
    %v152 = vld [vmem:[#allocation3 + $0x340] sm:$0xff]
    %v153 = vld [vmem:[#allocation3 + $0x348] sm:$0xff]
    %v154 = vld [vmem:[#allocation3 + $0x350] sm:$0xff]
    %v155 = vld [vmem:[#allocation3 + $0x358] sm:$0xff]
    %v156 = vld [vmem:[#allocation3 + $0x360] sm:$0xff]
    %v157 = vld [vmem:[#allocation3 + $0x368] sm:$0xff]
    %v158 = vld [vmem:[#allocation3 + $0x370] sm:$0xff]
    %v159 = vld [vmem:[#allocation3 + $0x378] sm:$0xff]
    %v160 = vld [vmem:[#allocation3 + $0x380] sm:$0xff]
    %v161 = vld [vmem:[#allocation3 + $0x388] sm:$0xff]
    %v162 = vld [vmem:[#allocation3 + $0x390] sm:$0xff]
    %v163 = vld [vmem:[#allocation3 + $0x398] sm:$0xff]
    %v164 = vld [vmem:[#allocation3 + $0x3a0] sm:$0xff]
    %v165 = vld [vmem:[#allocation3 + $0x3a8] sm:$0xff]
    %v166 = vld [vmem:[#allocation3 + $0x3b0] sm:$0xff]
    %v167 = vld [vmem:[#allocation3 + $0x3b8] sm:$0xff]
    %v168 = vld [vmem:[#allocation3 + $0x3c0] sm:$0xff]
    %v169 = vld [vmem:[#allocation3 + $0x3c8] sm:$0xff]
    %v170 = vld [vmem:[#allocation3 + $0x3d0] sm:$0xff]
    %v171 = vld [vmem:[#allocation3 + $0x3d8] sm:$0xff]
    %v172 = vld [vmem:[#allocation3 + $0x3e0] sm:$0xff]
    %v173 = vld [vmem:[#allocation3 + $0x3e8] sm:$0xff]
    %v174 = vld [vmem:[#allocation3 + $0x3f0] sm:$0xff]
    %v175 = vld [vmem:[#allocation3 + $0x3f8] sm:$0xff]
    %v176 = vld [vmem:[#allocation3 + $0x400] sm:$0xff]
    %v177 = vld [vmem:[#allocation3 + $0x408] sm:$0xff]
    %v178 = vld [vmem:[#allocation3 + $0x410] sm:$0xff]
    %v179 = vld [vmem:[#allocation3 + $0x418] sm:$0xff]
    %v180 = vld [vmem:[#allocation3 + $0x420] sm:$0xff]
    %v181 = vld [vmem:[#allocation3 + $0x428] sm:$0xff]
    %v182 = vld [vmem:[#allocation3 + $0x430] sm:$0xff]
    %v183 = vld [vmem:[#allocation3 + $0x438] sm:$0xff]
    %v184 = vld [vmem:[#allocation3 + $0x440] sm:$0xff]
    %v185 = vld [vmem:[#allocation3 + $0x448] sm:$0xff]
    %v186 = vld [vmem:[#allocation3 + $0x450] sm:$0xff]
    %v187 = vld [vmem:[#allocation3 + $0x458] sm:$0xff]
    %v188 = vld [vmem:[#allocation3 + $0x460] sm:$0xff]
    %v189 = vld [vmem:[#allocation3 + $0x468] sm:$0xff]
    %v190 = vld [vmem:[#allocation3 + $0x470] sm:$0xff]
    %v191 = vld [vmem:[#allocation3 + $0x478] sm:$0xff]
    %v192 = vld [vmem:[#allocation3 + $0x480] sm:$0xff]
    %v193 = vld [vmem:[#allocation3 + $0x488] sm:$0xff]
    %v194 = vld [vmem:[#allocation3 + $0x490] sm:$0xff]
    %v195 = vld [vmem:[#allocation3 + $0x498] sm:$0xff]
    %v196 = vld [vmem:[#allocation3 + $0x4a0] sm:$0xff]
    %v197 = vld [vmem:[#allocation3 + $0x4a8] sm:$0xff]
    %v198 = vld [vmem:[#allocation3 + $0x4b0] sm:$0xff]
    %v199 = vld [vmem:[#allocation3 + $0x4b8] sm:$0xff]
    %v200 = vld [vmem:[#allocation3 + $0x4c0] sm:$0xff]
    %v201 = vld [vmem:[#allocation3 + $0x4c8] sm:$0xff]
    %v202 = vld [vmem:[#allocation3 + $0x4d0] sm:$0xff]
    %v203 = vld [vmem:[#allocation3 + $0x4d8] sm:$0xff]
    %v204 = vld [vmem:[#allocation3 + $0x4e0] sm:$0xff]
    %v205 = vld [vmem:[#allocation3 + $0x4e8] sm:$0xff]
    %v206 = vld [vmem:[#allocation3 + $0x4f0] sm:$0xff]
    %v207 = vld [vmem:[#allocation3 + $0x4f8] sm:$0xff]
    %v208 = vld [vmem:[#allocation3 + $0x500] sm:$0xff]
    %v209 = vld [vmem:[#allocation3 + $0x508] sm:$0xff]
    %v210 = vld [vmem:[#allocation3 + $0x510] sm:$0xff]
    %v211 = vld [vmem:[#allocation3 + $0x518] sm:$0xff]
    %v212 = vld [vmem:[#allocation3 + $0x520] sm:$0xff]
    %v213 = vld [vmem:[#allocation3 + $0x528] sm:$0xff]
    %v214 = vld [vmem:[#allocation3 + $0x530] sm:$0xff]
    %v215 = vld [vmem:[#allocation3 + $0x538] sm:$0xff]
    %v216 = vld [vmem:[#allocation3 + $0x540] sm:$0xff]
    %v217 = vld [vmem:[#allocation3 + $0x548] sm:$0xff]
    %v218 = vld [vmem:[#allocation3 + $0x550] sm:$0xff]
    %v219 = vld [vmem:[#allocation3 + $0x558] sm:$0xff]
    %v220 = vld [vmem:[#allocation3 + $0x560] sm:$0xff]
    %v221 = vld [vmem:[#allocation3 + $0x568] sm:$0xff]
    %v222 = vld [vmem:[#allocation3 + $0x570] sm:$0xff]
    %v223 = vld [vmem:[#allocation3 + $0x578] sm:$0xff]
    %v224 = vld [vmem:[#allocation3 + $0x580] sm:$0xff]
    %v225 = vld [vmem:[#allocation3 + $0x588] sm:$0xff]
    %v226 = vld [vmem:[#allocation3 + $0x590] sm:$0xff]
    %v227 = vld [vmem:[#allocation3 + $0x598] sm:$0xff]
    %v228 = vld [vmem:[#allocation3 + $0x5a0] sm:$0xff]
    %v229 = vld [vmem:[#allocation3 + $0x5a8] sm:$0xff]
    %v230 = vld [vmem:[#allocation3 + $0x5b0] sm:$0xff]
    %v231 = vld [vmem:[#allocation3 + $0x5b8] sm:$0xff]
    %v232 = vld [vmem:[#allocation3 + $0x5c0] sm:$0xff]
    %v233 = vld [vmem:[#allocation3 + $0x5c8] sm:$0xff]
    %v234 = vld [vmem:[#allocation3 + $0x5d0] sm:$0xff]
    %v235 = vld [vmem:[#allocation3 + $0x5d8] sm:$0xff]
    %v236 = vld [vmem:[#allocation3 + $0x5e0] sm:$0xff]
    %v237 = vld [vmem:[#allocation3 + $0x5e8] sm:$0xff]
    %v238 = vld [vmem:[#allocation3 + $0x5f0] sm:$0xff]
    %v239 = vld [vmem:[#allocation3 + $0x5f8] sm:$0xff]
    %v240 = vld [vmem:[#allocation3 + $0x600] sm:$0xff]
    %v241 = vld [vmem:[#allocation3 + $0x608] sm:$0xff]
    %v242 = vld [vmem:[#allocation3 + $0x610] sm:$0xff]
    %v243 = vld [vmem:[#allocation3 + $0x618] sm:$0xff]
    %v244 = vld [vmem:[#allocation3 + $0x620] sm:$0xff]
    %v245 = vld [vmem:[#allocation3 + $0x628] sm:$0xff]
    %v246 = vld [vmem:[#allocation3 + $0x630] sm:$0xff]
    %v247 = vld [vmem:[#allocation3 + $0x638] sm:$0xff]
    %v248 = vld [vmem:[#allocation3 + $0x640] sm:$0xff]
    %v249 = vld [vmem:[#allocation3 + $0x648] sm:$0xff]
    %v250 = vld [vmem:[#allocation3 + $0x650] sm:$0xff]
    %v251 = vld [vmem:[#allocation3 + $0x658] sm:$0xff]
    %v252 = vld [vmem:[#allocation3 + $0x660] sm:$0xff]
    %v253 = vld [vmem:[#allocation3 + $0x668] sm:$0xff]
    %v254 = vld [vmem:[#allocation3 + $0x670] sm:$0xff]
    %v255 = vld [vmem:[#allocation3 + $0x678] sm:$0xff]
    %v256 = vld [vmem:[#allocation3 + $0x680] sm:$0xff]
    %v257 = vld [vmem:[#allocation3 + $0x688] sm:$0xff]
    %v258 = vld [vmem:[#allocation3 + $0x690] sm:$0xff]
    %v259 = vld [vmem:[#allocation3 + $0x698] sm:$0xff]
    %v260 = vld [vmem:[#allocation3 + $0x6a0] sm:$0xff]
    %v261 = vld [vmem:[#allocation3 + $0x6a8] sm:$0xff]
    %v262 = vld [vmem:[#allocation3 + $0x6b0] sm:$0xff]
    %v263 = vld [vmem:[#allocation3 + $0x6b8] sm:$0xff]
    %v264 = vld [vmem:[#allocation3 + $0x6c0] sm:$0xff]
    %v265 = vld [vmem:[#allocation3 + $0x6c8] sm:$0xff]
    %v266 = vld [vmem:[#allocation3 + $0x6d0] sm:$0xff]
    %v267 = vld [vmem:[#allocation3 + $0x6d8] sm:$0xff]
    %v268 = vld [vmem:[#allocation3 + $0x6e0] sm:$0xff]
    %v269 = vld [vmem:[#allocation3 + $0x6e8] sm:$0xff]
    %v270 = vld [vmem:[#allocation3 + $0x6f0] sm:$0xff]
    %v271 = vld [vmem:[#allocation3 + $0x6f8] sm:$0xff]
    %v272 = vld [vmem:[#allocation3 + $0x700] sm:$0xff]
    %v273 = vld [vmem:[#allocation3 + $0x708] sm:$0xff]
    %v274 = vld [vmem:[#allocation3 + $0x710] sm:$0xff]
    %v275 = vld [vmem:[#allocation3 + $0x718] sm:$0xff]
    %v276 = vld [vmem:[#allocation3 + $0x720] sm:$0xff]
    %v277 = vld [vmem:[#allocation3 + $0x728] sm:$0xff]
    %v278 = vld [vmem:[#allocation3 + $0x730] sm:$0xff]
    %v279 = vld [vmem:[#allocation3 + $0x738] sm:$0xff]
    %v280 = vld [vmem:[#allocation3 + $0x740] sm:$0xff]
    %v281 = vld [vmem:[#allocation3 + $0x748] sm:$0xff]
    %v282 = vld [vmem:[#allocation3 + $0x750] sm:$0xff]
    %v283 = vld [vmem:[#allocation3 + $0x758] sm:$0xff]
    %v284 = vld [vmem:[#allocation3 + $0x760] sm:$0xff]
    %v285 = vld [vmem:[#allocation3 + $0x768] sm:$0xff]
    %v286 = vld [vmem:[#allocation3 + $0x770] sm:$0xff]
    %v287 = vld [vmem:[#allocation3 + $0x778] sm:$0xff]
    %v288 = vld [vmem:[#allocation3 + $0x780] sm:$0xff]
    %v289 = vld [vmem:[#allocation3 + $0x788] sm:$0xff]
    %v290 = vld [vmem:[#allocation3 + $0x790] sm:$0xff]
    %v291 = vld [vmem:[#allocation3 + $0x798] sm:$0xff]
    %v292 = vld [vmem:[#allocation3 + $0x7a0] sm:$0xff]
    %v293 = vld [vmem:[#allocation3 + $0x7a8] sm:$0xff]
    %v294 = vld [vmem:[#allocation3 + $0x7b0] sm:$0xff]
    %v295 = vld [vmem:[#allocation3 + $0x7b8] sm:$0xff]
    %v296 = vld [vmem:[#allocation3 + $0x7c0] sm:$0xff]
    %v297 = vld [vmem:[#allocation3 + $0x7c8] sm:$0xff]
    %v298 = vld [vmem:[#allocation3 + $0x7d0] sm:$0xff]
    %v299 = vld [vmem:[#allocation3 + $0x7d8] sm:$0xff]
    %v300 = vld [vmem:[#allocation3 + $0x7e0] sm:$0xff]
    %v301 = vld [vmem:[#allocation3 + $0x7e8] sm:$0xff]
    %v302 = vld [vmem:[#allocation3 + $0x7f0] sm:$0xff]
    %v303 = vld [vmem:[#allocation3 + $0x7f8] sm:$0xff]
    %v304 = vld [vmem:[#allocation2] sm:$0xff]
    %v305 = vadd.f32 %v48, %v49
    %306 = vadd.xlane.f32.xlu0 %v305
    %v307 = vpop.xlane.xlu0 %306
    %v308 = vadd.f32 %v50, %v51
    %309 = vadd.xlane.f32.xlu0 %v308
    %v310 = vpop.xlane.xlu0 %309
    %v311 = vadd.f32 %v52, %v53
    %312 = vadd.xlane.f32.xlu0 %v311
    %v313 = vpop.xlane.xlu0 %312
    %v314 = vadd.f32 %v54, %v55
    %315 = vadd.xlane.f32.xlu0 %v314
    %v316 = vpop.xlane.xlu0 %315
    %v317 = vadd.f32 %v56, %v57
    %318 = vadd.xlane.f32.xlu0 %v317
    %v319 = vpop.xlane.xlu0 %318
    %v320 = vadd.f32 %v58, %v59
    %321 = vadd.xlane.f32.xlu0 %v320
    %v322 = vpop.xlane.xlu0 %321
    %v323 = vadd.f32 %v60, %v61
    %324 = vadd.xlane.f32.xlu0 %v323
    %v325 = vpop.xlane.xlu0 %324
    %v326 = vadd.f32 %v62, %v63
    %327 = vadd.xlane.f32.xlu0 %v326
    %v328 = vpop.xlane.xlu0 %327
    %v329 = vadd.f32 %v64, %v65
    %330 = vadd.xlane.f32.xlu0 %v329
    %v331 = vpop.xlane.xlu0 %330
    %v332 = vadd.f32 %v66, %v67
    %333 = vadd.xlane.f32.xlu0 %v332
    %v334 = vpop.xlane.xlu0 %333
    %v335 = vadd.f32 %v68, %v69
    %336 = vadd.xlane.f32.xlu0 %v335
    %v337 = vpop.xlane.xlu0 %336
    %v338 = vadd.f32 %v70, %v71
    %339 = vadd.xlane.f32.xlu0 %v338
    %v340 = vpop.xlane.xlu0 %339
    %v341 = vadd.f32 %v72, %v73
    %342 = vadd.xlane.f32.xlu0 %v341
    %v343 = vpop.xlane.xlu0 %342
    %v344 = vadd.f32 %v74, %v75
    %345 = vadd.xlane.f32.xlu0 %v344
    %v346 = vpop.xlane.xlu0 %345
    %v347 = vadd.f32 %v76, %v77
    %348 = vadd.xlane.f32.xlu0 %v347
    %v349 = vpop.xlane.xlu0 %348
    %v350 = vadd.f32 %v78, %v79
    %351 = vadd.xlane.f32.xlu0 %v350
    %v352 = vpop.xlane.xlu0 %351
    %v353 = vadd.f32 %v80, %v81
    %354 = vadd.xlane.f32.xlu0 %v353
    %v355 = vpop.xlane.xlu0 %354
    %v356 = vadd.f32 %v82, %v83
    %357 = vadd.xlane.f32.xlu0 %v356
    %v358 = vpop.xlane.xlu0 %357
    %v359 = vadd.f32 %v84, %v85
    %360 = vadd.xlane.f32.xlu0 %v359
    %v361 = vpop.xlane.xlu0 %360
    %v362 = vadd.f32 %v86, %v87
    %363 = vadd.xlane.f32.xlu0 %v362
    %v364 = vpop.xlane.xlu0 %363
    %v365 = vadd.f32 %v88, %v89
    %366 = vadd.xlane.f32.xlu0 %v365
    %v367 = vpop.xlane.xlu0 %366
    %v368 = vadd.f32 %v90, %v91
    %369 = vadd.xlane.f32.xlu0 %v368
    %v370 = vpop.xlane.xlu0 %369
    %v371 = vadd.f32 %v92, %v93
    %372 = vadd.xlane.f32.xlu0 %v371
    %v373 = vpop.xlane.xlu0 %372
    %v374 = vadd.f32 %v94, %v95
    %375 = vadd.xlane.f32.xlu0 %v374
    %v376 = vpop.xlane.xlu0 %375
    %v377 = vadd.f32 %v96, %v97
    %378 = vadd.xlane.f32.xlu0 %v377
    %v379 = vpop.xlane.xlu0 %378
    %v380 = vadd.f32 %v98, %v99
    %381 = vadd.xlane.f32.xlu0 %v380
    %v382 = vpop.xlane.xlu0 %381
    %v383 = vadd.f32 %v100, %v101
    %384 = vadd.xlane.f32.xlu0 %v383
    %v385 = vpop.xlane.xlu0 %384
    %v386 = vadd.f32 %v102, %v103
    %387 = vadd.xlane.f32.xlu0 %v386
    %v388 = vpop.xlane.xlu0 %387
    %v389 = vadd.f32 %v104, %v105
    %390 = vadd.xlane.f32.xlu0 %v389
    %v391 = vpop.xlane.xlu0 %390
    %v392 = vadd.f32 %v106, %v107
    %393 = vadd.xlane.f32.xlu0 %v392
    %v394 = vpop.xlane.xlu0 %393
    %v395 = vadd.f32 %v108, %v109
    %396 = vadd.xlane.f32.xlu0 %v395
    %v397 = vpop.xlane.xlu0 %396
    %v398 = vadd.f32 %v110, %v111
    %399 = vadd.xlane.f32.xlu0 %v398
    %v400 = vpop.xlane.xlu0 %399
    %v401 = vadd.f32 %v112, %v113
    %402 = vadd.xlane.f32.xlu0 %v401
    %v403 = vpop.xlane.xlu0 %402
    %v404 = vadd.f32 %v114, %v115
    %405 = vadd.xlane.f32.xlu0 %v404
    %v406 = vpop.xlane.xlu0 %405
    %v407 = vadd.f32 %v116, %v117
    %408 = vadd.xlane.f32.xlu0 %v407
    %v409 = vpop.xlane.xlu0 %408
    %v410 = vadd.f32 %v118, %v119
    %411 = vadd.xlane.f32.xlu0 %v410
    %v412 = vpop.xlane.xlu0 %411
    %v413 = vadd.f32 %v120, %v121
    %414 = vadd.xlane.f32.xlu0 %v413
    %v415 = vpop.xlane.xlu0 %414
    %v416 = vadd.f32 %v122, %v123
    %417 = vadd.xlane.f32.xlu0 %v416
    %v418 = vpop.xlane.xlu0 %417
    %v419 = vadd.f32 %v124, %v125
    %420 = vadd.xlane.f32.xlu0 %v419
    %v421 = vpop.xlane.xlu0 %420
    %v422 = vadd.f32 %v126, %v127
    %423 = vadd.xlane.f32.xlu0 %v422
    %v424 = vpop.xlane.xlu0 %423
    %v425 = vadd.f32 %v128, %v129
    %426 = vadd.xlane.f32.xlu0 %v425
    %v427 = vpop.xlane.xlu0 %426
    %v428 = vadd.f32 %v130, %v131
    %429 = vadd.xlane.f32.xlu0 %v428
    %v430 = vpop.xlane.xlu0 %429
    %v431 = vadd.f32 %v132, %v133
    %432 = vadd.xlane.f32.xlu0 %v431
    %v433 = vpop.xlane.xlu0 %432
    %v434 = vadd.f32 %v134, %v135
    %435 = vadd.xlane.f32.xlu0 %v434
    %v436 = vpop.xlane.xlu0 %435
    %v437 = vadd.f32 %v136, %v137
    %438 = vadd.xlane.f32.xlu0 %v437
    %v439 = vpop.xlane.xlu0 %438
    %v440 = vadd.f32 %v138, %v139
    %441 = vadd.xlane.f32.xlu0 %v440
    %v442 = vpop.xlane.xlu0 %441
    %v443 = vadd.f32 %v140, %v141
    %444 = vadd.xlane.f32.xlu0 %v443
    %v445 = vpop.xlane.xlu0 %444
    %v446 = vadd.f32 %v142, %v143
    %447 = vadd.xlane.f32.xlu0 %v446
    %v448 = vpop.xlane.xlu0 %447
    %v449 = vadd.f32 %v144, %v145
    %450 = vadd.xlane.f32.xlu0 %v449
    %v451 = vpop.xlane.xlu0 %450
    %v452 = vadd.f32 %v146, %v147
    %453 = vadd.xlane.f32.xlu0 %v452
    %v454 = vpop.xlane.xlu0 %453
    %v455 = vadd.f32 %v148, %v149
    %456 = vadd.xlane.f32.xlu0 %v455
    %v457 = vpop.xlane.xlu0 %456
    %v458 = vadd.f32 %v150, %v151
    %459 = vadd.xlane.f32.xlu0 %v458
    %v460 = vpop.xlane.xlu0 %459
    %v461 = vadd.f32 %v152, %v153
    %462 = vadd.xlane.f32.xlu0 %v461
    %v463 = vpop.xlane.xlu0 %462
    %v464 = vadd.f32 %v154, %v155
    %465 = vadd.xlane.f32.xlu0 %v464
    %v466 = vpop.xlane.xlu0 %465
    %v467 = vadd.f32 %v156, %v157
    %468 = vadd.xlane.f32.xlu0 %v467
    %v469 = vpop.xlane.xlu0 %468
    %v470 = vadd.f32 %v158, %v159
    %471 = vadd.xlane.f32.xlu0 %v470
    %v472 = vpop.xlane.xlu0 %471
    %v473 = vadd.f32 %v160, %v161
    %474 = vadd.xlane.f32.xlu0 %v473
    %v475 = vpop.xlane.xlu0 %474
    %v476 = vadd.f32 %v162, %v163
    %477 = vadd.xlane.f32.xlu0 %v476
    %v478 = vpop.xlane.xlu0 %477
    %v479 = vadd.f32 %v164, %v165
    %480 = vadd.xlane.f32.xlu0 %v479
    %v481 = vpop.xlane.xlu0 %480
    %v482 = vadd.f32 %v166, %v167
    %483 = vadd.xlane.f32.xlu0 %v482
    %v484 = vpop.xlane.xlu0 %483
    %v485 = vadd.f32 %v168, %v169
    %486 = vadd.xlane.f32.xlu0 %v485
    %v487 = vpop.xlane.xlu0 %486
    %v488 = vadd.f32 %v170, %v171
    %489 = vadd.xlane.f32.xlu0 %v488
    %v490 = vpop.xlane.xlu0 %489
    %v491 = vadd.f32 %v172, %v173
    %492 = vadd.xlane.f32.xlu0 %v491
    %v493 = vpop.xlane.xlu0 %492
    %v494 = vadd.f32 %v174, %v175
    %495 = vadd.xlane.f32.xlu0 %v494
    %v496 = vpop.xlane.xlu0 %495
    %v497 = vadd.f32 %v176, %v177
    %498 = vadd.xlane.f32.xlu0 %v497
    %v499 = vpop.xlane.xlu0 %498
    %v500 = vadd.f32 %v178, %v179
    %501 = vadd.xlane.f32.xlu0 %v500
    %v502 = vpop.xlane.xlu0 %501
    %v503 = vadd.f32 %v180, %v181
    %504 = vadd.xlane.f32.xlu0 %v503
    %v505 = vpop.xlane.xlu0 %504
    %v506 = vadd.f32 %v182, %v183
    %507 = vadd.xlane.f32.xlu0 %v506
    %v508 = vpop.xlane.xlu0 %507
    %v509 = vadd.f32 %v184, %v185
    %510 = vadd.xlane.f32.xlu0 %v509
    %v511 = vpop.xlane.xlu0 %510
    %v512 = vadd.f32 %v186, %v187
    %513 = vadd.xlane.f32.xlu0 %v512
    %v514 = vpop.xlane.xlu0 %513
    %v515 = vadd.f32 %v188, %v189
    %516 = vadd.xlane.f32.xlu0 %v515
    %v517 = vpop.xlane.xlu0 %516
    %v518 = vadd.f32 %v190, %v191
    %519 = vadd.xlane.f32.xlu0 %v518
    %v520 = vpop.xlane.xlu0 %519
    %v521 = vadd.f32 %v192, %v193
    %522 = vadd.xlane.f32.xlu0 %v521
    %v523 = vpop.xlane.xlu0 %522
    %v524 = vadd.f32 %v194, %v195
    %525 = vadd.xlane.f32.xlu0 %v524
    %v526 = vpop.xlane.xlu0 %525
    %v527 = vadd.f32 %v196, %v197
    %528 = vadd.xlane.f32.xlu0 %v527
    %v529 = vpop.xlane.xlu0 %528
    %v530 = vadd.f32 %v198, %v199
    %531 = vadd.xlane.f32.xlu0 %v530
    %v532 = vpop.xlane.xlu0 %531
    %v533 = vadd.f32 %v200, %v201
    %534 = vadd.xlane.f32.xlu0 %v533
    %v535 = vpop.xlane.xlu0 %534
    %v536 = vadd.f32 %v202, %v203
    %537 = vadd.xlane.f32.xlu0 %v536
    %v538 = vpop.xlane.xlu0 %537
    %v539 = vadd.f32 %v204, %v205
    %540 = vadd.xlane.f32.xlu0 %v539
    %v541 = vpop.xlane.xlu0 %540
    %v542 = vadd.f32 %v206, %v207
    %543 = vadd.xlane.f32.xlu0 %v542
    %v544 = vpop.xlane.xlu0 %543
    %v545 = vadd.f32 %v208, %v209
    %546 = vadd.xlane.f32.xlu0 %v545
    %v547 = vpop.xlane.xlu0 %546
    %v548 = vadd.f32 %v210, %v211
    %549 = vadd.xlane.f32.xlu0 %v548
    %v550 = vpop.xlane.xlu0 %549
    %v551 = vadd.f32 %v212, %v213
    %552 = vadd.xlane.f32.xlu0 %v551
    %v553 = vpop.xlane.xlu0 %552
    %v554 = vadd.f32 %v214, %v215
    %555 = vadd.xlane.f32.xlu0 %v554
    %v556 = vpop.xlane.xlu0 %555
    %v557 = vadd.f32 %v216, %v217
    %558 = vadd.xlane.f32.xlu0 %v557
    %v559 = vpop.xlane.xlu0 %558
    %v560 = vadd.f32 %v218, %v219
    %561 = vadd.xlane.f32.xlu0 %v560
    %v562 = vpop.xlane.xlu0 %561
    %v563 = vadd.f32 %v220, %v221
    %564 = vadd.xlane.f32.xlu0 %v563
    %v565 = vpop.xlane.xlu0 %564
    %v566 = vadd.f32 %v222, %v223
    %567 = vadd.xlane.f32.xlu0 %v566
    %v568 = vpop.xlane.xlu0 %567
    %v569 = vadd.f32 %v224, %v225
    %570 = vadd.xlane.f32.xlu0 %v569
    %v571 = vpop.xlane.xlu0 %570
    %v572 = vadd.f32 %v226, %v227
    %573 = vadd.xlane.f32.xlu0 %v572
    %v574 = vpop.xlane.xlu0 %573
    %v575 = vadd.f32 %v228, %v229
    %576 = vadd.xlane.f32.xlu0 %v575
    %v577 = vpop.xlane.xlu0 %576
    %v578 = vadd.f32 %v230, %v231
    %579 = vadd.xlane.f32.xlu0 %v578
    %v580 = vpop.xlane.xlu0 %579
    %v581 = vadd.f32 %v232, %v233
    %582 = vadd.xlane.f32.xlu0 %v581
    %v583 = vpop.xlane.xlu0 %582
    %v584 = vadd.f32 %v234, %v235
    %585 = vadd.xlane.f32.xlu0 %v584
    %v586 = vpop.xlane.xlu0 %585
    %v587 = vadd.f32 %v236, %v237
    %588 = vadd.xlane.f32.xlu0 %v587
    %v589 = vpop.xlane.xlu0 %588
    %v590 = vadd.f32 %v238, %v239
    %591 = vadd.xlane.f32.xlu0 %v590
    %v592 = vpop.xlane.xlu0 %591
    %v593 = vadd.f32 %v240, %v241
    %594 = vadd.xlane.f32.xlu0 %v593
    %v595 = vpop.xlane.xlu0 %594
    %v596 = vadd.f32 %v242, %v243
    %597 = vadd.xlane.f32.xlu0 %v596
    %v598 = vpop.xlane.xlu0 %597
    %v599 = vadd.f32 %v244, %v245
    %600 = vadd.xlane.f32.xlu0 %v599
    %v601 = vpop.xlane.xlu0 %600
    %v602 = vadd.f32 %v246, %v247
    %603 = vadd.xlane.f32.xlu0 %v602
    %v604 = vpop.xlane.xlu0 %603
    %v605 = vadd.f32 %v248, %v249
    %606 = vadd.xlane.f32.xlu0 %v605
    %v607 = vpop.xlane.xlu0 %606
    %v608 = vadd.f32 %v250, %v251
    %609 = vadd.xlane.f32.xlu0 %v608
    %v610 = vpop.xlane.xlu0 %609
    %v611 = vadd.f32 %v252, %v253
    %612 = vadd.xlane.f32.xlu0 %v611
    %v613 = vpop.xlane.xlu0 %612
    %v614 = vadd.f32 %v254, %v255
    %615 = vadd.xlane.f32.xlu0 %v614
    %v616 = vpop.xlane.xlu0 %615
    %v617 = vadd.f32 %v256, %v257
    %618 = vadd.xlane.f32.xlu0 %v617
    %v619 = vpop.xlane.xlu0 %618
    %v620 = vadd.f32 %v258, %v259
    %621 = vadd.xlane.f32.xlu0 %v620
    %v622 = vpop.xlane.xlu0 %621
    %v623 = vadd.f32 %v260, %v261
    %624 = vadd.xlane.f32.xlu0 %v623
    %v625 = vpop.xlane.xlu0 %624
    %v626 = vadd.f32 %v262, %v263
    %627 = vadd.xlane.f32.xlu0 %v626
    %v628 = vpop.xlane.xlu0 %627
    %v629 = vadd.f32 %v264, %v265
    %630 = vadd.xlane.f32.xlu0 %v629
    %v631 = vpop.xlane.xlu0 %630
    %v632 = vadd.f32 %v266, %v267
    %633 = vadd.xlane.f32.xlu0 %v632
    %v634 = vpop.xlane.xlu0 %633
    %v635 = vadd.f32 %v268, %v269
    %636 = vadd.xlane.f32.xlu0 %v635
    %v637 = vpop.xlane.xlu0 %636
    %v638 = vadd.f32 %v270, %v271
    %639 = vadd.xlane.f32.xlu0 %v638
    %v640 = vpop.xlane.xlu0 %639
    %v641 = vadd.f32 %v272, %v273
    %642 = vadd.xlane.f32.xlu0 %v641
    %v643 = vpop.xlane.xlu0 %642
    %v644 = vadd.f32 %v274, %v275
    %645 = vadd.xlane.f32.xlu0 %v644
    %v646 = vpop.xlane.xlu0 %645
    %v647 = vadd.f32 %v276, %v277
    %648 = vadd.xlane.f32.xlu0 %v647
    %v649 = vpop.xlane.xlu0 %648
    %v650 = vadd.f32 %v278, %v279
    %651 = vadd.xlane.f32.xlu0 %v650
    %v652 = vpop.xlane.xlu0 %651
    %v653 = vadd.f32 %v280, %v281
    %654 = vadd.xlane.f32.xlu0 %v653
    %v655 = vpop.xlane.xlu0 %654
    %v656 = vadd.f32 %v282, %v283
    %657 = vadd.xlane.f32.xlu0 %v656
    %v658 = vpop.xlane.xlu0 %657
    %v659 = vadd.f32 %v284, %v285
    %660 = vadd.xlane.f32.xlu0 %v659
    %v661 = vpop.xlane.xlu0 %660
    %v662 = vadd.f32 %v286, %v287
    %663 = vadd.xlane.f32.xlu0 %v662
    %v664 = vpop.xlane.xlu0 %663
    %v665 = vadd.f32 %v288, %v289
    %666 = vadd.xlane.f32.xlu0 %v665
    %v667 = vpop.xlane.xlu0 %666
    %v668 = vadd.f32 %v290, %v291
    %669 = vadd.xlane.f32.xlu0 %v668
    %v670 = vpop.xlane.xlu0 %669
    %v671 = vadd.f32 %v292, %v293
    %672 = vadd.xlane.f32.xlu0 %v671
    %v673 = vpop.xlane.xlu0 %672
    %v674 = vadd.f32 %v294, %v295
    %675 = vadd.xlane.f32.xlu0 %v674
    %v676 = vpop.xlane.xlu0 %675
    %v677 = vadd.f32 %v296, %v297
    %678 = vadd.xlane.f32.xlu0 %v677
    %v679 = vpop.xlane.xlu0 %678
    %v680 = vadd.f32 %v298, %v299
    %681 = vadd.xlane.f32.xlu0 %v680
    %v682 = vpop.xlane.xlu0 %681
    %v683 = vadd.f32 %v300, %v301
    %684 = vadd.xlane.f32.xlu0 %v683
    %v685 = vpop.xlane.xlu0 %684
    %v686 = vadd.f32 %v302, %v303
    %687 = vadd.xlane.f32.xlu0 %v686
    %v688 = vpop.xlane.xlu0 %687
    %v817 = vlaneseq
    %v818 = vand.u32 %v817, 127
    %v819 = vlaneseq
    %v820 = vshrl.u32 %v819, 7
    %v821 = vsub.s32 %v818, %v820
    %v822 = vrot.slane %v307, %v821
    %v823 = vadd.s32 %v818, 4294967288
    %v824 = vlaneseq
    %v825 = vshrl.u32 %v824, 7
    %v826 = vsub.s32 %v823, %v825
    %v827 = vrot.slane %v310, %v826
    %vm828 = vcmask 130112
    %v829 = vsel %vm828, %v827, %v822
    %v830 = vadd.s32 %v818, 4294967280
    %v831 = vlaneseq
    %v832 = vshrl.u32 %v831, 7
    %v833 = vsub.s32 %v830, %v832
    %v834 = vrot.slane %v313, %v833
    %vm835 = vcmask 195712
    %v836 = vsel %vm835, %v834, %v829
    %v837 = vadd.s32 %v818, 4294967272
    %v838 = vlaneseq
    %v839 = vshrl.u32 %v838, 7
    %v840 = vsub.s32 %v837, %v839
    %v841 = vrot.slane %v316, %v840
    %vm842 = vcmask 261312
    %v843 = vsel %vm842, %v841, %v836
    %v844 = vadd.s32 %v818, 4294967264
    %v845 = vlaneseq
    %v846 = vshrl.u32 %v845, 7
    %v847 = vsub.s32 %v844, %v846
    %v848 = vrot.slane %v319, %v847
    %vm849 = vcmask 326912
    %v850 = vsel %vm849, %v848, %v843
    %v851 = vadd.s32 %v818, 4294967256
    %v852 = vlaneseq
    %v853 = vshrl.u32 %v852, 7
    %v854 = vsub.s32 %v851, %v853
    %v855 = vrot.slane %v322, %v854
    %vm856 = vcmask 392512
    %v857 = vsel %vm856, %v855, %v850
    %v858 = vadd.s32 %v818, 4294967248
    %v859 = vlaneseq
    %v860 = vshrl.u32 %v859, 7
    %v861 = vsub.s32 %v858, %v860
    %v862 = vrot.slane %v325, %v861
    %vm863 = vcmask 458112
    %v864 = vsel %vm863, %v862, %v857
    %v865 = vadd.s32 %v818, 4294967240
    %v866 = vlaneseq
    %v867 = vshrl.u32 %v866, 7
    %v868 = vsub.s32 %v865, %v867
    %v869 = vrot.slane %v328, %v868
    %vm870 = vcmask 523712
    %v871 = vsel %vm870, %v869, %v864
    %v872 = vadd.s32 %v818, 4294967232
    %v873 = vlaneseq
    %v874 = vshrl.u32 %v873, 7
    %v875 = vsub.s32 %v872, %v874
    %v876 = vrot.slane %v331, %v875
    %vm877 = vcmask 589312
    %v878 = vsel %vm877, %v876, %v871
    %v879 = vadd.s32 %v818, 4294967224
    %v880 = vlaneseq
    %v881 = vshrl.u32 %v880, 7
    %v882 = vsub.s32 %v879, %v881
    %v883 = vrot.slane %v334, %v882
    %vm884 = vcmask 654912
    %v885 = vsel %vm884, %v883, %v878
    %v886 = vadd.s32 %v818, 4294967216
    %v887 = vlaneseq
    %v888 = vshrl.u32 %v887, 7
    %v889 = vsub.s32 %v886, %v888
    %v890 = vrot.slane %v337, %v889
    %vm891 = vcmask 720512
    %v892 = vsel %vm891, %v890, %v885
    %v893 = vadd.s32 %v818, 4294967208
    %v894 = vlaneseq
    %v895 = vshrl.u32 %v894, 7
    %v896 = vsub.s32 %v893, %v895
    %v897 = vrot.slane %v340, %v896
    %vm898 = vcmask 786112
    %v899 = vsel %vm898, %v897, %v892
    %v900 = vadd.s32 %v818, 4294967200
    %v901 = vlaneseq
    %v902 = vshrl.u32 %v901, 7
    %v903 = vsub.s32 %v900, %v902
    %v904 = vrot.slane %v343, %v903
    %vm905 = vcmask 851712
    %v906 = vsel %vm905, %v904, %v899
    %v907 = vadd.s32 %v818, 4294967192
    %v908 = vlaneseq
    %v909 = vshrl.u32 %v908, 7
    %v910 = vsub.s32 %v907, %v909
    %v911 = vrot.slane %v346, %v910
    %vm912 = vcmask 917312
    %v913 = vsel %vm912, %v911, %v906
    %v914 = vadd.s32 %v818, 4294967184
    %v915 = vlaneseq
    %v916 = vshrl.u32 %v915, 7
    %v917 = vsub.s32 %v914, %v916
    %v918 = vrot.slane %v349, %v917
    %vm919 = vcmask 982912
    %v920 = vsel %vm919, %v918, %v913
    %v921 = vadd.s32 %v818, 4294967176
    %v922 = vlaneseq
    %v923 = vshrl.u32 %v922, 7
    %v924 = vsub.s32 %v921, %v923
    %v925 = vrot.slane %v352, %v924
    %vm926 = vcmask 1048512
    %v927 = vsel %vm926, %v925, %v920
    %v928 = vlaneseq
    %v929 = vshrl.u32 %v928, 7
    %v930 = vsub.s32 %v818, %v929
    %v931 = vrot.slane %v355, %v930
    %v932 = vlaneseq
    %v933 = vshrl.u32 %v932, 7
    %v934 = vsub.s32 %v823, %v933
    %v935 = vrot.slane %v358, %v934
    %v936 = vsel %vm828, %v935, %v931
    %v937 = vlaneseq
    %v938 = vshrl.u32 %v937, 7
    %v939 = vsub.s32 %v830, %v938
    %v940 = vrot.slane %v361, %v939
    %v941 = vsel %vm835, %v940, %v936
    %v942 = vlaneseq
    %v943 = vshrl.u32 %v942, 7
    %v944 = vsub.s32 %v837, %v943
    %v945 = vrot.slane %v364, %v944
    %v946 = vsel %vm842, %v945, %v941
    %v947 = vlaneseq
    %v948 = vshrl.u32 %v947, 7
    %v949 = vsub.s32 %v844, %v948
    %v950 = vrot.slane %v367, %v949
    %v951 = vsel %vm849, %v950, %v946
    %v952 = vlaneseq
    %v953 = vshrl.u32 %v952, 7
    %v954 = vsub.s32 %v851, %v953
    %v955 = vrot.slane %v370, %v954
    %v956 = vsel %vm856, %v955, %v951
    %v957 = vlaneseq
    %v958 = vshrl.u32 %v957, 7
    %v959 = vsub.s32 %v858, %v958
    %v960 = vrot.slane %v373, %v959
    %v961 = vsel %vm863, %v960, %v956
    %v962 = vlaneseq
    %v963 = vshrl.u32 %v962, 7
    %v964 = vsub.s32 %v865, %v963
    %v965 = vrot.slane %v376, %v964
    %v966 = vsel %vm870, %v965, %v961
    %v967 = vlaneseq
    %v968 = vshrl.u32 %v967, 7
    %v969 = vsub.s32 %v872, %v968
    %v970 = vrot.slane %v379, %v969
    %v971 = vsel %vm877, %v970, %v966
    %v972 = vlaneseq
    %v973 = vshrl.u32 %v972, 7
    %v974 = vsub.s32 %v879, %v973
    %v975 = vrot.slane %v382, %v974
    %v976 = vsel %vm884, %v975, %v971
    %v977 = vlaneseq
    %v978 = vshrl.u32 %v977, 7
    %v979 = vsub.s32 %v886, %v978
    %v980 = vrot.slane %v385, %v979
    %v981 = vsel %vm891, %v980, %v976
    %v982 = vlaneseq
    %v983 = vshrl.u32 %v982, 7
    %v984 = vsub.s32 %v893, %v983
    %v985 = vrot.slane %v388, %v984
    %v986 = vsel %vm898, %v985, %v981
    %v987 = vlaneseq
    %v988 = vshrl.u32 %v987, 7
    %v989 = vsub.s32 %v900, %v988
    %v990 = vrot.slane %v391, %v989
    %v991 = vsel %vm905, %v990, %v986
    %v992 = vlaneseq
    %v993 = vshrl.u32 %v992, 7
    %v994 = vsub.s32 %v907, %v993
    %v995 = vrot.slane %v394, %v994
    %v996 = vsel %vm912, %v995, %v991
    %v997 = vlaneseq
    %v998 = vshrl.u32 %v997, 7
    %v999 = vsub.s32 %v914, %v998
    %v1000 = vrot.slane %v397, %v999
    %v1001 = vsel %vm919, %v1000, %v996
    %v1002 = vlaneseq
    %v1003 = vshrl.u32 %v1002, 7
    %v1004 = vsub.s32 %v921, %v1003
    %v1005 = vrot.slane %v400, %v1004
    %v1006 = vsel %vm926, %v1005, %v1001
    %v1007 = vlaneseq
    %v1008 = vshrl.u32 %v1007, 7
    %v1009 = vsub.s32 %v818, %v1008
    %v1010 = vrot.slane %v403, %v1009
    %v1011 = vlaneseq
    %v1012 = vshrl.u32 %v1011, 7
    %v1013 = vsub.s32 %v823, %v1012
    %v1014 = vrot.slane %v406, %v1013
    %v1015 = vsel %vm828, %v1014, %v1010
    %v1016 = vlaneseq
    %v1017 = vshrl.u32 %v1016, 7
    %v1018 = vsub.s32 %v830, %v1017
    %v1019 = vrot.slane %v409, %v1018
    %v1020 = vsel %vm835, %v1019, %v1015
    %v1021 = vlaneseq
    %v1022 = vshrl.u32 %v1021, 7
    %v1023 = vsub.s32 %v837, %v1022
    %v1024 = vrot.slane %v412, %v1023
    %v1025 = vsel %vm842, %v1024, %v1020
    %v1026 = vlaneseq
    %v1027 = vshrl.u32 %v1026, 7
    %v1028 = vsub.s32 %v844, %v1027
    %v1029 = vrot.slane %v415, %v1028
    %v1030 = vsel %vm849, %v1029, %v1025
    %v1031 = vlaneseq
    %v1032 = vshrl.u32 %v1031, 7
    %v1033 = vsub.s32 %v851, %v1032
    %v1034 = vrot.slane %v418, %v1033
    %v1035 = vsel %vm856, %v1034, %v1030
    %v1036 = vlaneseq
    %v1037 = vshrl.u32 %v1036, 7
    %v1038 = vsub.s32 %v858, %v1037
    %v1039 = vrot.slane %v421, %v1038
    %v1040 = vsel %vm863, %v1039, %v1035
    %v1041 = vlaneseq
    %v1042 = vshrl.u32 %v1041, 7
    %v1043 = vsub.s32 %v865, %v1042
    %v1044 = vrot.slane %v424, %v1043
    %v1045 = vsel %vm870, %v1044, %v1040
    %v1046 = vlaneseq
    %v1047 = vshrl.u32 %v1046, 7
    %v1048 = vsub.s32 %v872, %v1047
    %v1049 = vrot.slane %v427, %v1048
    %v1050 = vsel %vm877, %v1049, %v1045
    %v1051 = vlaneseq
    %v1052 = vshrl.u32 %v1051, 7
    %v1053 = vsub.s32 %v879, %v1052
    %v1054 = vrot.slane %v430, %v1053
    %v1055 = vsel %vm884, %v1054, %v1050
    %v1056 = vlaneseq
    %v1057 = vshrl.u32 %v1056, 7
    %v1058 = vsub.s32 %v886, %v1057
    %v1059 = vrot.slane %v433, %v1058
    %v1060 = vsel %vm891, %v1059, %v1055
    %v1061 = vlaneseq
    %v1062 = vshrl.u32 %v1061, 7
    %v1063 = vsub.s32 %v893, %v1062
    %v1064 = vrot.slane %v436, %v1063
    %v1065 = vsel %vm898, %v1064, %v1060
    %v1066 = vlaneseq
    %v1067 = vshrl.u32 %v1066, 7
    %v1068 = vsub.s32 %v900, %v1067
    %v1069 = vrot.slane %v439, %v1068
    %v1070 = vsel %vm905, %v1069, %v1065
    %v1071 = vlaneseq
    %v1072 = vshrl.u32 %v1071, 7
    %v1073 = vsub.s32 %v907, %v1072
    %v1074 = vrot.slane %v442, %v1073
    %v1075 = vsel %vm912, %v1074, %v1070
    %v1076 = vlaneseq
    %v1077 = vshrl.u32 %v1076, 7
    %v1078 = vsub.s32 %v914, %v1077
    %v1079 = vrot.slane %v445, %v1078
    %v1080 = vsel %vm919, %v1079, %v1075
    %v1081 = vlaneseq
    %v1082 = vshrl.u32 %v1081, 7
    %v1083 = vsub.s32 %v921, %v1082
    %v1084 = vrot.slane %v448, %v1083
    %v1085 = vsel %vm926, %v1084, %v1080
    %v1086 = vlaneseq
    %v1087 = vshrl.u32 %v1086, 7
    %v1088 = vsub.s32 %v818, %v1087
    %v1089 = vrot.slane %v451, %v1088
    %v1090 = vlaneseq
    %v1091 = vshrl.u32 %v1090, 7
    %v1092 = vsub.s32 %v823, %v1091
    %v1093 = vrot.slane %v454, %v1092
    %v1094 = vsel %vm828, %v1093, %v1089
    %v1095 = vlaneseq
    %v1096 = vshrl.u32 %v1095, 7
    %v1097 = vsub.s32 %v830, %v1096
    %v1098 = vrot.slane %v457, %v1097
    %v1099 = vsel %vm835, %v1098, %v1094
    %v1100 = vlaneseq
    %v1101 = vshrl.u32 %v1100, 7
    %v1102 = vsub.s32 %v837, %v1101
    %v1103 = vrot.slane %v460, %v1102
    %v1104 = vsel %vm842, %v1103, %v1099
    %v1105 = vlaneseq
    %v1106 = vshrl.u32 %v1105, 7
    %v1107 = vsub.s32 %v844, %v1106
    %v1108 = vrot.slane %v463, %v1107
    %v1109 = vsel %vm849, %v1108, %v1104
    %v1110 = vlaneseq
    %v1111 = vshrl.u32 %v1110, 7
    %v1112 = vsub.s32 %v851, %v1111
    %v1113 = vrot.slane %v466, %v1112
    %v1114 = vsel %vm856, %v1113, %v1109
    %v1115 = vlaneseq
    %v1116 = vshrl.u32 %v1115, 7
    %v1117 = vsub.s32 %v858, %v1116
    %v1118 = vrot.slane %v469, %v1117
    %v1119 = vsel %vm863, %v1118, %v1114
    %v1120 = vlaneseq
    %v1121 = vshrl.u32 %v1120, 7
    %v1122 = vsub.s32 %v865, %v1121
    %v1123 = vrot.slane %v472, %v1122
    %v1124 = vsel %vm870, %v1123, %v1119
    %v1125 = vlaneseq
    %v1126 = vshrl.u32 %v1125, 7
    %v1127 = vsub.s32 %v872, %v1126
    %v1128 = vrot.slane %v475, %v1127
    %v1129 = vsel %vm877, %v1128, %v1124
    %v1130 = vlaneseq
    %v1131 = vshrl.u32 %v1130, 7
    %v1132 = vsub.s32 %v879, %v1131
    %v1133 = vrot.slane %v478, %v1132
    %v1134 = vsel %vm884, %v1133, %v1129
    %v1135 = vlaneseq
    %v1136 = vshrl.u32 %v1135, 7
    %v1137 = vsub.s32 %v886, %v1136
    %v1138 = vrot.slane %v481, %v1137
    %v1139 = vsel %vm891, %v1138, %v1134
    %v1140 = vlaneseq
    %v1141 = vshrl.u32 %v1140, 7
    %v1142 = vsub.s32 %v893, %v1141
    %v1143 = vrot.slane %v484, %v1142
    %v1144 = vsel %vm898, %v1143, %v1139
    %v1145 = vlaneseq
    %v1146 = vshrl.u32 %v1145, 7
    %v1147 = vsub.s32 %v900, %v1146
    %v1148 = vrot.slane %v487, %v1147
    %v1149 = vsel %vm905, %v1148, %v1144
    %v1150 = vlaneseq
    %v1151 = vshrl.u32 %v1150, 7
    %v1152 = vsub.s32 %v907, %v1151
    %v1153 = vrot.slane %v490, %v1152
    %v1154 = vsel %vm912, %v1153, %v1149
    %v1155 = vlaneseq
    %v1156 = vshrl.u32 %v1155, 7
    %v1157 = vsub.s32 %v914, %v1156
    %v1158 = vrot.slane %v493, %v1157
    %v1159 = vsel %vm919, %v1158, %v1154
    %v1160 = vlaneseq
    %v1161 = vshrl.u32 %v1160, 7
    %v1162 = vsub.s32 %v921, %v1161
    %v1163 = vrot.slane %v496, %v1162
    %v1164 = vsel %vm926, %v1163, %v1159
    %v1165 = vlaneseq
    %v1166 = vshrl.u32 %v1165, 7
    %v1167 = vsub.s32 %v818, %v1166
    %v1168 = vrot.slane %v499, %v1167
    %v1169 = vlaneseq
    %v1170 = vshrl.u32 %v1169, 7
    %v1171 = vsub.s32 %v823, %v1170
    %v1172 = vrot.slane %v502, %v1171
    %v1173 = vsel %vm828, %v1172, %v1168
    %v1174 = vlaneseq
    %v1175 = vshrl.u32 %v1174, 7
    %v1176 = vsub.s32 %v830, %v1175
    %v1177 = vrot.slane %v505, %v1176
    %v1178 = vsel %vm835, %v1177, %v1173
    %v1179 = vlaneseq
    %v1180 = vshrl.u32 %v1179, 7
    %v1181 = vsub.s32 %v837, %v1180
    %v1182 = vrot.slane %v508, %v1181
    %v1183 = vsel %vm842, %v1182, %v1178
    %v1184 = vlaneseq
    %v1185 = vshrl.u32 %v1184, 7
    %v1186 = vsub.s32 %v844, %v1185
    %v1187 = vrot.slane %v511, %v1186
    %v1188 = vsel %vm849, %v1187, %v1183
    %v1189 = vlaneseq
    %v1190 = vshrl.u32 %v1189, 7
    %v1191 = vsub.s32 %v851, %v1190
    %v1192 = vrot.slane %v514, %v1191
    %v1193 = vsel %vm856, %v1192, %v1188
    %v1194 = vlaneseq
    %v1195 = vshrl.u32 %v1194, 7
    %v1196 = vsub.s32 %v858, %v1195
    %v1197 = vrot.slane %v517, %v1196
    %v1198 = vsel %vm863, %v1197, %v1193
    %v1199 = vlaneseq
    %v1200 = vshrl.u32 %v1199, 7
    %v1201 = vsub.s32 %v865, %v1200
    %v1202 = vrot.slane %v520, %v1201
    %v1203 = vsel %vm870, %v1202, %v1198
    %v1204 = vlaneseq
    %v1205 = vshrl.u32 %v1204, 7
    %v1206 = vsub.s32 %v872, %v1205
    %v1207 = vrot.slane %v523, %v1206
    %v1208 = vsel %vm877, %v1207, %v1203
    %v1209 = vlaneseq
    %v1210 = vshrl.u32 %v1209, 7
    %v1211 = vsub.s32 %v879, %v1210
    %v1212 = vrot.slane %v526, %v1211
    %v1213 = vsel %vm884, %v1212, %v1208
    %v1214 = vlaneseq
    %v1215 = vshrl.u32 %v1214, 7
    %v1216 = vsub.s32 %v886, %v1215
    %v1217 = vrot.slane %v529, %v1216
    %v1218 = vsel %vm891, %v1217, %v1213
    %v1219 = vlaneseq
    %v1220 = vshrl.u32 %v1219, 7
    %v1221 = vsub.s32 %v893, %v1220
    %v1222 = vrot.slane %v532, %v1221
    %v1223 = vsel %vm898, %v1222, %v1218
    %v1224 = vlaneseq
    %v1225 = vshrl.u32 %v1224, 7
    %v1226 = vsub.s32 %v900, %v1225
    %v1227 = vrot.slane %v535, %v1226
    %v1228 = vsel %vm905, %v1227, %v1223
    %v1229 = vlaneseq
    %v1230 = vshrl.u32 %v1229, 7
    %v1231 = vsub.s32 %v907, %v1230
    %v1232 = vrot.slane %v538, %v1231
    %v1233 = vsel %vm912, %v1232, %v1228
    %v1234 = vlaneseq
    %v1235 = vshrl.u32 %v1234, 7
    %v1236 = vsub.s32 %v914, %v1235
    %v1237 = vrot.slane %v541, %v1236
    %v1238 = vsel %vm919, %v1237, %v1233
    %v1239 = vlaneseq
    %v1240 = vshrl.u32 %v1239, 7
    %v1241 = vsub.s32 %v921, %v1240
    %v1242 = vrot.slane %v544, %v1241
    %v1243 = vsel %vm926, %v1242, %v1238
    %v1244 = vlaneseq
    %v1245 = vshrl.u32 %v1244, 7
    %v1246 = vsub.s32 %v818, %v1245
    %v1247 = vrot.slane %v547, %v1246
    %v1248 = vlaneseq
    %v1249 = vshrl.u32 %v1248, 7
    %v1250 = vsub.s32 %v823, %v1249
    %v1251 = vrot.slane %v550, %v1250
    %v1252 = vsel %vm828, %v1251, %v1247
    %v1253 = vlaneseq
    %v1254 = vshrl.u32 %v1253, 7
    %v1255 = vsub.s32 %v830, %v1254
    %v1256 = vrot.slane %v553, %v1255
    %v1257 = vsel %vm835, %v1256, %v1252
    %v1258 = vlaneseq
    %v1259 = vshrl.u32 %v1258, 7
    %v1260 = vsub.s32 %v837, %v1259
    %v1261 = vrot.slane %v556, %v1260
    %v1262 = vsel %vm842, %v1261, %v1257
    %v1263 = vlaneseq
    %v1264 = vshrl.u32 %v1263, 7
    %v1265 = vsub.s32 %v844, %v1264
    %v1266 = vrot.slane %v559, %v1265
    %v1267 = vsel %vm849, %v1266, %v1262
    %v1268 = vlaneseq
    %v1269 = vshrl.u32 %v1268, 7
    %v1270 = vsub.s32 %v851, %v1269
    %v1271 = vrot.slane %v562, %v1270
    %v1272 = vsel %vm856, %v1271, %v1267
    %v1273 = vlaneseq
    %v1274 = vshrl.u32 %v1273, 7
    %v1275 = vsub.s32 %v858, %v1274
    %v1276 = vrot.slane %v565, %v1275
    %v1277 = vsel %vm863, %v1276, %v1272
    %v1278 = vlaneseq
    %v1279 = vshrl.u32 %v1278, 7
    %v1280 = vsub.s32 %v865, %v1279
    %v1281 = vrot.slane %v568, %v1280
    %v1282 = vsel %vm870, %v1281, %v1277
    %v1283 = vlaneseq
    %v1284 = vshrl.u32 %v1283, 7
    %v1285 = vsub.s32 %v872, %v1284
    %v1286 = vrot.slane %v571, %v1285
    %v1287 = vsel %vm877, %v1286, %v1282
    %v1288 = vlaneseq
    %v1289 = vshrl.u32 %v1288, 7
    %v1290 = vsub.s32 %v879, %v1289
    %v1291 = vrot.slane %v574, %v1290
    %v1292 = vsel %vm884, %v1291, %v1287
    %v1293 = vlaneseq
    %v1294 = vshrl.u32 %v1293, 7
    %v1295 = vsub.s32 %v886, %v1294
    %v1296 = vrot.slane %v577, %v1295
    %v1297 = vsel %vm891, %v1296, %v1292
    %v1298 = vlaneseq
    %v1299 = vshrl.u32 %v1298, 7
    %v1300 = vsub.s32 %v893, %v1299
    %v1301 = vrot.slane %v580, %v1300
    %v1302 = vsel %vm898, %v1301, %v1297
    %v1303 = vlaneseq
    %v1304 = vshrl.u32 %v1303, 7
    %v1305 = vsub.s32 %v900, %v1304
    %v1306 = vrot.slane %v583, %v1305
    %v1307 = vsel %vm905, %v1306, %v1302
    %v1308 = vlaneseq
    %v1309 = vshrl.u32 %v1308, 7
    %v1310 = vsub.s32 %v907, %v1309
    %v1311 = vrot.slane %v586, %v1310
    %v1312 = vsel %vm912, %v1311, %v1307
    %v1313 = vlaneseq
    %v1314 = vshrl.u32 %v1313, 7
    %v1315 = vsub.s32 %v914, %v1314
    %v1316 = vrot.slane %v589, %v1315
    %v1317 = vsel %vm919, %v1316, %v1312
    %v1318 = vlaneseq
    %v1319 = vshrl.u32 %v1318, 7
    %v1320 = vsub.s32 %v921, %v1319
    %v1321 = vrot.slane %v592, %v1320
    %v1322 = vsel %vm926, %v1321, %v1317
    %v1323 = vlaneseq
    %v1324 = vshrl.u32 %v1323, 7
    %v1325 = vsub.s32 %v818, %v1324
    %v1326 = vrot.slane %v595, %v1325
    %v1327 = vlaneseq
    %v1328 = vshrl.u32 %v1327, 7
    %v1329 = vsub.s32 %v823, %v1328
    %v1330 = vrot.slane %v598, %v1329
    %v1331 = vsel %vm828, %v1330, %v1326
    %v1332 = vlaneseq
    %v1333 = vshrl.u32 %v1332, 7
    %v1334 = vsub.s32 %v830, %v1333
    %v1335 = vrot.slane %v601, %v1334
    %v1336 = vsel %vm835, %v1335, %v1331
    %v1337 = vlaneseq
    %v1338 = vshrl.u32 %v1337, 7
    %v1339 = vsub.s32 %v837, %v1338
    %v1340 = vrot.slane %v604, %v1339
    %v1341 = vsel %vm842, %v1340, %v1336
    %v1342 = vlaneseq
    %v1343 = vshrl.u32 %v1342, 7
    %v1344 = vsub.s32 %v844, %v1343
    %v1345 = vrot.slane %v607, %v1344
    %v1346 = vsel %vm849, %v1345, %v1341
    %v1347 = vlaneseq
    %v1348 = vshrl.u32 %v1347, 7
    %v1349 = vsub.s32 %v851, %v1348
    %v1350 = vrot.slane %v610, %v1349
    %v1351 = vsel %vm856, %v1350, %v1346
    %v1352 = vlaneseq
    %v1353 = vshrl.u32 %v1352, 7
    %v1354 = vsub.s32 %v858, %v1353
    %v1355 = vrot.slane %v613, %v1354
    %v1356 = vsel %vm863, %v1355, %v1351
    %v1357 = vlaneseq
    %v1358 = vshrl.u32 %v1357, 7
    %v1359 = vsub.s32 %v865, %v1358
    %v1360 = vrot.slane %v616, %v1359
    %v1361 = vsel %vm870, %v1360, %v1356
    %v1362 = vlaneseq
    %v1363 = vshrl.u32 %v1362, 7
    %v1364 = vsub.s32 %v872, %v1363
    %v1365 = vrot.slane %v619, %v1364
    %v1366 = vsel %vm877, %v1365, %v1361
    %v1367 = vlaneseq
    %v1368 = vshrl.u32 %v1367, 7
    %v1369 = vsub.s32 %v879, %v1368
    %v1370 = vrot.slane %v622, %v1369
    %v1371 = vsel %vm884, %v1370, %v1366
    %v1372 = vlaneseq
    %v1373 = vshrl.u32 %v1372, 7
    %v1374 = vsub.s32 %v886, %v1373
    %v1375 = vrot.slane %v625, %v1374
    %v1376 = vsel %vm891, %v1375, %v1371
    %v1377 = vlaneseq
    %v1378 = vshrl.u32 %v1377, 7
    %v1379 = vsub.s32 %v893, %v1378
    %v1380 = vrot.slane %v628, %v1379
    %v1381 = vsel %vm898, %v1380, %v1376
    %v1382 = vlaneseq
    %v1383 = vshrl.u32 %v1382, 7
    %v1384 = vsub.s32 %v900, %v1383
    %v1385 = vrot.slane %v631, %v1384
    %v1386 = vsel %vm905, %v1385, %v1381
    %v1387 = vlaneseq
    %v1388 = vshrl.u32 %v1387, 7
    %v1389 = vsub.s32 %v907, %v1388
    %v1390 = vrot.slane %v634, %v1389
    %v1391 = vsel %vm912, %v1390, %v1386
    %v1392 = vlaneseq
    %v1393 = vshrl.u32 %v1392, 7
    %v1394 = vsub.s32 %v914, %v1393
    %v1395 = vrot.slane %v637, %v1394
    %v1396 = vsel %vm919, %v1395, %v1391
    %v1397 = vlaneseq
    %v1398 = vshrl.u32 %v1397, 7
    %v1399 = vsub.s32 %v921, %v1398
    %v1400 = vrot.slane %v640, %v1399
    %v1401 = vsel %vm926, %v1400, %v1396
    %v1402 = vlaneseq
    %v1403 = vshrl.u32 %v1402, 7
    %v1404 = vsub.s32 %v818, %v1403
    %v1405 = vrot.slane %v643, %v1404
    %v1406 = vlaneseq
    %v1407 = vshrl.u32 %v1406, 7
    %v1408 = vsub.s32 %v823, %v1407
    %v1409 = vrot.slane %v646, %v1408
    %v1410 = vsel %vm828, %v1409, %v1405
    %v1411 = vlaneseq
    %v1412 = vshrl.u32 %v1411, 7
    %v1413 = vsub.s32 %v830, %v1412
    %v1414 = vrot.slane %v649, %v1413
    %v1415 = vsel %vm835, %v1414, %v1410
    %v1416 = vlaneseq
    %v1417 = vshrl.u32 %v1416, 7
    %v1418 = vsub.s32 %v837, %v1417
    %v1419 = vrot.slane %v652, %v1418
    %v1420 = vsel %vm842, %v1419, %v1415
    %v1421 = vlaneseq
    %v1422 = vshrl.u32 %v1421, 7
    %v1423 = vsub.s32 %v844, %v1422
    %v1424 = vrot.slane %v655, %v1423
    %v1425 = vsel %vm849, %v1424, %v1420
    %v1426 = vlaneseq
    %v1427 = vshrl.u32 %v1426, 7
    %v1428 = vsub.s32 %v851, %v1427
    %v1429 = vrot.slane %v658, %v1428
    %v1430 = vsel %vm856, %v1429, %v1425
    %v1431 = vlaneseq
    %v1432 = vshrl.u32 %v1431, 7
    %v1433 = vsub.s32 %v858, %v1432
    %v1434 = vrot.slane %v661, %v1433
    %v1435 = vsel %vm863, %v1434, %v1430
    %v1436 = vlaneseq
    %v1437 = vshrl.u32 %v1436, 7
    %v1438 = vsub.s32 %v865, %v1437
    %v1439 = vrot.slane %v664, %v1438
    %v1440 = vsel %vm870, %v1439, %v1435
    %v1441 = vlaneseq
    %v1442 = vshrl.u32 %v1441, 7
    %v1443 = vsub.s32 %v872, %v1442
    %v1444 = vrot.slane %v667, %v1443
    %v1445 = vsel %vm877, %v1444, %v1440
    %v1446 = vlaneseq
    %v1447 = vshrl.u32 %v1446, 7
    %v1448 = vsub.s32 %v879, %v1447
    %v1449 = vrot.slane %v670, %v1448
    %v1450 = vsel %vm884, %v1449, %v1445
    %v1451 = vlaneseq
    %v1452 = vshrl.u32 %v1451, 7
    %v1453 = vsub.s32 %v886, %v1452
    %v1454 = vrot.slane %v673, %v1453
    %v1455 = vsel %vm891, %v1454, %v1450
    %v1456 = vlaneseq
    %v1457 = vshrl.u32 %v1456, 7
    %v1458 = vsub.s32 %v893, %v1457
    %v1459 = vrot.slane %v676, %v1458
    %v1460 = vsel %vm898, %v1459, %v1455
    %v1461 = vlaneseq
    %v1462 = vshrl.u32 %v1461, 7
    %v1463 = vsub.s32 %v900, %v1462
    %v1464 = vrot.slane %v679, %v1463
    %v1465 = vsel %vm905, %v1464, %v1460
    %v1466 = vlaneseq
    %v1467 = vshrl.u32 %v1466, 7
    %v1468 = vsub.s32 %v907, %v1467
    %v1469 = vrot.slane %v682, %v1468
    %v1470 = vsel %vm912, %v1469, %v1465
    %v1471 = vlaneseq
    %v1472 = vshrl.u32 %v1471, 7
    %v1473 = vsub.s32 %v914, %v1472
    %v1474 = vrot.slane %v685, %v1473
    %v1475 = vsel %vm919, %v1474, %v1470
    %v1476 = vlaneseq
    %v1477 = vshrl.u32 %v1476, 7
    %v1478 = vsub.s32 %v921, %v1477
    %v1479 = vrot.slane %v688, %v1478
    %v1480 = vsel %vm926, %v1479, %v1475
    %vm1481 = vcmask 1041409
    %v1482 = vsel %vm1481, %v1006, %v927
    %vm1483 = vcmask 1042434
    %v1484 = vsel %vm1483, %v1085, %v1482
    %vm1485 = vcmask 1043459
    %v1486 = vsel %vm1485, %v1164, %v1484
    %vm1487 = vcmask 1044484
    %v1488 = vsel %vm1487, %v1243, %v1486
    %vm1489 = vcmask 1045509
    %v1490 = vsel %vm1489, %v1322, %v1488
    %vm1491 = vcmask 1046534
    %v1492 = vsel %vm1491, %v1401, %v1490
    %vm1493 = vcmask 1047559
    %v1494 = vsel %vm1493, %v1480, %v1492
    %v1496 = vadd.f32 %v304, %v1494
    %1497 = vst [vmem:[#allocation2] sm:$0xff] %v1496
    // Predicated region
    $region26: #{tpu_custom_call.1} parent=1 // pred_check
      %p1498 = pneg %p43
    $region27: #{tpu_custom_call.1} parent=1 // pred_check_branch
      %1500 = sbr.rel (%p1498) target = $region29
    $region28: #{tpu_custom_call.1} parent=1 // pred_region
      %v1501 = vld [vmem:[#allocation2] sm:$0xff]
      %v1502 = vmul.f32 %v1501, 0.00390625
      %v1503 = vld [vmem:[#allocation6] sm:$0xff]
      %v1504 = vld [vmem:[#allocation6 + $0x8] sm:$0xff]
      %v1505 = vld [vmem:[#allocation6 + $0x10] sm:$0xff]
      %v1506 = vld [vmem:[#allocation6 + $0x18] sm:$0xff]
      %v1507 = vld [vmem:[#allocation6 + $0x20] sm:$0xff]
      %v1508 = vld [vmem:[#allocation6 + $0x28] sm:$0xff]
      %v1509 = vld [vmem:[#allocation6 + $0x30] sm:$0xff]
      %v1510 = vld [vmem:[#allocation6 + $0x38] sm:$0xff]
      %v1511 = vld [vmem:[#allocation6 + $0x40] sm:$0xff]
      %v1512 = vld [vmem:[#allocation6 + $0x48] sm:$0xff]
      %v1513 = vld [vmem:[#allocation6 + $0x50] sm:$0xff]
      %v1514 = vld [vmem:[#allocation6 + $0x58] sm:$0xff]
      %v1515 = vld [vmem:[#allocation6 + $0x60] sm:$0xff]
      %v1516 = vld [vmem:[#allocation6 + $0x68] sm:$0xff]
      %v1517 = vld [vmem:[#allocation6 + $0x70] sm:$0xff]
      %v1518 = vld [vmem:[#allocation6 + $0x78] sm:$0xff]
      %v1519 = vld [vmem:[%s2] sm:$0x1]
      %v1521 = vlaneseq
      %v1522 = vshrl.u32 %v1521, 7
      %v1523 = vsub.s32 0, %v1522
      %v1524 = vrot.slane %v1519, %v1523
      %1526 = vmatprep.subr.mxu0 0.0
      %1527 = vmatpush1.msra.mxu0 %v1503
      %1528 = vmatprep.subr.mxu0 0.0
      %1529 = vmatpush1.msra.mxu0 %v1504
      %1530 = vmatprep.subr.mxu0 0.0
      %1531 = vmatpush1.msra.mxu0 %v1505
      %1532 = vmatprep.subr.mxu0 0.0
      %1533 = vmatpush1.msra.mxu0 %v1506
      %1534 = vmatprep.subr.mxu0 0.0
      %1535 = vmatpush1.msra.mxu0 %v1507
      %1536 = vmatprep.subr.mxu0 0.0
      %1537 = vmatpush1.msra.mxu0 %v1508
      %1538 = vmatprep.subr.mxu0 0.0
      %1539 = vmatpush1.msra.mxu0 %v1509
      %1540 = vmatprep.subr.mxu0 0.0
      %1541 = vmatpush1.msra.mxu0 %v1510
      %1542 = vmatprep.subr.mxu0 0.0
      %1543 = vmatpush1.msra.mxu0 %v1511
      %1544 = vmatprep.subr.mxu0 0.0
      %1545 = vmatpush1.msra.mxu0 %v1512
      %1546 = vmatprep.subr.mxu0 0.0
      %1547 = vmatpush1.msra.mxu0 %v1513
      %1548 = vmatprep.subr.mxu0 0.0
      %1549 = vmatpush1.msra.mxu0 %v1514
      %1550 = vmatprep.subr.mxu0 0.0
      %1551 = vmatpush1.msra.mxu0 %v1515
      %1552 = vmatprep.subr.mxu0 0.0
      %1553 = vmatpush1.msra.mxu0 %v1516
      %1554 = vmatprep.subr.mxu0 0.0
      %1555 = vmatpush1.msra.mxu0 %v1517
      %1556 = vmatprep.subr.mxu0 0.0
      %1557 = vmatpush1.msra.mxu0 %v1518
      %1558 = vmatprep.subr.mxu0 0.0
      %1559 = vmatpush1.msra.mxu0 0.0
      %1560 = vmatprep.subr.mxu0 0.0
      %1561 = vmatpush1.msra.mxu0 0.0
      %1562 = vmatprep.subr.mxu0 0.0
      %1563 = vmatpush1.msra.mxu0 0.0
      %1564 = vmatprep.subr.mxu0 0.0
      %1565 = vmatpush1.msra.mxu0 0.0
      %1566 = vmatprep.subr.mxu0 0.0
      %1567 = vmatpush1.msra.mxu0 0.0
      %1568 = vmatprep.subr.mxu0 0.0
      %1569 = vmatpush1.msra.mxu0 0.0
      %1570 = vmatprep.subr.mxu0 0.0
      %1571 = vmatpush1.msra.mxu0 0.0
      %1572 = vmatprep.subr.mxu0 0.0
      %1573 = vmatpush1.msra.mxu0 0.0
      %1574 = vmatprep.subr.mxu0 0.0
      %1575 = vmatpush1.msra.mxu0 0.0
      %1576 = vmatprep.subr.mxu0 0.0
      %1577 = vmatpush1.msra.mxu0 0.0
      %1578 = vmatprep.subr.mxu0 0.0
      %1579 = vmatpush1.msra.mxu0 0.0
      %1580 = vmatprep.subr.mxu0 0.0
      %1581 = vmatpush1.msra.mxu0 0.0
      %1582 = vmatprep.subr.mxu0 0.0
      %1583 = vmatpush1.msra.mxu0 0.0
      %1584 = vmatprep.subr.mxu0 0.0
      %1585 = vmatpush1.msra.mxu0 0.0
      %1586 = vmatprep.subr.mxu0 0.0
      %1587 = vmatpush1.msra.mxu0 0.0
      %1588 = vmatprep.subr.mxu0 0.0
      %1589 = vmatpush1.msra.mxu0 0.0
      %1590 = vmatprep.mubr.f32.mxu0 0.0
      %1591 = vmatmul.mubr.f32.gmra.mrb[0].mxu0 %v1502
      %v1592 = vpop.f32.mrb[0].mxu0
      %v1593 = vadd.f32 %v1524, %v1592
      %v1594 = vpop.f32.mrb[0].mxu0
      %1595 = vdwg.mxu0
      %1596 = vst [vmem:[#allocation8] sm:$0xff] %v1593
    $region29: #{tpu_custom_call.1} parent=1 // pred_fallthru
      _
    // Predicated region
    $region30: #{tpu_custom_call.1} parent=1 // pred_check
      _
    $region31: #{tpu_custom_call.1} parent=1 // pred_check_branch
      %1598 = sbr.rel (0) target = $region33
    $region32: #{tpu_custom_call.1} parent=1 // pred_region
      %s1600 = ssub.s32 128, 128
      %1601 = vsyncadd [#allocation5], %s1600
      %s1603 = sshll.u32 [#allocation8], 4
      %s1604 = int_to_ptr.vmem [resolvable:$true] %s1603
      %1606 = dma.vmem_to_hbm [thread:$0]  %s1604, 128, %s3, [#allocation5]
    $region33: #{tpu_custom_call.1} parent=1 // pred_fallthru
      _
    // Predicated region
    $region34: #{tpu_custom_call.1} parent=1 // pred_check
      _
    $region35: #{tpu_custom_call.1} parent=1 // pred_check_branch
      %1608 = sbr.rel (0) target = $region37
    $region36: #{tpu_custom_call.1} parent=1 // pred_region
      %1609 = dma.done [#allocation5], 128
    $region37: #{tpu_custom_call.1} parent=1 // pred_fallthru
      _
    %1610 = vsyncpa [#allocation4], 1
    %1611 = vsyncpa [#allocation7], 1
    %1612 = vsyncpa [#allocation5], 1

</llo_original>
